<compile_context>
chip_gen: v7x
topology: tpu7x:2x2x1
jax: 0.10.0
libtpu: 0.0.40
codegen_flags: <defaults>
</compile_context>

<pallas_src>
import jax
import jax.numpy as jnp
from jax.experimental import pallas as pl
from jax.experimental.pallas import tpu as pltpu

K = 7          # conv kernel size (7x7)
C_OUT = 50     # conv output channels
C_PAD = 64     # conv channels padded for alignment (padded channels are exact zeros)
FC_H = 800     # hidden width of fc1 / fc2
OUT_PAD = 128  # fc3 output padded to a full lane width (column 0 is the real score)


def _round_up(n, m):
    return ((n + m - 1) // m) * m


def _lanes(n):
    return _round_up(n, 128)


def cnniqa_kernel(patches_ref, wc_ref, bc_ref, w1a_ref, w1b_ref, b1_ref,
                  w2_ref, b2_ref, w3_ref, b3_ref, out_ref):
    """One grid step == TB samples.

    patches_ref: (TB, P_pad, F_in) bf16  im2col patches
    wc_ref:      (F_in, C_PAD)     bf16  conv1 weight (channel-padded with zeros)
    bc_ref:      (1, C_PAD)        f32   conv1 bias
    w1a/w1b:     (C_PAD, FC_H)     bf16  fc1 weight split (max-pool / min-pool halves)
    w2_ref:      (FC_H, FC_H)      bf16
    w3_ref:      (FC_H, OUT_PAD)   bf16  fc3 weight, zero-padded to 128 output lanes
    out_ref:     (TB, OUT_PAD)     f32   column 0 holds the quality score
    """
    tb, p_pad, f_in = patches_ref.shape
    c_pad = wc_ref.shape[1]

    # conv1 as ONE block-wide matmul: (tb*P_pad, F_in) @ (F_in, C_PAD).
    # Layout-preserving reshape: P_pad % 8 == 0, F_in stays the full minor dim.
    p = patches_ref[...].reshape(tb * p_pad, f_in)                       # bf16
    conv = jnp.dot(p, wc_ref[...], preferred_element_type=jnp.float32)   # (tb*P_pad, C_PAD)
    conv = conv.reshape(tb, p_pad, c_pad)                                # f32

    # Global max / min pool over the patch axis (bias added after pooling:
    # max(x + b) == max(x) + b for a per-channel bias).
    h1 = (jnp.max(conv, axis=1) + bc_ref[...]).astype(jnp.bfloat16)      # (TB, C_PAD)
    h2 = (jnp.min(conv, axis=1) + bc_ref[...]).astype(jnp.bfloat16)      # (TB, C_PAD)

    # fc1 + relu, with torch.cat((h1, h2), 1) folded into a split matmul.
    h = jnp.dot(h1, w1a_ref[...], preferred_element_type=jnp.float32)
    h = h + jnp.dot(h2, w1b_ref[...], preferred_element_type=jnp.float32)
    h = jnp.maximum(h + b1_ref[...], 0.0)                                # (TB, FC_H) f32

    # TODO(synk): nn.Dropout(p=0.5) is identity at inference; not applied here.

    # fc2 + relu
    h = jnp.maximum(
        jnp.dot(h.astype(jnp.bfloat16), w2_ref[...],
                preferred_element_type=jnp.float32) + b2_ref[...], 0.0)

    # fc3 (lanes 1..127 are zero-padded weight columns -> lane-dense store)
    out_ref[...] = jnp.dot(h.astype(jnp.bfloat16), w3_ref[...],
                           preferred_element_type=jnp.float32) + b3_ref[...]


def im2col(x, k):
    """x: (B, Cin, H, W) -> (B, OH*OW, Cin*k*k), flattened in (Cin, kh, kw) order
    to match PyTorch's weight.reshape(Cout, Cin*k*k)."""
    B, C, H, W = x.shape
    OH, OW = H - k + 1, W - k + 1
    cols = []
    for c in range(C):
        for kh in range(k):
            for kw in range(k):
                cols.append(x[:, c, kh:kh + OH, kw:kw + OW])
    p = jnp.stack(cols, axis=-1)                          # (B, OH, OW, C*k*k)
    return p.reshape(B, OH * OW, C * k * k)


def init_params(key, c_in):
    """Kaiming-normal (fan_out, relu) weights, zero biases — deterministic synthetic init.
    Weights are stored as (in_features, out_features) == PyTorch weight.T."""
    ks = jax.random.split(key, 4)
    fan_out_conv = C_OUT * K * K
    wc = jax.random.normal(ks[0], (c_in * K * K, C_OUT), jnp.float32) * (2.0 / fan_out_conv) ** 0.5
    bc = jnp.zeros((1, C_OUT), jnp.float32)
    w1 = jax.random.normal(ks[1], (2 * C_OUT, FC_H), jnp.float32) * (2.0 / FC_H) ** 0.5
    b1 = jnp.zeros((1, FC_H), jnp.float32)
    w2 = jax.random.normal(ks[2], (FC_H, FC_H), jnp.float32) * (2.0 / FC_H) ** 0.5
    b2 = jnp.zeros((1, FC_H), jnp.float32)
    w3 = jax.random.normal(ks[3], (FC_H, 1), jnp.float32) * (2.0 / 1.0) ** 0.5
    b3 = jnp.zeros((1, 1), jnp.float32)
    return (wc, bc, w1, b1, w2, b2, w3, b3)


def _vmem_bytes_estimate(tb, p_pad, f_in):
    """Rough per-step VMEM footprint (lane-padded) used to pick tb / the limit."""
    patches_bufs = 2 * tb * p_pad * _lanes(f_in) * 2        # double-buffered bf16 input
    patch_tmp    = tb * p_pad * _lanes(f_in) * 2            # loaded/reshaped bf16 value
    conv_tmp     = tb * p_pad * _lanes(C_PAD) * 4           # f32 conv intermediate
    weights      = (_lanes(f_in) * C_PAD + 2 * C_PAD * FC_H
                    + FC_H * FC_H + FC_H * OUT_PAD) * 2     # single-buffered (Buffered(1))
    acts         = 3 * tb * _lanes(FC_H) * 4                # fc activations (f32)
    out_bufs     = 2 * tb * OUT_PAD * 4                     # double-buffered output
    return patches_bufs + patch_tmp + conv_tmp + weights + acts + out_bufs + (4 << 20)


def cnniqa_forward(x, params, tb=None):
    """x: (B, Cin, H, W) float32 -> (B, 1) quality score."""
    B, C, H, W = x.shape
    OH, OW = H - K + 1, W - K + 1
    P = OH * OW
    F_in = C * K * K
    P_pad = _round_up(P, 8)

    # --- tb selection: fill the MXU, shard across 2-TC chips, fit VMEM. ---
    try:
        vmem_cap = int(pltpu.get_tpu_info().vmem_capacity_bytes)
    except Exception:
        vmem_cap = 64 * 1024 * 1024          # conservative: v7x per-core VMEM
    vmem_soft_cap = (vmem_cap * 3) // 4

    b8 = _round_up(B, 8)
    if tb is None:
        tb = min(256, b8)
        if b8 >= 16:
            # >= 2 grid blocks so the "parallel" axis can use both TensorCores
            # on v7x; costs at most one extra ~0.35us grid step elsewhere.
            tb = min(tb, _round_up(-(-b8 // 2), 8))
    else:
        tb = max(8, _round_up(tb, 8))
    while tb > 8 and _vmem_bytes_estimate(tb, P_pad, F_in) > vmem_soft_cap:
        tb = max(8, _round_up(tb // 2, 8))

    B_pad = _round_up(B, tb)
    num_blocks = B_pad // tb
    vmem_limit = int(min(max(32 * 1024 * 1024,
                             _vmem_bytes_estimate(tb, P_pad, F_in)),
                         vmem_soft_cap))

    # --- wrapper-side data prep (see TODO(synk) about im2col inflation). ---
    patches = im2col(x, K)                                   # (B, P, F_in) f32
    # Pad P to a multiple of 8 sublanes by REPLICATING real patch rows; zero rows
    # would make the pooled min/max see the bare bias.
    if P_pad != P:
        patches = jnp.concatenate([patches, patches[:, :P_pad - P, :]], axis=1)
    # Pad the batch with zeros; those rows are dropped after the kernel.
    if B_pad != B:
        patches = jnp.concatenate(
            [patches, jnp.zeros((B_pad - B, P_pad, F_in), patches.dtype)], axis=0)
    patches = patches.astype(jnp.bfloat16)

    wc, bc, w1, b1, w2, b2, w3, b3 = params
    # conv channels 50 -> 64: zero weight columns / zero bias -> exact.
    wc_p = jnp.pad(wc, ((0, 0), (0, C_PAD - C_OUT))).astype(jnp.bfloat16)
    bc_p = jnp.pad(bc, ((0, 0), (0, C_PAD - C_OUT)))
    # fc1 split: rows 0..49 act on the max-pool features, rows 50..99 on the min-pool.
    w1a = jnp.pad(w1[:C_OUT], ((0, C_PAD - C_OUT), (0, 0))).astype(jnp.bfloat16)
    w1b = jnp.pad(w1[C_OUT:], ((0, C_PAD - C_OUT), (0, 0))).astype(jnp.bfloat16)
    w2_b = w2.astype(jnp.bfloat16)
    # fc3 output 1 -> 128 zero columns so the final store is lane-dense.
    w3_p = jnp.pad(w3, ((0, 0), (0, OUT_PAD - 1))).astype(jnp.bfloat16)
    b3_p = jnp.pad(b3, ((0, 0), (0, OUT_PAD - 1)))

    def resident(arr):
        # Constant block index -> stays resident in VMEM; Buffered(1) disables
        # the (pointless) double-buffering of these blocks.
        nd = arr.ndim
        return pl.BlockSpec(arr.shape, lambda i, _nd=nd: (0,) * _nd,
                            pipeline_mode=pl.Buffered(1))

    # Advisory cost estimate so XLA schedules the im2col/pad HLOs around the call.
    flops = 2 * B_pad * (P_pad * F_in * C_PAD
                         + 2 * C_PAD * FC_H + FC_H * FC_H + FC_H * OUT_PAD)
    bytes_accessed = (patches.size * 2
                      + (wc_p.size + w1a.size + w1b.size + w2_b.size + w3_p.size) * 2
                      + (bc_p.size + b1.size + b2.size + b3_p.size) * 4
                      + B_pad * OUT_PAD * 4)
    cost = pl.CostEstimate(flops=int(flops), transcendentals=0,
                           bytes_accessed=int(bytes_accessed))

    out = pl.pallas_call(
        cnniqa_kernel,
        out_shape=jax.ShapeDtypeStruct((B_pad, OUT_PAD), jnp.float32),
        grid_spec=pltpu.PrefetchScalarGridSpec(
            num_scalar_prefetch=0,
            grid=(num_blocks,),
            in_specs=[
                pl.BlockSpec((tb, P_pad, F_in), lambda i: (i, 0, 0)),  # per-block patches
                resident(wc_p), resident(bc_p),
                resident(w1a), resident(w1b), resident(b1),
                resident(w2_b), resident(b2),
                resident(w3_p), resident(b3_p),
            ],
            out_specs=pl.BlockSpec((tb, OUT_PAD), lambda i: (i, 0)),
        ),
        compiler_params=pltpu.CompilerParams(
            dimension_semantics=("parallel",),
            vmem_limit_bytes=vmem_limit,
        ),
        cost_estimate=cost,
    )(patches, wc_p, bc_p, w1a, w1b, b1, w2_b, b2, w3_p, b3_p)

    return out[:B, :1]


def cnniqa_reference(x, params):
    """Pure-JAX reference of the same forward pass, using the same bf16 matmul
    inputs / f32 accumulation as the kernel (with f32 throughout it matches the
    PyTorch module exactly)."""
    wc, bc, w1, b1, w2, b2, w3, b3 = params
    bf = lambda a: a.astype(jnp.bfloat16)
    patches = bf(im2col(x, K))                                # (B, P, F_in)
    conv = jnp.einsum('bpf,fo->bpo', patches, bf(wc),
                      preferred_element_type=jnp.float32) + bc[0]   # (B, P, 50)
    h1 = jnp.max(conv, axis=1)                                # (B, 50)
    h2 = jnp.min(conv, axis=1)                                # (B, 50)
    h = jnp.concatenate([h1, h2], axis=1)                     # (B, 100)
    h = jnp.maximum(jnp.dot(bf(h), bf(w1), preferred_element_type=jnp.float32) + b1, 0.0)
    h = jnp.maximum(jnp.dot(bf(h), bf(w2), preferred_element_type=jnp.float32) + b2, 0.0)
    return jnp.dot(bf(h), bf(w3), preferred_element_type=jnp.float32) + b3   # (B, 1)


if __name__ == "__main__":
    key = jax.random.PRNGKey(0)
    kx, kp = jax.random.split(key)

    # is_gray=True config -> Cin = 1. Small spatial 16x16 -> conv output 10x10.
    B, C_IN, H, W = 2, 1, 16, 16
    x = jax.random.normal(kx, (B, C_IN, H, W), jnp.float32)
    params = init_params(kp, C_IN)

    q = cnniqa_forward(x, params)
    q = jax.block_until_ready(q)

    q_ref = cnniqa_reference(x, params)
    assert q.shape == (B, 1)
    assert jnp.allclose(q, q_ref, rtol=1e-2, atol=1e-2), (q, q_ref)

    print("KERNEL_OK")
</pallas_src>

<mosaic_0001>
module attributes {stable_mosaic.version = 11 : i64} {
  func.func @cnniqa_kernel(%arg0: i32, %arg1: memref<8x104x49xbf16, #tpu.memory_space<vmem>>, %arg2: memref<49x64xbf16, #tpu.memory_space<vmem>>, %arg3: memref<1x64xf32, #tpu.memory_space<vmem>>, %arg4: memref<64x800xbf16, #tpu.memory_space<vmem>>, %arg5: memref<64x800xbf16, #tpu.memory_space<vmem>>, %arg6: memref<1x800xf32, #tpu.memory_space<vmem>>, %arg7: memref<800x800xbf16, #tpu.memory_space<vmem>>, %arg8: memref<1x800xf32, #tpu.memory_space<vmem>>, %arg9: memref<800x128xbf16, #tpu.memory_space<vmem>>, %arg10: memref<1x128xf32, #tpu.memory_space<vmem>>, %arg11: memref<8x128xf32, #tpu.memory_space<vmem>>) attributes {dimension_semantics = [#tpu.dimension_semantics<parallel>], iteration_bounds = array<i64: 1>, scalar_prefetch = 0 : i64, scratch_operands = 0 : i64, tpu.core_type = #tpu.core_type<tc>, window_params = [{transform_indices = @transform_0, window_bounds = array<i64: 8, 104, 49>}, {pipeline_mode = #tpu.pipeline_mode<synchronous>, transform_indices = @transform_1, window_bounds = array<i64: 49, 64>}, {pipeline_mode = #tpu.pipeline_mode<synchronous>, transform_indices = @transform_2, window_bounds = array<i64: 1, 64>}, {pipeline_mode = #tpu.pipeline_mode<synchronous>, transform_indices = @transform_3, window_bounds = array<i64: 64, 800>}, {pipeline_mode = #tpu.pipeline_mode<synchronous>, transform_indices = @transform_4, window_bounds = array<i64: 64, 800>}, {pipeline_mode = #tpu.pipeline_mode<synchronous>, transform_indices = @transform_5, window_bounds = array<i64: 1, 800>}, {pipeline_mode = #tpu.pipeline_mode<synchronous>, transform_indices = @transform_6, window_bounds = array<i64: 800, 800>}, {pipeline_mode = #tpu.pipeline_mode<synchronous>, transform_indices = @transform_7, window_bounds = array<i64: 1, 800>}, {pipeline_mode = #tpu.pipeline_mode<synchronous>, transform_indices = @transform_8, window_bounds = array<i64: 800, 128>}, {pipeline_mode = #tpu.pipeline_mode<synchronous>, transform_indices = @transform_9, window_bounds = array<i64: 1, 128>}, {transform_indices = @transform_10, window_bounds = array<i64: 8, 128>}]} {
    %c0 = arith.constant 0 : index
    %c0_0 = arith.constant 0 : index
    %c0_1 = arith.constant 0 : index
    %0 = vector.load %arg1[%c0, %c0_0, %c0_1] : memref<8x104x49xbf16, #tpu.memory_space<vmem>>, vector<8x104x49xbf16>
    %1 = vector.shape_cast %0 : vector<8x104x49xbf16> to vector<832x49xbf16>
    %c0_2 = arith.constant 0 : index
    %c0_3 = arith.constant 0 : index
    %2 = vector.load %arg2[%c0_2, %c0_3] : memref<49x64xbf16, #tpu.memory_space<vmem>>, vector<49x64xbf16>
    %cst = arith.constant dense<0.000000e+00> : vector<832x64xf32>
    %3 = tpu.matmul %1, %2, %cst {dimension_numbers = #tpu.dot_dimension_numbers<[1], [0], [0], [1], [0, 0, 1, 1], [], []>} : vector<832x49xbf16>, vector<49x64xbf16>, vector<832x64xf32> -> vector<832x64xf32>
    %4 = vector.shape_cast %3 : vector<832x64xf32> to vector<8x104x64xf32>
    %cst_4 = arith.constant dense<0xFF800000> : vector<8x64xf32>
    %5 = vector.multi_reduction <maximumf>, %4, %cst_4 [1] : vector<8x104x64xf32> to vector<8x64xf32>
    %c0_5 = arith.constant 0 : index
    %c0_6 = arith.constant 0 : index
    %6 = vector.load %arg3[%c0_5, %c0_6] : memref<1x64xf32, #tpu.memory_space<vmem>>, vector<1x64xf32>
    %7 = vector.broadcast %6 : vector<1x64xf32> to vector<8x64xf32>
    %8 = arith.addf %5, %7 : vector<8x64xf32>
    %9 = arith.truncf %8 : vector<8x64xf32> to vector<8x64xbf16>
    %cst_7 = arith.constant dense<0x7F800000> : vector<8x64xf32>
    %10 = vector.multi_reduction <minimumf>, %4, %cst_7 [1] : vector<8x104x64xf32> to vector<8x64xf32>
    %c0_8 = arith.constant 0 : index
    %c0_9 = arith.constant 0 : index
    %11 = vector.load %arg3[%c0_8, %c0_9] : memref<1x64xf32, #tpu.memory_space<vmem>>, vector<1x64xf32>
    %12 = vector.broadcast %11 : vector<1x64xf32> to vector<8x64xf32>
    %13 = arith.addf %10, %12 : vector<8x64xf32>
    %14 = arith.truncf %13 : vector<8x64xf32> to vector<8x64xbf16>
    %c0_10 = arith.constant 0 : index
    %c0_11 = arith.constant 0 : index
    %15 = vector.load %arg4[%c0_10, %c0_11] : memref<64x800xbf16, #tpu.memory_space<vmem>>, vector<64x800xbf16>
    %cst_12 = arith.constant dense<0.000000e+00> : vector<8x800xf32>
    %16 = tpu.matmul %9, %15, %cst_12 {dimension_numbers = #tpu.dot_dimension_numbers<[1], [0], [0], [1], [0, 0, 1, 1], [], []>} : vector<8x64xbf16>, vector<64x800xbf16>, vector<8x800xf32> -> vector<8x800xf32>
    %c0_13 = arith.constant 0 : index
    %c0_14 = arith.constant 0 : index
    %17 = vector.load %arg5[%c0_13, %c0_14] : memref<64x800xbf16, #tpu.memory_space<vmem>>, vector<64x800xbf16>
    %cst_15 = arith.constant dense<0.000000e+00> : vector<8x800xf32>
    %18 = tpu.matmul %14, %17, %cst_15 {dimension_numbers = #tpu.dot_dimension_numbers<[1], [0], [0], [1], [0, 0, 1, 1], [], []>} : vector<8x64xbf16>, vector<64x800xbf16>, vector<8x800xf32> -> vector<8x800xf32>
    %19 = arith.addf %16, %18 : vector<8x800xf32>
    %c0_16 = arith.constant 0 : index
    %c0_17 = arith.constant 0 : index
    %20 = vector.load %arg6[%c0_16, %c0_17] : memref<1x800xf32, #tpu.memory_space<vmem>>, vector<1x800xf32>
    %21 = vector.broadcast %20 : vector<1x800xf32> to vector<8x800xf32>
    %22 = arith.addf %19, %21 : vector<8x800xf32>
    %cst_18 = arith.constant 0.000000e+00 : f32
    %23 = vector.broadcast %cst_18 : f32 to vector<8x800xf32>
    %24 = arith.maximumf %22, %23 : vector<8x800xf32>
    %25 = arith.truncf %24 : vector<8x800xf32> to vector<8x800xbf16>
    %c0_19 = arith.constant 0 : index
    %c0_20 = arith.constant 0 : index
    %26 = vector.load %arg7[%c0_19, %c0_20] : memref<800x800xbf16, #tpu.memory_space<vmem>>, vector<800x800xbf16>
    %cst_21 = arith.constant dense<0.000000e+00> : vector<8x800xf32>
    %27 = tpu.matmul %25, %26, %cst_21 {dimension_numbers = #tpu.dot_dimension_numbers<[1], [0], [0], [1], [0, 0, 1, 1], [], []>} : vector<8x800xbf16>, vector<800x800xbf16>, vector<8x800xf32> -> vector<8x800xf32>
    %c0_22 = arith.constant 0 : index
    %c0_23 = arith.constant 0 : index
    %28 = vector.load %arg8[%c0_22, %c0_23] : memref<1x800xf32, #tpu.memory_space<vmem>>, vector<1x800xf32>
    %29 = vector.broadcast %28 : vector<1x800xf32> to vector<8x800xf32>
    %30 = arith.addf %27, %29 : vector<8x800xf32>
    %cst_24 = arith.constant 0.000000e+00 : f32
    %31 = vector.broadcast %cst_24 : f32 to vector<8x800xf32>
    %32 = arith.maximumf %30, %31 : vector<8x800xf32>
    %33 = arith.truncf %32 : vector<8x800xf32> to vector<8x800xbf16>
    %c0_25 = arith.constant 0 : index
    %c0_26 = arith.constant 0 : index
    %34 = vector.load %arg9[%c0_25, %c0_26] : memref<800x128xbf16, #tpu.memory_space<vmem>>, vector<800x128xbf16>
    %cst_27 = arith.constant dense<0.000000e+00> : vector<8x128xf32>
    %35 = tpu.matmul %33, %34, %cst_27 {dimension_numbers = #tpu.dot_dimension_numbers<[1], [0], [0], [1], [0, 0, 1, 1], [], []>} : vector<8x800xbf16>, vector<800x128xbf16>, vector<8x128xf32> -> vector<8x128xf32>
    %c0_28 = arith.constant 0 : index
    %c0_29 = arith.constant 0 : index
    %36 = vector.load %arg10[%c0_28, %c0_29] : memref<1x128xf32, #tpu.memory_space<vmem>>, vector<1x128xf32>
    %37 = vector.broadcast %36 : vector<1x128xf32> to vector<8x128xf32>
    %38 = arith.addf %35, %37 : vector<8x128xf32>
    %c0_30 = arith.constant 0 : index
    %c0_31 = arith.constant 0 : index
    %39 = vector.load %arg11[%c0_30, %c0_31] : memref<8x128xf32, #tpu.memory_space<vmem>>, vector<8x128xf32>
    tpu.vector_store %arg11[%c0_30, %c0_31], %38 {strides = array<i32>} : memref<8x128xf32, #tpu.memory_space<vmem>>, vector<8x128xf32>,
    return
  }
  func.func @transform_0(%arg0: i32) -> (i32, i32, i32) {
    %c0_i32 = arith.constant 0 : i32
    %c0_i32_0 = arith.constant 0 : i32
    %c0_i32_1 = arith.constant 0 : i32
    return %arg0, %c0_i32, %c0_i32_0 : i32, i32, i32
  }
  func.func @transform_1(%arg0: i32) -> (i32, i32) {
    %c0_i32 = arith.constant 0 : i32
    %c0_i32_0 = arith.constant 0 : i32
    %c0_i32_1 = arith.constant 0 : i32
    return %c0_i32, %c0_i32_0 : i32, i32
  }
  func.func @transform_2(%arg0: i32) -> (i32, i32) {
    %c0_i32 = arith.constant 0 : i32
    %c0_i32_0 = arith.constant 0 : i32
    %c0_i32_1 = arith.constant 0 : i32
    return %c0_i32, %c0_i32_0 : i32, i32
  }
  func.func @transform_3(%arg0: i32) -> (i32, i32) {
    %c0_i32 = arith.constant 0 : i32
    %c0_i32_0 = arith.constant 0 : i32
    %c0_i32_1 = arith.constant 0 : i32
    return %c0_i32, %c0_i32_0 : i32, i32
  }
  func.func @transform_4(%arg0: i32) -> (i32, i32) {
    %c0_i32 = arith.constant 0 : i32
    %c0_i32_0 = arith.constant 0 : i32
    %c0_i32_1 = arith.constant 0 : i32
    return %c0_i32, %c0_i32_0 : i32, i32
  }
  func.func @transform_5(%arg0: i32) -> (i32, i32) {
    %c0_i32 = arith.constant 0 : i32
    %c0_i32_0 = arith.constant 0 : i32
    %c0_i32_1 = arith.constant 0 : i32
    return %c0_i32, %c0_i32_0 : i32, i32
  }
  func.func @transform_6(%arg0: i32) -> (i32, i32) {
    %c0_i32 = arith.constant 0 : i32
    %c0_i32_0 = arith.constant 0 : i32
    %c0_i32_1 = arith.constant 0 : i32
    return %c0_i32, %c0_i32_0 : i32, i32
  }
  func.func @transform_7(%arg0: i32) -> (i32, i32) {
    %c0_i32 = arith.constant 0 : i32
    %c0_i32_0 = arith.constant 0 : i32
    %c0_i32_1 = arith.constant 0 : i32
    return %c0_i32, %c0_i32_0 : i32, i32
  }
  func.func @transform_8(%arg0: i32) -> (i32, i32) {
    %c0_i32 = arith.constant 0 : i32
    %c0_i32_0 = arith.constant 0 : i32
    %c0_i32_1 = arith.constant 0 : i32
    return %c0_i32, %c0_i32_0 : i32, i32
  }
  func.func @transform_9(%arg0: i32) -> (i32, i32) {
    %c0_i32 = arith.constant 0 : i32
    %c0_i32_0 = arith.constant 0 : i32
    %c0_i32_1 = arith.constant 0 : i32
    return %c0_i32, %c0_i32_0 : i32, i32
  }
  func.func @transform_10(%arg0: i32) -> (i32, i32) {
    %c0_i32 = arith.constant 0 : i32
    %c0_i32_0 = arith.constant 0 : i32
    return %arg0, %c0_i32 : i32, i32
  }
}

</mosaic_0001>

<llo_original>
// kernel: tpu_custom_call.1
$region0: #{tpu_custom_call.1}
  #allocation0 [shape = 'u32[]', space=smem, size = 0x4, offset = 0x4, fixed_abs, tag = 'smem constant byte address 0x4 - core index']
  #allocation1 [shape = 'u32[144,128]{1,0:T(1,128)}', space=vmem, size = 0x12000, scoped, tag = 'internal scratch']
  %s0 = inlined_call_operand.vmem [shape: bf16[8,104,49], index: 0, kind: input, shape index: {}]
  %s1 = inlined_call_operand.hbm [shape: bf16[49,64], index: 1, kind: input, shape index: {}]
  %s2 = inlined_call_operand.hbm [shape: f32[1,64], index: 2, kind: input, shape index: {}]
  %s3 = inlined_call_operand.hbm [shape: bf16[64,800], index: 3, kind: input, shape index: {}]
  %s4 = inlined_call_operand.hbm [shape: bf16[64,800], index: 4, kind: input, shape index: {}]
  %s5 = inlined_call_operand.hbm [shape: f32[1,800], index: 5, kind: input, shape index: {}]
  %s6 = inlined_call_operand.hbm [shape: bf16[800,800], index: 6, kind: input, shape index: {}]
  %s7 = inlined_call_operand.hbm [shape: f32[1,800], index: 7, kind: input, shape index: {}]
  %s8 = inlined_call_operand.hbm [shape: bf16[800,128], index: 8, kind: input, shape index: {}]
  %s9 = inlined_call_operand.hbm [shape: f32[1,128], index: 9, kind: input, shape index: {}]
  %s10 = inlined_call_operand.hbm [shape: f32[8,128], index: 10, kind: output, shape index: {}]
  %s11 = sld [smem:[#allocation0]]
  $region86: #{tpu_custom_call.1} parent=0
    _
  %s13 = ssub.s32 1, %s11
  %s14 = scalar_select 0, %s13, %s11
  $region1: #{tpu_custom_call.1} parent=0
    #allocation2 [shape = 'u8[14336]{0}', space=vmem, size = 0x3800, scoped, tag = 'input window, operand 1, single buffered']
    #allocation3 [shape = 's32[1]{0}', space=sflag, size = 0x4, scoped, tag = 'scoped memory for tpu_custom_call.1']
    #allocation4 [shape = 's32[1]{0}', space=sflag, size = 0x4, scoped, tag = 'scoped memory for tpu_custom_call.1']
    #allocation5 [shape = 'u8[512]{0}', space=vmem, size = 0x400, scoped, tag = 'input window, operand 2, single buffered']
    #allocation6 [shape = 's32[1]{0}', space=sflag, size = 0x4, scoped, tag = 'scoped memory for tpu_custom_call.1']
    #allocation7 [shape = 'u8[114688]{0}', space=vmem, size = 0x1c000, scoped, tag = 'input window, operand 3, single buffered']
    #allocation8 [shape = 'u8[114688]{0}', space=vmem, size = 0x1c000, scoped, tag = 'input window, operand 4, single buffered']
    #allocation9 [shape = 's32[1]{0}', space=sflag, size = 0x4, scoped, tag = 'scoped memory for tpu_custom_call.1']
    #allocation10 [shape = 'u8[3584]{0}', space=vmem, size = 0x1000, scoped, tag = 'input window, operand 5, single buffered']
    #allocation11 [shape = 'u8[1433600]{0}', space=vmem, size = 0x15e000, scoped, tag = 'input window, operand 6, single buffered']
    #allocation12 [shape = 's32[1]{0}', space=sflag, size = 0x4, scoped, tag = 'scoped memory for tpu_custom_call.1']
    #allocation13 [shape = 'u8[3584]{0}', space=vmem, size = 0x1000, scoped, tag = 'input window, operand 7, single buffered']
    #allocation14 [shape = 'u8[204800]{0}', space=vmem, size = 0x32000, scoped, tag = 'input window, operand 8, single buffered']
    #allocation15 [shape = 's32[1]{0}', space=sflag, size = 0x4, scoped, tag = 'scoped memory for tpu_custom_call.1']
    #allocation16 [shape = 'u8[512]{0}', space=vmem, size = 0x400, scoped, tag = 'input window, operand 9, single buffered']
    #allocation17 [shape = 'u8[4096]{0}', space=vmem, size = 0x1000, scoped, tag = 'output window, operand 0, single buffered']
    %15 = vsyncpa [#allocation3], 0
    %16 = vsyncpa [#allocation6], 0
    %17 = vsyncpa [#allocation9], 0
    %18 = vsyncpa [#allocation12], 0
    %19 = vsyncpa [#allocation15], 0
    %20 = vsyncpa [#allocation4], 0
    // Predicated region
    $region2: #{tpu_custom_call.1} parent=1 // pred_check
      _
    $region3: #{tpu_custom_call.1} parent=1 // pred_check_branch
      %22 = sbr.rel (0) target = $region5
    $region4: #{tpu_custom_call.1} parent=1 // pred_region
      _
    $region5: #{tpu_custom_call.1} parent=1 // pred_fallthru
      _
    // Predicated region
    $region6: #{tpu_custom_call.1} parent=1 // pred_check
      _
    $region7: #{tpu_custom_call.1} parent=1 // pred_check_branch
      %24 = sbr.rel (0) target = $region9
    $region8: #{tpu_custom_call.1} parent=1 // pred_region
      %s26 = ssub.s32 448, 448
      %27 = vsyncadd [#allocation3], %s26
      %s28 = sshll.u32 [#allocation2], 4
      %s29 = int_to_ptr.vmem [resolvable:$true] %s28
      %34 = dma.hbm_to_vmem [thread:$0]  %s1, 448, %s29, [#allocation3], 64, 64, 4
    $region9: #{tpu_custom_call.1} parent=1 // pred_fallthru
      _
    // Predicated region
    $region10: #{tpu_custom_call.1} parent=1 // pred_check
      _
    $region11: #{tpu_custom_call.1} parent=1 // pred_check_branch
      %36 = sbr.rel (0) target = $region13
    $region12: #{tpu_custom_call.1} parent=1 // pred_region
      %s38 = ssub.s32 16, 16
      %39 = vsyncadd [#allocation6], %s38
      %s41 = sshll.u32 [#allocation5], 4
      %s42 = int_to_ptr.vmem [resolvable:$true] %s41
      %44 = dma.hbm_to_vmem [thread:$0]  %s2, 16, %s42, [#allocation6]
    $region13: #{tpu_custom_call.1} parent=1 // pred_fallthru
      _
    // Predicated region
    $region14: #{tpu_custom_call.1} parent=1 // pred_check
      _
    $region15: #{tpu_custom_call.1} parent=1 // pred_check_branch
      %46 = sbr.rel (0) target = $region17
    $region16: #{tpu_custom_call.1} parent=1 // pred_region
      %s48 = ssub.s32 3584, 3584
      %49 = vsyncadd [#allocation6], %s48
      %s50 = sshll.u32 [#allocation7], 4
      %s51 = int_to_ptr.vmem [resolvable:$true] %s50
      %56 = dma.hbm_to_vmem [thread:$0]  %s3, 3584, %s51, [#allocation6], 448, 448, 28
    $region17: #{tpu_custom_call.1} parent=1 // pred_fallthru
      _
    // Predicated region
    $region18: #{tpu_custom_call.1} parent=1 // pred_check
      _
    $region19: #{tpu_custom_call.1} parent=1 // pred_check_branch
      %58 = sbr.rel (0) target = $region21
    $region20: #{tpu_custom_call.1} parent=1 // pred_region
      %s60 = ssub.s32 3584, 3584
      %61 = vsyncadd [#allocation9], %s60
      %s62 = sshll.u32 [#allocation8], 4
      %s63 = int_to_ptr.vmem [resolvable:$true] %s62
      %68 = dma.hbm_to_vmem [thread:$0]  %s4, 3584, %s63, [#allocation9], 448, 448, 28
    $region21: #{tpu_custom_call.1} parent=1 // pred_fallthru
      _
    // Predicated region
    $region22: #{tpu_custom_call.1} parent=1 // pred_check
      _
    $region23: #{tpu_custom_call.1} parent=1 // pred_check_branch
      %70 = sbr.rel (0) target = $region25
    $region24: #{tpu_custom_call.1} parent=1 // pred_region
      %s72 = ssub.s32 112, 112
      %73 = vsyncadd [#allocation9], %s72
      %s75 = sshll.u32 [#allocation10], 4
      %s76 = int_to_ptr.vmem [resolvable:$true] %s75
      %78 = dma.hbm_to_vmem [thread:$0]  %s5, 112, %s76, [#allocation9]
    $region25: #{tpu_custom_call.1} parent=1 // pred_fallthru
      _
    // Predicated region
    $region26: #{tpu_custom_call.1} parent=1 // pred_check
      _
    $region27: #{tpu_custom_call.1} parent=1 // pred_check_branch
      %80 = sbr.rel (0) target = $region29
    $region28: #{tpu_custom_call.1} parent=1 // pred_region
      %s82 = ssub.s32 44800, 44800
      %83 = vsyncadd [#allocation12], %s82
      %s84 = sshll.u32 [#allocation11], 4
      %s85 = int_to_ptr.vmem [resolvable:$true] %s84
      %90 = dma.hbm_to_vmem [thread:$0]  %s6, 44800, %s85, [#allocation12], 448, 448, 28
    $region29: #{tpu_custom_call.1} parent=1 // pred_fallthru
      _
    // Predicated region
    $region30: #{tpu_custom_call.1} parent=1 // pred_check
      _
    $region31: #{tpu_custom_call.1} parent=1 // pred_check_branch
      %92 = sbr.rel (0) target = $region33
    $region32: #{tpu_custom_call.1} parent=1 // pred_region
      %s94 = ssub.s32 112, 112
      %95 = vsyncadd [#allocation12], %s94
      %s97 = sshll.u32 [#allocation13], 4
      %s98 = int_to_ptr.vmem [resolvable:$true] %s97
      %100 = dma.hbm_to_vmem [thread:$0]  %s7, 112, %s98, [#allocation12]
    $region33: #{tpu_custom_call.1} parent=1 // pred_fallthru
      _
    // Predicated region
    $region34: #{tpu_custom_call.1} parent=1 // pred_check
      _
    $region35: #{tpu_custom_call.1} parent=1 // pred_check_branch
      %102 = sbr.rel (0) target = $region37
    $region36: #{tpu_custom_call.1} parent=1 // pred_region
      %s104 = ssub.s32 6400, 6400
      %105 = vsyncadd [#allocation15], %s104
      %s106 = sshll.u32 [#allocation14], 4
      %s107 = int_to_ptr.vmem [resolvable:$true] %s106
      %112 = dma.hbm_to_vmem [thread:$0]  %s8, 6400, %s107, [#allocation15], 64, 64, 4
    $region37: #{tpu_custom_call.1} parent=1 // pred_fallthru
      _
    // Predicated region
    $region38: #{tpu_custom_call.1} parent=1 // pred_check
      _
    $region39: #{tpu_custom_call.1} parent=1 // pred_check_branch
      %114 = sbr.rel (0) target = $region41
    $region40: #{tpu_custom_call.1} parent=1 // pred_region
      %s116 = ssub.s32 16, 16
      %117 = vsyncadd [#allocation15], %s116
      %s119 = sshll.u32 [#allocation16], 4
      %s120 = int_to_ptr.vmem [resolvable:$true] %s119
      %122 = dma.hbm_to_vmem [thread:$0]  %s9, 16, %s120, [#allocation15]
    $region41: #{tpu_custom_call.1} parent=1 // pred_fallthru
      _
    // Predicated region
    $region42: #{tpu_custom_call.1} parent=1 // pred_check
      _
    $region43: #{tpu_custom_call.1} parent=1 // pred_check_branch
      %124 = sbr.rel (0) target = $region45
    $region44: #{tpu_custom_call.1} parent=1 // pred_region
      %125 = dma.done [#allocation3], 448
    $region45: #{tpu_custom_call.1} parent=1 // pred_fallthru
      _
    // Predicated region
    $region46: #{tpu_custom_call.1} parent=1 // pred_check
      _
    $region47: #{tpu_custom_call.1} parent=1 // pred_check_branch
      %127 = sbr.rel (0) target = $region49
    $region48: #{tpu_custom_call.1} parent=1 // pred_region
      %128 = dma.done [#allocation6], 16
    $region49: #{tpu_custom_call.1} parent=1 // pred_fallthru
      _
    // Predicated region
    $region50: #{tpu_custom_call.1} parent=1 // pred_check
      _
    $region51: #{tpu_custom_call.1} parent=1 // pred_check_branch
      %130 = sbr.rel (0) target = $region53
    $region52: #{tpu_custom_call.1} parent=1 // pred_region
      %131 = dma.done [#allocation6], 3584
    $region53: #{tpu_custom_call.1} parent=1 // pred_fallthru
      _
    // Predicated region
    $region54: #{tpu_custom_call.1} parent=1 // pred_check
      _
    $region55: #{tpu_custom_call.1} parent=1 // pred_check_branch
      %133 = sbr.rel (0) target = $region57
    $region56: #{tpu_custom_call.1} parent=1 // pred_region
      %134 = dma.done [#allocation9], 3584
    $region57: #{tpu_custom_call.1} parent=1 // pred_fallthru
      _
    // Predicated region
    $region58: #{tpu_custom_call.1} parent=1 // pred_check
      _
    $region59: #{tpu_custom_call.1} parent=1 // pred_check_branch
      %136 = sbr.rel (0) target = $region61
    $region60: #{tpu_custom_call.1} parent=1 // pred_region
      %137 = dma.done [#allocation9], 112
    $region61: #{tpu_custom_call.1} parent=1 // pred_fallthru
      _
    // Predicated region
    $region62: #{tpu_custom_call.1} parent=1 // pred_check
      _
    $region63: #{tpu_custom_call.1} parent=1 // pred_check_branch
      %139 = sbr.rel (0) target = $region65
    $region64: #{tpu_custom_call.1} parent=1 // pred_region
      %140 = dma.done [#allocation12], 44800
    $region65: #{tpu_custom_call.1} parent=1 // pred_fallthru
      _
    // Predicated region
    $region66: #{tpu_custom_call.1} parent=1 // pred_check
      _
    $region67: #{tpu_custom_call.1} parent=1 // pred_check_branch
      %142 = sbr.rel (0) target = $region69
    $region68: #{tpu_custom_call.1} parent=1 // pred_region
      %143 = dma.done [#allocation12], 112
    $region69: #{tpu_custom_call.1} parent=1 // pred_fallthru
      _
    // Predicated region
    $region70: #{tpu_custom_call.1} parent=1 // pred_check
      _
    $region71: #{tpu_custom_call.1} parent=1 // pred_check_branch
      %145 = sbr.rel (0) target = $region73
    $region72: #{tpu_custom_call.1} parent=1 // pred_region
      %146 = dma.done [#allocation15], 6400
    $region73: #{tpu_custom_call.1} parent=1 // pred_fallthru
      _
    // Predicated region
    $region74: #{tpu_custom_call.1} parent=1 // pred_check
      _
    $region75: #{tpu_custom_call.1} parent=1 // pred_check_branch
      %148 = sbr.rel (0) target = $region77
    $region76: #{tpu_custom_call.1} parent=1 // pred_region
      %149 = dma.done [#allocation15], 16
    $region77: #{tpu_custom_call.1} parent=1 // pred_fallthru
      _
    %v151 = vld [vmem:[%s0] sm:$0xf]
    %v152 = vld [vmem:[%s0 + $0x4] sm:$0xf]
    %v153 = vld [vmem:[%s0 + $0x8] sm:$0xf]
    %v154 = vld [vmem:[%s0 + $0xc] sm:$0xf]
    %v155 = vld [vmem:[%s0 + $0x10] sm:$0xf]
    %v156 = vld [vmem:[%s0 + $0x14] sm:$0xf]
    %v157 = vld [vmem:[%s0 + $0x18] sm:$0xf]
    %v158 = vld [vmem:[%s0 + $0x1c] sm:$0xf]
    %v159 = vld [vmem:[%s0 + $0x20] sm:$0xf]
    %v160 = vld [vmem:[%s0 + $0x24] sm:$0xf]
    %v161 = vld [vmem:[%s0 + $0x28] sm:$0xf]
    %v162 = vld [vmem:[%s0 + $0x2c] sm:$0xf]
    %v163 = vld [vmem:[%s0 + $0x30] sm:$0xf]
    %v164 = vld [vmem:[%s0 + $0x34] sm:$0xf]
    %v165 = vld [vmem:[%s0 + $0x38] sm:$0xf]
    %v166 = vld [vmem:[%s0 + $0x3c] sm:$0xf]
    %v167 = vld [vmem:[%s0 + $0x40] sm:$0xf]
    %v168 = vld [vmem:[%s0 + $0x44] sm:$0xf]
    %v169 = vld [vmem:[%s0 + $0x48] sm:$0xf]
    %v170 = vld [vmem:[%s0 + $0x4c] sm:$0xf]
    %v171 = vld [vmem:[%s0 + $0x50] sm:$0xf]
    %v172 = vld [vmem:[%s0 + $0x54] sm:$0xf]
    %v173 = vld [vmem:[%s0 + $0x58] sm:$0xf]
    %v174 = vld [vmem:[%s0 + $0x5c] sm:$0xf]
    %v175 = vld [vmem:[%s0 + $0x60] sm:$0xf]
    %v176 = vld [vmem:[%s0 + $0x64] sm:$0xf]
    %v177 = vld [vmem:[%s0 + $0x68] sm:$0xf]
    %v178 = vld [vmem:[%s0 + $0x6c] sm:$0xf]
    %v179 = vld [vmem:[%s0 + $0x70] sm:$0xf]
    %v180 = vld [vmem:[%s0 + $0x74] sm:$0xf]
    %v181 = vld [vmem:[%s0 + $0x78] sm:$0xf]
    %v182 = vld [vmem:[%s0 + $0x7c] sm:$0xf]
    %v183 = vld [vmem:[%s0 + $0x80] sm:$0xf]
    %v184 = vld [vmem:[%s0 + $0x84] sm:$0xf]
    %v185 = vld [vmem:[%s0 + $0x88] sm:$0xf]
    %v186 = vld [vmem:[%s0 + $0x8c] sm:$0xf]
    %v187 = vld [vmem:[%s0 + $0x90] sm:$0xf]
    %v188 = vld [vmem:[%s0 + $0x94] sm:$0xf]
    %v189 = vld [vmem:[%s0 + $0x98] sm:$0xf]
    %v190 = vld [vmem:[%s0 + $0x9c] sm:$0xf]
    %v191 = vld [vmem:[%s0 + $0xa0] sm:$0xf]
    %v192 = vld [vmem:[%s0 + $0xa4] sm:$0xf]
    %v193 = vld [vmem:[%s0 + $0xa8] sm:$0xf]
    %v194 = vld [vmem:[%s0 + $0xac] sm:$0xf]
    %v195 = vld [vmem:[%s0 + $0xb0] sm:$0xf]
    %v196 = vld [vmem:[%s0 + $0xb4] sm:$0xf]
    %v197 = vld [vmem:[%s0 + $0xb8] sm:$0xf]
    %v198 = vld [vmem:[%s0 + $0xbc] sm:$0xf]
    %v199 = vld [vmem:[%s0 + $0xc0] sm:$0xf]
    %v200 = vld [vmem:[%s0 + $0xc4] sm:$0xf]
    %v201 = vld [vmem:[%s0 + $0xc8] sm:$0xf]
    %v202 = vld [vmem:[%s0 + $0xcc] sm:$0xf]
    %v203 = vld [vmem:[%s0 + $0xd0] sm:$0xf]
    %v204 = vld [vmem:[%s0 + $0xd4] sm:$0xf]
    %v205 = vld [vmem:[%s0 + $0xd8] sm:$0xf]
    %v206 = vld [vmem:[%s0 + $0xdc] sm:$0xf]
    %v207 = vld [vmem:[%s0 + $0xe0] sm:$0xf]
    %v208 = vld [vmem:[%s0 + $0xe4] sm:$0xf]
    %v209 = vld [vmem:[%s0 + $0xe8] sm:$0xf]
    %v210 = vld [vmem:[%s0 + $0xec] sm:$0xf]
    %v211 = vld [vmem:[%s0 + $0xf0] sm:$0xf]
    %v212 = vld [vmem:[%s0 + $0xf4] sm:$0xf]
    %v213 = vld [vmem:[%s0 + $0xf8] sm:$0xf]
    %v214 = vld [vmem:[%s0 + $0xfc] sm:$0xf]
    %v215 = vld [vmem:[%s0 + $0x100] sm:$0xf]
    %v216 = vld [vmem:[%s0 + $0x104] sm:$0xf]
    %v217 = vld [vmem:[%s0 + $0x108] sm:$0xf]
    %v218 = vld [vmem:[%s0 + $0x10c] sm:$0xf]
    %v219 = vld [vmem:[%s0 + $0x110] sm:$0xf]
    %v220 = vld [vmem:[%s0 + $0x114] sm:$0xf]
    %v221 = vld [vmem:[%s0 + $0x118] sm:$0xf]
    %v222 = vld [vmem:[%s0 + $0x11c] sm:$0xf]
    %v223 = vld [vmem:[%s0 + $0x120] sm:$0xf]
    %v224 = vld [vmem:[%s0 + $0x124] sm:$0xf]
    %v225 = vld [vmem:[%s0 + $0x128] sm:$0xf]
    %v226 = vld [vmem:[%s0 + $0x12c] sm:$0xf]
    %v227 = vld [vmem:[%s0 + $0x130] sm:$0xf]
    %v228 = vld [vmem:[%s0 + $0x134] sm:$0xf]
    %v229 = vld [vmem:[%s0 + $0x138] sm:$0xf]
    %v230 = vld [vmem:[%s0 + $0x13c] sm:$0xf]
    %v231 = vld [vmem:[%s0 + $0x140] sm:$0xf]
    %v232 = vld [vmem:[%s0 + $0x144] sm:$0xf]
    %v233 = vld [vmem:[%s0 + $0x148] sm:$0xf]
    %v234 = vld [vmem:[%s0 + $0x14c] sm:$0xf]
    %v235 = vld [vmem:[%s0 + $0x150] sm:$0xf]
    %v236 = vld [vmem:[%s0 + $0x154] sm:$0xf]
    %v237 = vld [vmem:[%s0 + $0x158] sm:$0xf]
    %v238 = vld [vmem:[%s0 + $0x15c] sm:$0xf]
    %v239 = vld [vmem:[%s0 + $0x160] sm:$0xf]
    %v240 = vld [vmem:[%s0 + $0x164] sm:$0xf]
    %v241 = vld [vmem:[%s0 + $0x168] sm:$0xf]
    %v242 = vld [vmem:[%s0 + $0x16c] sm:$0xf]
    %v243 = vld [vmem:[%s0 + $0x170] sm:$0xf]
    %v244 = vld [vmem:[%s0 + $0x174] sm:$0xf]
    %v245 = vld [vmem:[%s0 + $0x178] sm:$0xf]
    %v246 = vld [vmem:[%s0 + $0x17c] sm:$0xf]
    %v247 = vld [vmem:[%s0 + $0x180] sm:$0xf]
    %v248 = vld [vmem:[%s0 + $0x184] sm:$0xf]
    %v249 = vld [vmem:[%s0 + $0x188] sm:$0xf]
    %v250 = vld [vmem:[%s0 + $0x18c] sm:$0xf]
    %v251 = vld [vmem:[%s0 + $0x190] sm:$0xf]
    %v252 = vld [vmem:[%s0 + $0x194] sm:$0xf]
    %v253 = vld [vmem:[%s0 + $0x198] sm:$0xf]
    %v254 = vld [vmem:[%s0 + $0x19c] sm:$0xf]
    %v255 = vld [vmem:[#allocation2] sm:$0xf]
    %v256 = vld [vmem:[#allocation2 + $0x4] sm:$0xf]
    %v257 = vld [vmem:[#allocation2 + $0x8] sm:$0xf]
    %v258 = vld [vmem:[#allocation2 + $0xc] sm:$0xf]
    %v259 = vld [vmem:[#allocation2 + $0x10] sm:$0xf]
    %v260 = vld [vmem:[#allocation2 + $0x14] sm:$0xf]
    %v261 = vld [vmem:[#allocation2 + $0x18] sm:$0x1]
    %v366 = vunpack.c.l.b16 %v151
    %v367 = vunpack.c.l.b16 %v152
    %v368 = vunpack.c.l.b16 %v153
    %v369 = vunpack.c.l.b16 %v154
    %v370 = vunpack.c.l.b16 %v155
    %v371 = vunpack.c.l.b16 %v156
    %v372 = vunpack.c.l.b16 %v157
    %v373 = vunpack.c.l.b16 %v158
    %v374 = vunpack.c.l.b16 %v159
    %v375 = vunpack.c.l.b16 %v160
    %v376 = vunpack.c.l.b16 %v161
    %v377 = vunpack.c.l.b16 %v162
    %v378 = vunpack.c.l.b16 %v163
    %v379 = vunpack.c.l.b16 %v164
    %v380 = vunpack.c.l.b16 %v165
    %v381 = vunpack.c.l.b16 %v166
    %v382 = vunpack.c.l.b16 %v167
    %v383 = vunpack.c.l.b16 %v168
    %v384 = vunpack.c.l.b16 %v169
    %v385 = vunpack.c.l.b16 %v170
    %v386 = vunpack.c.l.b16 %v171
    %v387 = vunpack.c.l.b16 %v172
    %v388 = vunpack.c.l.b16 %v173
    %v389 = vunpack.c.l.b16 %v174
    %v390 = vunpack.c.l.b16 %v175
    %v391 = vunpack.c.l.b16 %v176
    %v392 = vunpack.c.l.b16 %v177
    %v393 = vunpack.c.l.b16 %v178
    %v394 = vunpack.c.l.b16 %v179
    %v395 = vunpack.c.l.b16 %v180
    %v396 = vunpack.c.l.b16 %v181
    %v397 = vunpack.c.l.b16 %v182
    %v398 = vunpack.c.l.b16 %v183
    %v399 = vunpack.c.l.b16 %v184
    %v400 = vunpack.c.l.b16 %v185
    %v401 = vunpack.c.l.b16 %v186
    %v402 = vunpack.c.l.b16 %v187
    %v403 = vunpack.c.l.b16 %v188
    %v404 = vunpack.c.l.b16 %v189
    %v405 = vunpack.c.l.b16 %v190
    %v406 = vunpack.c.l.b16 %v191
    %v407 = vunpack.c.l.b16 %v192
    %v408 = vunpack.c.l.b16 %v193
    %v409 = vunpack.c.l.b16 %v194
    %v410 = vunpack.c.l.b16 %v195
    %v411 = vunpack.c.l.b16 %v196
    %v412 = vunpack.c.l.b16 %v197
    %v413 = vunpack.c.l.b16 %v198
    %v414 = vunpack.c.l.b16 %v199
    %v415 = vunpack.c.l.b16 %v200
    %v416 = vunpack.c.l.b16 %v201
    %v417 = vunpack.c.l.b16 %v202
    %v418 = vunpack.c.l.b16 %v203
    %v419 = vunpack.c.l.b16 %v204
    %v420 = vunpack.c.l.b16 %v205
    %v421 = vunpack.c.l.b16 %v206
    %v422 = vunpack.c.l.b16 %v207
    %v423 = vunpack.c.l.b16 %v208
    %v424 = vunpack.c.l.b16 %v209
    %v425 = vunpack.c.l.b16 %v210
    %v426 = vunpack.c.l.b16 %v211
    %v427 = vunpack.c.l.b16 %v212
    %v428 = vunpack.c.l.b16 %v213
    %v429 = vunpack.c.l.b16 %v214
    %v430 = vunpack.c.l.b16 %v215
    %v431 = vunpack.c.l.b16 %v216
    %v432 = vunpack.c.l.b16 %v217
    %v433 = vunpack.c.l.b16 %v218
    %v434 = vunpack.c.l.b16 %v219
    %v435 = vunpack.c.l.b16 %v220
    %v436 = vunpack.c.l.b16 %v221
    %v437 = vunpack.c.l.b16 %v222
    %v438 = vunpack.c.l.b16 %v223
    %v439 = vunpack.c.l.b16 %v224
    %v440 = vunpack.c.l.b16 %v225
    %v441 = vunpack.c.l.b16 %v226
    %v442 = vunpack.c.l.b16 %v227
    %v443 = vunpack.c.l.b16 %v228
    %v444 = vunpack.c.l.b16 %v229
    %v445 = vunpack.c.l.b16 %v230
    %v446 = vunpack.c.l.b16 %v231
    %v447 = vunpack.c.l.b16 %v232
    %v448 = vunpack.c.l.b16 %v233
    %v449 = vunpack.c.l.b16 %v234
    %v450 = vunpack.c.l.b16 %v235
    %v451 = vunpack.c.l.b16 %v236
    %v452 = vunpack.c.l.b16 %v237
    %v453 = vunpack.c.l.b16 %v238
    %v454 = vunpack.c.l.b16 %v239
    %v455 = vunpack.c.l.b16 %v240
    %v456 = vunpack.c.l.b16 %v241
    %v457 = vunpack.c.l.b16 %v242
    %v458 = vunpack.c.l.b16 %v243
    %v459 = vunpack.c.l.b16 %v244
    %v460 = vunpack.c.l.b16 %v245
    %v461 = vunpack.c.l.b16 %v246
    %v462 = vunpack.c.l.b16 %v247
    %v463 = vunpack.c.l.b16 %v248
    %v464 = vunpack.c.l.b16 %v249
    %v465 = vunpack.c.l.b16 %v250
    %v466 = vunpack.c.l.b16 %v251
    %v467 = vunpack.c.l.b16 %v252
    %v468 = vunpack.c.l.b16 %v253
    %v469 = vunpack.c.l.b16 %v254
    %v470 = vpack.c.b16 %v367, %v366
    %v471 = vpack.c.b16 %v369, %v368
    %v472 = vpack.c.b16 %v371, %v370
    %v473 = vpack.c.b16 %v373, %v372
    %v474 = vpack.c.b16 %v375, %v374
    %v475 = vpack.c.b16 %v377, %v376
    %v476 = vpack.c.b16 %v379, %v378
    %v477 = vpack.c.b16 %v381, %v380
    %v478 = vpack.c.b16 %v383, %v382
    %v479 = vpack.c.b16 %v385, %v384
    %v480 = vpack.c.b16 %v387, %v386
    %v481 = vpack.c.b16 %v389, %v388
    %v482 = vpack.c.b16 %v391, %v390
    %v483 = vpack.c.b16 %v393, %v392
    %v484 = vpack.c.b16 %v395, %v394
    %v485 = vpack.c.b16 %v397, %v396
    %v486 = vpack.c.b16 %v399, %v398
    %v487 = vpack.c.b16 %v401, %v400
    %v488 = vpack.c.b16 %v403, %v402
    %v489 = vpack.c.b16 %v405, %v404
    %v490 = vpack.c.b16 %v407, %v406
    %v491 = vpack.c.b16 %v409, %v408
    %v492 = vpack.c.b16 %v411, %v410
    %v493 = vpack.c.b16 %v413, %v412
    %v494 = vpack.c.b16 %v415, %v414
    %v495 = vpack.c.b16 %v417, %v416
    %v496 = vpack.c.b16 %v419, %v418
    %v497 = vpack.c.b16 %v421, %v420
    %v498 = vpack.c.b16 %v423, %v422
    %v499 = vpack.c.b16 %v425, %v424
    %v500 = vpack.c.b16 %v427, %v426
    %v501 = vpack.c.b16 %v429, %v428
    %v502 = vpack.c.b16 %v431, %v430
    %v503 = vpack.c.b16 %v433, %v432
    %v504 = vpack.c.b16 %v435, %v434
    %v505 = vpack.c.b16 %v437, %v436
    %v506 = vpack.c.b16 %v439, %v438
    %v507 = vpack.c.b16 %v441, %v440
    %v508 = vpack.c.b16 %v443, %v442
    %v509 = vpack.c.b16 %v445, %v444
    %v510 = vpack.c.b16 %v447, %v446
    %v511 = vpack.c.b16 %v449, %v448
    %v512 = vpack.c.b16 %v451, %v450
    %v513 = vpack.c.b16 %v453, %v452
    %v514 = vpack.c.b16 %v455, %v454
    %v515 = vpack.c.b16 %v457, %v456
    %v516 = vpack.c.b16 %v459, %v458
    %v517 = vpack.c.b16 %v461, %v460
    %v518 = vpack.c.b16 %v463, %v462
    %v519 = vpack.c.b16 %v465, %v464
    %v520 = vpack.c.b16 %v467, %v466
    %v521 = vpack.c.b16 %v469, %v468
    %v529 = vunpack.c.l.b16 %v255
    %v530 = vunpack.c.l.b16 %v256
    %v531 = vunpack.c.l.b16 %v257
    %v532 = vunpack.c.l.b16 %v258
    %v533 = vunpack.c.l.b16 %v259
    %v534 = vunpack.c.l.b16 %v260
    %v535 = vunpack.c.l.b16 %v261
    %v536 = vpack.c.b16 %v530, %v529
    %v537 = vpack.c.b16 %v532, %v531
    %v538 = vpack.c.b16 %v534, %v533
    %v539 = vpack.c.b16 %v535, %v535
    %vm543 = vcmask 400384
    %v545 = vsel %vm543, %v470, 0
    %v548 = vsel %vm543, %v471, 0
    %v551 = vsel %vm543, %v472, 0
    %v554 = vsel %vm543, %v473, 0
    %v557 = vsel %vm543, %v474, 0
    %v560 = vsel %vm543, %v475, 0
    %v563 = vsel %vm543, %v476, 0
    %v566 = vsel %vm543, %v477, 0
    %v569 = vsel %vm543, %v478, 0
    %v572 = vsel %vm543, %v479, 0
    %v575 = vsel %vm543, %v480, 0
    %v578 = vsel %vm543, %v481, 0
    %v581 = vsel %vm543, %v482, 0
    %v584 = vsel %vm543, %v483, 0
    %v587 = vsel %vm543, %v484, 0
    %v590 = vsel %vm543, %v485, 0
    %v593 = vsel %vm543, %v486, 0
    %v596 = vsel %vm543, %v487, 0
    %v599 = vsel %vm543, %v488, 0
    %v602 = vsel %vm543, %v489, 0
    %v605 = vsel %vm543, %v490, 0
    %v608 = vsel %vm543, %v491, 0
    %v611 = vsel %vm543, %v492, 0
    %v614 = vsel %vm543, %v493, 0
    %v617 = vsel %vm543, %v494, 0
    %v620 = vsel %vm543, %v495, 0
    %v623 = vsel %vm543, %v496, 0
    %v626 = vsel %vm543, %v497, 0
    %v629 = vsel %vm543, %v498, 0
    %v632 = vsel %vm543, %v499, 0
    %v635 = vsel %vm543, %v500, 0
    %v638 = vsel %vm543, %v501, 0
    %v641 = vsel %vm543, %v502, 0
    %v644 = vsel %vm543, %v503, 0
    %v647 = vsel %vm543, %v504, 0
    %v650 = vsel %vm543, %v505, 0
    %v653 = vsel %vm543, %v506, 0
    %v656 = vsel %vm543, %v507, 0
    %v659 = vsel %vm543, %v508, 0
    %v662 = vsel %vm543, %v509, 0
    %v665 = vsel %vm543, %v510, 0
    %v668 = vsel %vm543, %v511, 0
    %v671 = vsel %vm543, %v512, 0
    %v674 = vsel %vm543, %v513, 0
    %v677 = vsel %vm543, %v514, 0
    %v680 = vsel %vm543, %v515, 0
    %v683 = vsel %vm543, %v516, 0
    %v686 = vsel %vm543, %v517, 0
    %v689 = vsel %vm543, %v518, 0
    %v692 = vsel %vm543, %v519, 0
    %v695 = vsel %vm543, %v520, 0
    %v698 = vsel %vm543, %v521, 0
    %vm700 = vcmask 1040384
    %v701 = vsel 0, 4294967295, 65535
    %v702 = vsel %vm700, %v701, 0
    %v704 = vand.u32 %v539, %v702
    %706 = vmatprep.subr.bf16.mxu0 0
    %707 = vmatpush1.bf16.msra.mxu0 %v536
    %708 = vmatprep.subr.bf16.mxu0 0
    %709 = vmatpush1.bf16.msra.mxu0 %v537
    %710 = vmatprep.subr.bf16.mxu0 0
    %711 = vmatpush1.bf16.msra.mxu0 %v538
    %712 = vmatprep.subr.bf16.mxu0 0
    %713 = vmatpush1.bf16.msra.mxu0 %v704
    %714 = vmatprep.subr.bf16.mxu0 0
    %715 = vmatpush1.bf16.msra.mxu0 0
    %716 = vmatprep.subr.bf16.mxu0 0
    %717 = vmatpush1.bf16.msra.mxu0 0
    %718 = vmatprep.subr.bf16.mxu0 0
    %719 = vmatpush1.bf16.msra.mxu0 0
    %720 = vmatprep.subr.bf16.mxu0 0
    %721 = vmatpush1.bf16.msra.mxu0 0
    %722 = vmatprep.subr.bf16.mxu0 0
    %723 = vmatpush1.bf16.msra.mxu0 0
    %724 = vmatprep.subr.bf16.mxu0 0
    %725 = vmatpush1.bf16.msra.mxu0 0
    %726 = vmatprep.subr.bf16.mxu0 0
    %727 = vmatpush1.bf16.msra.mxu0 0
    %728 = vmatprep.subr.bf16.mxu0 0
    %729 = vmatpush1.bf16.msra.mxu0 0
    %730 = vmatprep.subr.bf16.mxu0 0
    %731 = vmatpush1.bf16.msra.mxu0 0
    %732 = vmatprep.subr.bf16.mxu0 0
    %733 = vmatpush1.bf16.msra.mxu0 0
    %734 = vmatprep.subr.bf16.mxu0 0
    %735 = vmatpush1.bf16.msra.mxu0 0
    %736 = vmatprep.subr.bf16.mxu0 0
    %737 = vmatpush1.bf16.msra.mxu0 0
    %738 = vmatprep.mubr.bf16.mxu0 0
    %739 = vmatmul.mubr.bf16.gmra.mrb[0].mxu0 %v545
    %v740 = vpop.f32.mrb[0].mxu0
    %v741 = vadd.f32 0.0, %v740
    %v742 = vpop.f32.mrb[0].mxu0
    %v743 = vpop.f32.mrb[0].mxu0
    %v744 = vadd.f32 0.0, %v743
    %v745 = vpop.f32.mrb[0].mxu0
    %746 = vmatprep.mubr.bf16.mxu0 0
    %747 = vmatmul.mubr.bf16.gmra.mrb[0].mxu0 %v548
    %v748 = vpop.f32.mrb[0].mxu0
    %v749 = vadd.f32 0.0, %v748
    %v750 = vpop.f32.mrb[0].mxu0
    %v751 = vpop.f32.mrb[0].mxu0
    %v752 = vadd.f32 0.0, %v751
    %v753 = vpop.f32.mrb[0].mxu0
    %754 = vmatprep.mubr.bf16.mxu0 0
    %755 = vmatmul.mubr.bf16.gmra.mrb[0].mxu0 %v551
    %v756 = vpop.f32.mrb[0].mxu0
    %v757 = vadd.f32 0.0, %v756
    %v758 = vpop.f32.mrb[0].mxu0
    %v759 = vpop.f32.mrb[0].mxu0
    %v760 = vadd.f32 0.0, %v759
    %v761 = vpop.f32.mrb[0].mxu0
    %762 = vmatprep.mubr.bf16.mxu0 0
    %763 = vmatmul.mubr.bf16.gmra.mrb[0].mxu0 %v554
    %v764 = vpop.f32.mrb[0].mxu0
    %v765 = vadd.f32 0.0, %v764
    %v766 = vpop.f32.mrb[0].mxu0
    %v767 = vpop.f32.mrb[0].mxu0
    %v768 = vadd.f32 0.0, %v767
    %v769 = vpop.f32.mrb[0].mxu0
    %770 = vmatprep.mubr.bf16.mxu0 0
    %771 = vmatmul.mubr.bf16.gmra.mrb[0].mxu0 %v557
    %v772 = vpop.f32.mrb[0].mxu0
    %v773 = vadd.f32 0.0, %v772
    %v774 = vpop.f32.mrb[0].mxu0
    %v775 = vpop.f32.mrb[0].mxu0
    %v776 = vadd.f32 0.0, %v775
    %v777 = vpop.f32.mrb[0].mxu0
    %778 = vmatprep.mubr.bf16.mxu0 0
    %779 = vmatmul.mubr.bf16.gmra.mrb[0].mxu0 %v560
    %v780 = vpop.f32.mrb[0].mxu0
    %v781 = vadd.f32 0.0, %v780
    %v782 = vpop.f32.mrb[0].mxu0
    %v783 = vpop.f32.mrb[0].mxu0
    %v784 = vadd.f32 0.0, %v783
    %v785 = vpop.f32.mrb[0].mxu0
    %786 = vmatprep.mubr.bf16.mxu0 0
    %787 = vmatmul.mubr.bf16.gmra.mrb[0].mxu0 %v563
    %v788 = vpop.f32.mrb[0].mxu0
    %v789 = vadd.f32 0.0, %v788
    %v790 = vpop.f32.mrb[0].mxu0
    %v791 = vpop.f32.mrb[0].mxu0
    %v792 = vadd.f32 0.0, %v791
    %v793 = vpop.f32.mrb[0].mxu0
    %794 = vmatprep.mubr.bf16.mxu0 0
    %795 = vmatmul.mubr.bf16.gmra.mrb[0].mxu0 %v566
    %v796 = vpop.f32.mrb[0].mxu0
    %v797 = vadd.f32 0.0, %v796
    %v798 = vpop.f32.mrb[0].mxu0
    %v799 = vpop.f32.mrb[0].mxu0
    %v800 = vadd.f32 0.0, %v799
    %v801 = vpop.f32.mrb[0].mxu0
    %802 = vmatprep.mubr.bf16.mxu0 0
    %803 = vmatmul.mubr.bf16.gmra.mrb[0].mxu0 %v569
    %v804 = vpop.f32.mrb[0].mxu0
    %v805 = vadd.f32 0.0, %v804
    %v806 = vpop.f32.mrb[0].mxu0
    %v807 = vpop.f32.mrb[0].mxu0
    %v808 = vadd.f32 0.0, %v807
    %v809 = vpop.f32.mrb[0].mxu0
    %810 = vmatprep.mubr.bf16.mxu0 0
    %811 = vmatmul.mubr.bf16.gmra.mrb[0].mxu0 %v572
    %v812 = vpop.f32.mrb[0].mxu0
    %v813 = vadd.f32 0.0, %v812
    %v814 = vpop.f32.mrb[0].mxu0
    %v815 = vpop.f32.mrb[0].mxu0
    %v816 = vadd.f32 0.0, %v815
    %v817 = vpop.f32.mrb[0].mxu0
    %818 = vmatprep.mubr.bf16.mxu0 0
    %819 = vmatmul.mubr.bf16.gmra.mrb[0].mxu0 %v575
    %v820 = vpop.f32.mrb[0].mxu0
    %v821 = vadd.f32 0.0, %v820
    %v822 = vpop.f32.mrb[0].mxu0
    %v823 = vpop.f32.mrb[0].mxu0
    %v824 = vadd.f32 0.0, %v823
    %v825 = vpop.f32.mrb[0].mxu0
    %826 = vmatprep.mubr.bf16.mxu0 0
    %827 = vmatmul.mubr.bf16.gmra.mrb[0].mxu0 %v578
    %v828 = vpop.f32.mrb[0].mxu0
    %v829 = vadd.f32 0.0, %v828
    %v830 = vpop.f32.mrb[0].mxu0
    %v831 = vpop.f32.mrb[0].mxu0
    %v832 = vadd.f32 0.0, %v831
    %v833 = vpop.f32.mrb[0].mxu0
    %834 = vmatprep.mubr.bf16.mxu0 0
    %835 = vmatmul.mubr.bf16.gmra.mrb[0].mxu0 %v581
    %v836 = vpop.f32.mrb[0].mxu0
    %v837 = vadd.f32 0.0, %v836
    %v838 = vpop.f32.mrb[0].mxu0
    %v839 = vpop.f32.mrb[0].mxu0
    %v840 = vadd.f32 0.0, %v839
    %v841 = vpop.f32.mrb[0].mxu0
    %842 = vmatprep.mubr.bf16.mxu0 0
    %843 = vmatmul.mubr.bf16.gmra.mrb[0].mxu0 %v584
    %v844 = vpop.f32.mrb[0].mxu0
    %v845 = vadd.f32 0.0, %v844
    %v846 = vpop.f32.mrb[0].mxu0
    %v847 = vpop.f32.mrb[0].mxu0
    %v848 = vadd.f32 0.0, %v847
    %v849 = vpop.f32.mrb[0].mxu0
    %850 = vmatprep.mubr.bf16.mxu0 0
    %851 = vmatmul.mubr.bf16.gmra.mrb[0].mxu0 %v587
    %v852 = vpop.f32.mrb[0].mxu0
    %v853 = vadd.f32 0.0, %v852
    %v854 = vpop.f32.mrb[0].mxu0
    %v855 = vpop.f32.mrb[0].mxu0
    %v856 = vadd.f32 0.0, %v855
    %v857 = vpop.f32.mrb[0].mxu0
    %858 = vmatprep.mubr.bf16.mxu0 0
    %859 = vmatmul.mubr.bf16.gmra.mrb[0].mxu0 %v590
    %v860 = vpop.f32.mrb[0].mxu0
    %v861 = vadd.f32 0.0, %v860
    %v862 = vpop.f32.mrb[0].mxu0
    %v863 = vpop.f32.mrb[0].mxu0
    %v864 = vadd.f32 0.0, %v863
    %v865 = vpop.f32.mrb[0].mxu0
    %866 = vmatprep.mubr.bf16.mxu0 0
    %867 = vmatmul.mubr.bf16.gmra.mrb[0].mxu0 %v593
    %v868 = vpop.f32.mrb[0].mxu0
    %v869 = vadd.f32 0.0, %v868
    %v870 = vpop.f32.mrb[0].mxu0
    %v871 = vpop.f32.mrb[0].mxu0
    %v872 = vadd.f32 0.0, %v871
    %v873 = vpop.f32.mrb[0].mxu0
    %874 = vmatprep.mubr.bf16.mxu0 0
    %875 = vmatmul.mubr.bf16.gmra.mrb[0].mxu0 %v596
    %v876 = vpop.f32.mrb[0].mxu0
    %v877 = vadd.f32 0.0, %v876
    %v878 = vpop.f32.mrb[0].mxu0
    %v879 = vpop.f32.mrb[0].mxu0
    %v880 = vadd.f32 0.0, %v879
    %v881 = vpop.f32.mrb[0].mxu0
    %882 = vmatprep.mubr.bf16.mxu0 0
    %883 = vmatmul.mubr.bf16.gmra.mrb[0].mxu0 %v599
    %v884 = vpop.f32.mrb[0].mxu0
    %v885 = vadd.f32 0.0, %v884
    %v886 = vpop.f32.mrb[0].mxu0
    %v887 = vpop.f32.mrb[0].mxu0
    %v888 = vadd.f32 0.0, %v887
    %v889 = vpop.f32.mrb[0].mxu0
    %890 = vmatprep.mubr.bf16.mxu0 0
    %891 = vmatmul.mubr.bf16.gmra.mrb[0].mxu0 %v602
    %v892 = vpop.f32.mrb[0].mxu0
    %v893 = vadd.f32 0.0, %v892
    %v894 = vpop.f32.mrb[0].mxu0
    %v895 = vpop.f32.mrb[0].mxu0
    %v896 = vadd.f32 0.0, %v895
    %v897 = vpop.f32.mrb[0].mxu0
    %898 = vmatprep.mubr.bf16.mxu0 0
    %899 = vmatmul.mubr.bf16.gmra.mrb[0].mxu0 %v605
    %v900 = vpop.f32.mrb[0].mxu0
    %v901 = vadd.f32 0.0, %v900
    %v902 = vpop.f32.mrb[0].mxu0
    %v903 = vpop.f32.mrb[0].mxu0
    %v904 = vadd.f32 0.0, %v903
    %v905 = vpop.f32.mrb[0].mxu0
    %906 = vmatprep.mubr.bf16.mxu0 0
    %907 = vmatmul.mubr.bf16.gmra.mrb[0].mxu0 %v608
    %v908 = vpop.f32.mrb[0].mxu0
    %v909 = vadd.f32 0.0, %v908
    %v910 = vpop.f32.mrb[0].mxu0
    %v911 = vpop.f32.mrb[0].mxu0
    %v912 = vadd.f32 0.0, %v911
    %v913 = vpop.f32.mrb[0].mxu0
    %914 = vmatprep.mubr.bf16.mxu0 0
    %915 = vmatmul.mubr.bf16.gmra.mrb[0].mxu0 %v611
    %v916 = vpop.f32.mrb[0].mxu0
    %v917 = vadd.f32 0.0, %v916
    %v918 = vpop.f32.mrb[0].mxu0
    %v919 = vpop.f32.mrb[0].mxu0
    %v920 = vadd.f32 0.0, %v919
    %v921 = vpop.f32.mrb[0].mxu0
    %922 = vmatprep.mubr.bf16.mxu0 0
    %923 = vmatmul.mubr.bf16.gmra.mrb[0].mxu0 %v614
    %v924 = vpop.f32.mrb[0].mxu0
    %v925 = vadd.f32 0.0, %v924
    %v926 = vpop.f32.mrb[0].mxu0
    %v927 = vpop.f32.mrb[0].mxu0
    %v928 = vadd.f32 0.0, %v927
    %v929 = vpop.f32.mrb[0].mxu0
    %930 = vmatprep.mubr.bf16.mxu0 0
    %931 = vmatmul.mubr.bf16.gmra.mrb[0].mxu0 %v617
    %v932 = vpop.f32.mrb[0].mxu0
    %v933 = vadd.f32 0.0, %v932
    %v934 = vpop.f32.mrb[0].mxu0
    %v935 = vpop.f32.mrb[0].mxu0
    %v936 = vadd.f32 0.0, %v935
    %v937 = vpop.f32.mrb[0].mxu0
    %938 = vmatprep.mubr.bf16.mxu0 0
    %939 = vmatmul.mubr.bf16.gmra.mrb[0].mxu0 %v620
    %v940 = vpop.f32.mrb[0].mxu0
    %v941 = vadd.f32 0.0, %v940
    %v942 = vpop.f32.mrb[0].mxu0
    %v943 = vpop.f32.mrb[0].mxu0
    %v944 = vadd.f32 0.0, %v943
    %v945 = vpop.f32.mrb[0].mxu0
    %946 = vmatprep.mubr.bf16.mxu0 0
    %947 = vmatmul.mubr.bf16.gmra.mrb[0].mxu0 %v623
    %v948 = vpop.f32.mrb[0].mxu0
    %v949 = vadd.f32 0.0, %v948
    %v950 = vpop.f32.mrb[0].mxu0
    %v951 = vpop.f32.mrb[0].mxu0
    %v952 = vadd.f32 0.0, %v951
    %v953 = vpop.f32.mrb[0].mxu0
    %954 = vmatprep.mubr.bf16.mxu0 0
    %955 = vmatmul.mubr.bf16.gmra.mrb[0].mxu0 %v626
    %v956 = vpop.f32.mrb[0].mxu0
    %v957 = vadd.f32 0.0, %v956
    %v958 = vpop.f32.mrb[0].mxu0
    %v959 = vpop.f32.mrb[0].mxu0
    %v960 = vadd.f32 0.0, %v959
    %v961 = vpop.f32.mrb[0].mxu0
    %962 = vmatprep.mubr.bf16.mxu0 0
    %963 = vmatmul.mubr.bf16.gmra.mrb[0].mxu0 %v629
    %v964 = vpop.f32.mrb[0].mxu0
    %v965 = vadd.f32 0.0, %v964
    %v966 = vpop.f32.mrb[0].mxu0
    %v967 = vpop.f32.mrb[0].mxu0
    %v968 = vadd.f32 0.0, %v967
    %v969 = vpop.f32.mrb[0].mxu0
    %970 = vmatprep.mubr.bf16.mxu0 0
    %971 = vmatmul.mubr.bf16.gmra.mrb[0].mxu0 %v632
    %v972 = vpop.f32.mrb[0].mxu0
    %v973 = vadd.f32 0.0, %v972
    %v974 = vpop.f32.mrb[0].mxu0
    %v975 = vpop.f32.mrb[0].mxu0
    %v976 = vadd.f32 0.0, %v975
    %v977 = vpop.f32.mrb[0].mxu0
    %978 = vmatprep.mubr.bf16.mxu0 0
    %979 = vmatmul.mubr.bf16.gmra.mrb[0].mxu0 %v635
    %v980 = vpop.f32.mrb[0].mxu0
    %v981 = vadd.f32 0.0, %v980
    %v982 = vpop.f32.mrb[0].mxu0
    %v983 = vpop.f32.mrb[0].mxu0
    %v984 = vadd.f32 0.0, %v983
    %v985 = vpop.f32.mrb[0].mxu0
    %986 = vmatprep.mubr.bf16.mxu0 0
    %987 = vmatmul.mubr.bf16.gmra.mrb[0].mxu0 %v638
    %v988 = vpop.f32.mrb[0].mxu0
    %v989 = vadd.f32 0.0, %v988
    %v990 = vpop.f32.mrb[0].mxu0
    %v991 = vpop.f32.mrb[0].mxu0
    %v992 = vadd.f32 0.0, %v991
    %v993 = vpop.f32.mrb[0].mxu0
    %994 = vmatprep.mubr.bf16.mxu0 0
    %995 = vmatmul.mubr.bf16.gmra.mrb[0].mxu0 %v641
    %v996 = vpop.f32.mrb[0].mxu0
    %v997 = vadd.f32 0.0, %v996
    %v998 = vpop.f32.mrb[0].mxu0
    %v999 = vpop.f32.mrb[0].mxu0
    %v1000 = vadd.f32 0.0, %v999
    %v1001 = vpop.f32.mrb[0].mxu0
    %1002 = vmatprep.mubr.bf16.mxu0 0
    %1003 = vmatmul.mubr.bf16.gmra.mrb[0].mxu0 %v644
    %v1004 = vpop.f32.mrb[0].mxu0
    %v1005 = vadd.f32 0.0, %v1004
    %v1006 = vpop.f32.mrb[0].mxu0
    %v1007 = vpop.f32.mrb[0].mxu0
    %v1008 = vadd.f32 0.0, %v1007
    %v1009 = vpop.f32.mrb[0].mxu0
    %1010 = vmatprep.mubr.bf16.mxu0 0
    %1011 = vmatmul.mubr.bf16.gmra.mrb[0].mxu0 %v647
    %v1012 = vpop.f32.mrb[0].mxu0
    %v1013 = vadd.f32 0.0, %v1012
    %v1014 = vpop.f32.mrb[0].mxu0
    %v1015 = vpop.f32.mrb[0].mxu0
    %v1016 = vadd.f32 0.0, %v1015
    %v1017 = vpop.f32.mrb[0].mxu0
    %1018 = vmatprep.mubr.bf16.mxu0 0
    %1019 = vmatmul.mubr.bf16.gmra.mrb[0].mxu0 %v650
    %v1020 = vpop.f32.mrb[0].mxu0
    %v1021 = vadd.f32 0.0, %v1020
    %v1022 = vpop.f32.mrb[0].mxu0
    %v1023 = vpop.f32.mrb[0].mxu0
    %v1024 = vadd.f32 0.0, %v1023
    %v1025 = vpop.f32.mrb[0].mxu0
    %1026 = vmatprep.mubr.bf16.mxu0 0
    %1027 = vmatmul.mubr.bf16.gmra.mrb[0].mxu0 %v653
    %v1028 = vpop.f32.mrb[0].mxu0
    %v1029 = vadd.f32 0.0, %v1028
    %v1030 = vpop.f32.mrb[0].mxu0
    %v1031 = vpop.f32.mrb[0].mxu0
    %v1032 = vadd.f32 0.0, %v1031
    %v1033 = vpop.f32.mrb[0].mxu0
    %1034 = vmatprep.mubr.bf16.mxu0 0
    %1035 = vmatmul.mubr.bf16.gmra.mrb[0].mxu0 %v656
    %v1036 = vpop.f32.mrb[0].mxu0
    %v1037 = vadd.f32 0.0, %v1036
    %v1038 = vpop.f32.mrb[0].mxu0
    %v1039 = vpop.f32.mrb[0].mxu0
    %v1040 = vadd.f32 0.0, %v1039
    %v1041 = vpop.f32.mrb[0].mxu0
    %1042 = vmatprep.mubr.bf16.mxu0 0
    %1043 = vmatmul.mubr.bf16.gmra.mrb[0].mxu0 %v659
    %v1044 = vpop.f32.mrb[0].mxu0
    %v1045 = vadd.f32 0.0, %v1044
    %v1046 = vpop.f32.mrb[0].mxu0
    %v1047 = vpop.f32.mrb[0].mxu0
    %v1048 = vadd.f32 0.0, %v1047
    %v1049 = vpop.f32.mrb[0].mxu0
    %1050 = vmatprep.mubr.bf16.mxu0 0
    %1051 = vmatmul.mubr.bf16.gmra.mrb[0].mxu0 %v662
    %v1052 = vpop.f32.mrb[0].mxu0
    %v1053 = vadd.f32 0.0, %v1052
    %v1054 = vpop.f32.mrb[0].mxu0
    %v1055 = vpop.f32.mrb[0].mxu0
    %v1056 = vadd.f32 0.0, %v1055
    %v1057 = vpop.f32.mrb[0].mxu0
    %1058 = vmatprep.mubr.bf16.mxu0 0
    %1059 = vmatmul.mubr.bf16.gmra.mrb[0].mxu0 %v665
    %v1060 = vpop.f32.mrb[0].mxu0
    %v1061 = vadd.f32 0.0, %v1060
    %v1062 = vpop.f32.mrb[0].mxu0
    %v1063 = vpop.f32.mrb[0].mxu0
    %v1064 = vadd.f32 0.0, %v1063
    %v1065 = vpop.f32.mrb[0].mxu0
    %1066 = vmatprep.mubr.bf16.mxu0 0
    %1067 = vmatmul.mubr.bf16.gmra.mrb[0].mxu0 %v668
    %v1068 = vpop.f32.mrb[0].mxu0
    %v1069 = vadd.f32 0.0, %v1068
    %v1070 = vpop.f32.mrb[0].mxu0
    %v1071 = vpop.f32.mrb[0].mxu0
    %v1072 = vadd.f32 0.0, %v1071
    %v1073 = vpop.f32.mrb[0].mxu0
    %1074 = vmatprep.mubr.bf16.mxu0 0
    %1075 = vmatmul.mubr.bf16.gmra.mrb[0].mxu0 %v671
    %v1076 = vpop.f32.mrb[0].mxu0
    %v1077 = vadd.f32 0.0, %v1076
    %v1078 = vpop.f32.mrb[0].mxu0
    %v1079 = vpop.f32.mrb[0].mxu0
    %v1080 = vadd.f32 0.0, %v1079
    %v1081 = vpop.f32.mrb[0].mxu0
    %1082 = vmatprep.mubr.bf16.mxu0 0
    %1083 = vmatmul.mubr.bf16.gmra.mrb[0].mxu0 %v674
    %v1084 = vpop.f32.mrb[0].mxu0
    %v1085 = vadd.f32 0.0, %v1084
    %v1086 = vpop.f32.mrb[0].mxu0
    %v1087 = vpop.f32.mrb[0].mxu0
    %v1088 = vadd.f32 0.0, %v1087
    %v1089 = vpop.f32.mrb[0].mxu0
    %1090 = vmatprep.mubr.bf16.mxu0 0
    %1091 = vmatmul.mubr.bf16.gmra.mrb[0].mxu0 %v677
    %v1092 = vpop.f32.mrb[0].mxu0
    %v1093 = vadd.f32 0.0, %v1092
    %v1094 = vpop.f32.mrb[0].mxu0
    %v1095 = vpop.f32.mrb[0].mxu0
    %v1096 = vadd.f32 0.0, %v1095
    %v1097 = vpop.f32.mrb[0].mxu0
    %1098 = vmatprep.mubr.bf16.mxu0 0
    %1099 = vmatmul.mubr.bf16.gmra.mrb[0].mxu0 %v680
    %v1100 = vpop.f32.mrb[0].mxu0
    %v1101 = vadd.f32 0.0, %v1100
    %v1102 = vpop.f32.mrb[0].mxu0
    %v1103 = vpop.f32.mrb[0].mxu0
    %v1104 = vadd.f32 0.0, %v1103
    %v1105 = vpop.f32.mrb[0].mxu0
    %1106 = vmatprep.mubr.bf16.mxu0 0
    %1107 = vmatmul.mubr.bf16.gmra.mrb[0].mxu0 %v683
    %v1108 = vpop.f32.mrb[0].mxu0
    %v1109 = vadd.f32 0.0, %v1108
    %v1110 = vpop.f32.mrb[0].mxu0
    %v1111 = vpop.f32.mrb[0].mxu0
    %v1112 = vadd.f32 0.0, %v1111
    %v1113 = vpop.f32.mrb[0].mxu0
    %1114 = vmatprep.mubr.bf16.mxu0 0
    %1115 = vmatmul.mubr.bf16.gmra.mrb[0].mxu0 %v686
    %v1116 = vpop.f32.mrb[0].mxu0
    %v1117 = vadd.f32 0.0, %v1116
    %v1118 = vpop.f32.mrb[0].mxu0
    %v1119 = vpop.f32.mrb[0].mxu0
    %v1120 = vadd.f32 0.0, %v1119
    %v1121 = vpop.f32.mrb[0].mxu0
    %1122 = vmatprep.mubr.bf16.mxu0 0
    %1123 = vmatmul.mubr.bf16.gmra.mrb[0].mxu0 %v689
    %v1124 = vpop.f32.mrb[0].mxu0
    %v1125 = vadd.f32 0.0, %v1124
    %v1126 = vpop.f32.mrb[0].mxu0
    %v1127 = vpop.f32.mrb[0].mxu0
    %v1128 = vadd.f32 0.0, %v1127
    %v1129 = vpop.f32.mrb[0].mxu0
    %1130 = vmatprep.mubr.bf16.mxu0 0
    %1131 = vmatmul.mubr.bf16.gmra.mrb[0].mxu0 %v692
    %v1132 = vpop.f32.mrb[0].mxu0
    %v1133 = vadd.f32 0.0, %v1132
    %v1134 = vpop.f32.mrb[0].mxu0
    %v1135 = vpop.f32.mrb[0].mxu0
    %v1136 = vadd.f32 0.0, %v1135
    %v1137 = vpop.f32.mrb[0].mxu0
    %1138 = vmatprep.mubr.bf16.mxu0 0
    %1139 = vmatmul.mubr.bf16.gmra.mrb[0].mxu0 %v695
    %v1140 = vpop.f32.mrb[0].mxu0
    %v1141 = vadd.f32 0.0, %v1140
    %v1142 = vpop.f32.mrb[0].mxu0
    %v1143 = vpop.f32.mrb[0].mxu0
    %v1144 = vadd.f32 0.0, %v1143
    %v1145 = vpop.f32.mrb[0].mxu0
    %1146 = vmatprep.mubr.bf16.mxu0 0
    %1147 = vmatmul.mubr.bf16.gmra.mrb[0].mxu0 %v698
    %v1148 = vpop.f32.mrb[0].mxu0
    %v1149 = vadd.f32 0.0, %v1148
    %v1150 = vpop.f32.mrb[0].mxu0
    %v1151 = vpop.f32.mrb[0].mxu0
    %v1152 = vadd.f32 0.0, %v1151
    %v1153 = vpop.f32.mrb[0].mxu0
    %1154 = vdwg.mxu0
    %vm1155 = vcmask 523264
    %v1156 = vsel %vm1155, %v741, -inf
    %v1157 = vsel %vm1155, %v744, -inf
    %v1158 = vmax.f32 %v1156, %v1157
    %v1159 = vsel %vm1155, %v749, -inf
    %v1160 = vmax.f32 %v1158, %v1159
    %v1161 = vsel %vm1155, %v752, -inf
    %v1162 = vmax.f32 %v1160, %v1161
    %v1163 = vsel %vm1155, %v757, -inf
    %v1164 = vmax.f32 %v1162, %v1163
    %v1165 = vsel %vm1155, %v760, -inf
    %v1166 = vmax.f32 %v1164, %v1165
    %v1167 = vsel %vm1155, %v765, -inf
    %v1168 = vmax.f32 %v1166, %v1167
    %v1169 = vsel %vm1155, %v768, -inf
    %v1170 = vmax.f32 %v1168, %v1169
    %v1171 = vsel %vm1155, %v773, -inf
    %v1172 = vmax.f32 %v1170, %v1171
    %v1173 = vsel %vm1155, %v776, -inf
    %v1174 = vmax.f32 %v1172, %v1173
    %v1175 = vsel %vm1155, %v781, -inf
    %v1176 = vmax.f32 %v1174, %v1175
    %v1177 = vsel %vm1155, %v784, -inf
    %v1178 = vmax.f32 %v1176, %v1177
    %v1179 = vsel %vm1155, %v789, -inf
    %v1180 = vmax.f32 %v1178, %v1179
    %v1181 = vrot.slane %v1180, 4
    %v1182 = vmax.f32 %v1180, %v1181
    %v1183 = vrot.slane %v1182, 2
    %v1184 = vmax.f32 %v1182, %v1183
    %v1185 = vrot.slane %v1184, 1
    %v1186 = vmax.f32 %v1184, %v1185
    %v1187 = vsel %vm1155, %v792, -inf
    %v1188 = vsel %vm1155, %v797, -inf
    %v1189 = vmax.f32 %v1187, %v1188
    %v1190 = vsel %vm1155, %v800, -inf
    %v1191 = vmax.f32 %v1189, %v1190
    %v1192 = vsel %vm1155, %v805, -inf
    %v1193 = vmax.f32 %v1191, %v1192
    %v1194 = vsel %vm1155, %v808, -inf
    %v1195 = vmax.f32 %v1193, %v1194
    %v1196 = vsel %vm1155, %v813, -inf
    %v1197 = vmax.f32 %v1195, %v1196
    %v1198 = vsel %vm1155, %v816, -inf
    %v1199 = vmax.f32 %v1197, %v1198
    %v1200 = vsel %vm1155, %v821, -inf
    %v1201 = vmax.f32 %v1199, %v1200
    %v1202 = vsel %vm1155, %v824, -inf
    %v1203 = vmax.f32 %v1201, %v1202
    %v1204 = vsel %vm1155, %v829, -inf
    %v1205 = vmax.f32 %v1203, %v1204
    %v1206 = vsel %vm1155, %v832, -inf
    %v1207 = vmax.f32 %v1205, %v1206
    %v1208 = vsel %vm1155, %v837, -inf
    %v1209 = vmax.f32 %v1207, %v1208
    %v1210 = vsel %vm1155, %v840, -inf
    %v1211 = vmax.f32 %v1209, %v1210
    %v1212 = vrot.slane %v1211, 4
    %v1213 = vmax.f32 %v1211, %v1212
    %v1214 = vrot.slane %v1213, 2
    %v1215 = vmax.f32 %v1213, %v1214
    %v1216 = vrot.slane %v1215, 1
    %v1217 = vmax.f32 %v1215, %v1216
    %v1218 = vsel %vm1155, %v845, -inf
    %v1219 = vsel %vm1155, %v848, -inf
    %v1220 = vmax.f32 %v1218, %v1219
    %v1221 = vsel %vm1155, %v853, -inf
    %v1222 = vmax.f32 %v1220, %v1221
    %v1223 = vsel %vm1155, %v856, -inf
    %v1224 = vmax.f32 %v1222, %v1223
    %v1225 = vsel %vm1155, %v861, -inf
    %v1226 = vmax.f32 %v1224, %v1225
    %v1227 = vsel %vm1155, %v864, -inf
    %v1228 = vmax.f32 %v1226, %v1227
    %v1229 = vsel %vm1155, %v869, -inf
    %v1230 = vmax.f32 %v1228, %v1229
    %v1231 = vsel %vm1155, %v872, -inf
    %v1232 = vmax.f32 %v1230, %v1231
    %v1233 = vsel %vm1155, %v877, -inf
    %v1234 = vmax.f32 %v1232, %v1233
    %v1235 = vsel %vm1155, %v880, -inf
    %v1236 = vmax.f32 %v1234, %v1235
    %v1237 = vsel %vm1155, %v885, -inf
    %v1238 = vmax.f32 %v1236, %v1237
    %v1239 = vsel %vm1155, %v888, -inf
    %v1240 = vmax.f32 %v1238, %v1239
    %v1241 = vsel %vm1155, %v893, -inf
    %v1242 = vmax.f32 %v1240, %v1241
    %v1243 = vrot.slane %v1242, 4
    %v1244 = vmax.f32 %v1242, %v1243
    %v1245 = vrot.slane %v1244, 2
    %v1246 = vmax.f32 %v1244, %v1245
    %v1247 = vrot.slane %v1246, 1
    %v1248 = vmax.f32 %v1246, %v1247
    %v1249 = vsel %vm1155, %v896, -inf
    %v1250 = vsel %vm1155, %v901, -inf
    %v1251 = vmax.f32 %v1249, %v1250
    %v1252 = vsel %vm1155, %v904, -inf
    %v1253 = vmax.f32 %v1251, %v1252
    %v1254 = vsel %vm1155, %v909, -inf
    %v1255 = vmax.f32 %v1253, %v1254
    %v1256 = vsel %vm1155, %v912, -inf
    %v1257 = vmax.f32 %v1255, %v1256
    %v1258 = vsel %vm1155, %v917, -inf
    %v1259 = vmax.f32 %v1257, %v1258
    %v1260 = vsel %vm1155, %v920, -inf
    %v1261 = vmax.f32 %v1259, %v1260
    %v1262 = vsel %vm1155, %v925, -inf
    %v1263 = vmax.f32 %v1261, %v1262
    %v1264 = vsel %vm1155, %v928, -inf
    %v1265 = vmax.f32 %v1263, %v1264
    %v1266 = vsel %vm1155, %v933, -inf
    %v1267 = vmax.f32 %v1265, %v1266
    %v1268 = vsel %vm1155, %v936, -inf
    %v1269 = vmax.f32 %v1267, %v1268
    %v1270 = vsel %vm1155, %v941, -inf
    %v1271 = vmax.f32 %v1269, %v1270
    %v1272 = vsel %vm1155, %v944, -inf
    %v1273 = vmax.f32 %v1271, %v1272
    %v1274 = vrot.slane %v1273, 4
    %v1275 = vmax.f32 %v1273, %v1274
    %v1276 = vrot.slane %v1275, 2
    %v1277 = vmax.f32 %v1275, %v1276
    %v1278 = vrot.slane %v1277, 1
    %v1279 = vmax.f32 %v1277, %v1278
    %v1280 = vsel %vm1155, %v949, -inf
    %v1281 = vsel %vm1155, %v952, -inf
    %v1282 = vmax.f32 %v1280, %v1281
    %v1283 = vsel %vm1155, %v957, -inf
    %v1284 = vmax.f32 %v1282, %v1283
    %v1285 = vsel %vm1155, %v960, -inf
    %v1286 = vmax.f32 %v1284, %v1285
    %v1287 = vsel %vm1155, %v965, -inf
    %v1288 = vmax.f32 %v1286, %v1287
    %v1289 = vsel %vm1155, %v968, -inf
    %v1290 = vmax.f32 %v1288, %v1289
    %v1291 = vsel %vm1155, %v973, -inf
    %v1292 = vmax.f32 %v1290, %v1291
    %v1293 = vsel %vm1155, %v976, -inf
    %v1294 = vmax.f32 %v1292, %v1293
    %v1295 = vsel %vm1155, %v981, -inf
    %v1296 = vmax.f32 %v1294, %v1295
    %v1297 = vsel %vm1155, %v984, -inf
    %v1298 = vmax.f32 %v1296, %v1297
    %v1299 = vsel %vm1155, %v989, -inf
    %v1300 = vmax.f32 %v1298, %v1299
    %v1301 = vsel %vm1155, %v992, -inf
    %v1302 = vmax.f32 %v1300, %v1301
    %v1303 = vsel %vm1155, %v997, -inf
    %v1304 = vmax.f32 %v1302, %v1303
    %v1305 = vrot.slane %v1304, 4
    %v1306 = vmax.f32 %v1304, %v1305
    %v1307 = vrot.slane %v1306, 2
    %v1308 = vmax.f32 %v1306, %v1307
    %v1309 = vrot.slane %v1308, 1
    %v1310 = vmax.f32 %v1308, %v1309
    %v1311 = vsel %vm1155, %v1000, -inf
    %v1312 = vsel %vm1155, %v1005, -inf
    %v1313 = vmax.f32 %v1311, %v1312
    %v1314 = vsel %vm1155, %v1008, -inf
    %v1315 = vmax.f32 %v1313, %v1314
    %v1316 = vsel %vm1155, %v1013, -inf
    %v1317 = vmax.f32 %v1315, %v1316
    %v1318 = vsel %vm1155, %v1016, -inf
    %v1319 = vmax.f32 %v1317, %v1318
    %v1320 = vsel %vm1155, %v1021, -inf
    %v1321 = vmax.f32 %v1319, %v1320
    %v1322 = vsel %vm1155, %v1024, -inf
    %v1323 = vmax.f32 %v1321, %v1322
    %v1324 = vsel %vm1155, %v1029, -inf
    %v1325 = vmax.f32 %v1323, %v1324
    %v1326 = vsel %vm1155, %v1032, -inf
    %v1327 = vmax.f32 %v1325, %v1326
    %v1328 = vsel %vm1155, %v1037, -inf
    %v1329 = vmax.f32 %v1327, %v1328
    %v1330 = vsel %vm1155, %v1040, -inf
    %v1331 = vmax.f32 %v1329, %v1330
    %v1332 = vsel %vm1155, %v1045, -inf
    %v1333 = vmax.f32 %v1331, %v1332
    %v1334 = vsel %vm1155, %v1048, -inf
    %v1335 = vmax.f32 %v1333, %v1334
    %v1336 = vrot.slane %v1335, 4
    %v1337 = vmax.f32 %v1335, %v1336
    %v1338 = vrot.slane %v1337, 2
    %v1339 = vmax.f32 %v1337, %v1338
    %v1340 = vrot.slane %v1339, 1
    %v1341 = vmax.f32 %v1339, %v1340
    %v1342 = vsel %vm1155, %v1053, -inf
    %v1343 = vsel %vm1155, %v1056, -inf
    %v1344 = vmax.f32 %v1342, %v1343
    %v1345 = vsel %vm1155, %v1061, -inf
    %v1346 = vmax.f32 %v1344, %v1345
    %v1347 = vsel %vm1155, %v1064, -inf
    %v1348 = vmax.f32 %v1346, %v1347
    %v1349 = vsel %vm1155, %v1069, -inf
    %v1350 = vmax.f32 %v1348, %v1349
    %v1351 = vsel %vm1155, %v1072, -inf
    %v1352 = vmax.f32 %v1350, %v1351
    %v1353 = vsel %vm1155, %v1077, -inf
    %v1354 = vmax.f32 %v1352, %v1353
    %v1355 = vsel %vm1155, %v1080, -inf
    %v1356 = vmax.f32 %v1354, %v1355
    %v1357 = vsel %vm1155, %v1085, -inf
    %v1358 = vmax.f32 %v1356, %v1357
    %v1359 = vsel %vm1155, %v1088, -inf
    %v1360 = vmax.f32 %v1358, %v1359
    %v1361 = vsel %vm1155, %v1093, -inf
    %v1362 = vmax.f32 %v1360, %v1361
    %v1363 = vsel %vm1155, %v1096, -inf
    %v1364 = vmax.f32 %v1362, %v1363
    %v1365 = vsel %vm1155, %v1101, -inf
    %v1366 = vmax.f32 %v1364, %v1365
    %v1367 = vrot.slane %v1366, 4
    %v1368 = vmax.f32 %v1366, %v1367
    %v1369 = vrot.slane %v1368, 2
    %v1370 = vmax.f32 %v1368, %v1369
    %v1371 = vrot.slane %v1370, 1
    %v1372 = vmax.f32 %v1370, %v1371
    %v1373 = vsel %vm1155, %v1104, -inf
    %v1374 = vsel %vm1155, %v1109, -inf
    %v1375 = vmax.f32 %v1373, %v1374
    %v1376 = vsel %vm1155, %v1112, -inf
    %v1377 = vmax.f32 %v1375, %v1376
    %v1378 = vsel %vm1155, %v1117, -inf
    %v1379 = vmax.f32 %v1377, %v1378
    %v1380 = vsel %vm1155, %v1120, -inf
    %v1381 = vmax.f32 %v1379, %v1380
    %v1382 = vsel %vm1155, %v1125, -inf
    %v1383 = vmax.f32 %v1381, %v1382
    %v1384 = vsel %vm1155, %v1128, -inf
    %v1385 = vmax.f32 %v1383, %v1384
    %v1386 = vsel %vm1155, %v1133, -inf
    %v1387 = vmax.f32 %v1385, %v1386
    %v1388 = vsel %vm1155, %v1136, -inf
    %v1389 = vmax.f32 %v1387, %v1388
    %v1390 = vsel %vm1155, %v1141, -inf
    %v1391 = vmax.f32 %v1389, %v1390
    %v1392 = vsel %vm1155, %v1144, -inf
    %v1393 = vmax.f32 %v1391, %v1392
    %v1394 = vsel %vm1155, %v1149, -inf
    %v1395 = vmax.f32 %v1393, %v1394
    %v1396 = vsel %vm1155, %v1152, -inf
    %v1397 = vmax.f32 %v1395, %v1396
    %v1398 = vrot.slane %v1397, 4
    %v1399 = vmax.f32 %v1397, %v1398
    %v1400 = vrot.slane %v1399, 2
    %v1401 = vmax.f32 %v1399, %v1400
    %v1402 = vrot.slane %v1401, 1
    %v1403 = vmax.f32 %v1401, %v1402
    %v1404 = vld [vmem:[#allocation5] sm:$0x1]
    %v1406 = vlaneseq
    %v1407 = vshrl.u32 %v1406, 7
    %v1408 = vsub.s32 0, %v1407
    %v1409 = vrot.slane %v1404, %v1408
    %v1411 = vadd.f32 %v1186, %v1409
    %v1412 = vadd.f32 %v1217, %v1409
    %v1413 = vadd.f32 %v1248, %v1409
    %v1414 = vadd.f32 %v1279, %v1409
    %v1415 = vadd.f32 %v1310, %v1409
    %v1416 = vadd.f32 %v1341, %v1409
    %v1417 = vadd.f32 %v1372, %v1409
    %v1418 = vadd.f32 %v1403, %v1409
    %v1419 = vpack.c.bf16 %v1411, %v1411
    %v1420 = vpack.c.bf16 %v1412, %v1412
    %v1421 = vpack.c.bf16 %v1413, %v1413
    %v1422 = vpack.c.bf16 %v1414, %v1414
    %v1423 = vpack.c.bf16 %v1415, %v1415
    %v1424 = vpack.c.bf16 %v1416, %v1416
    %v1425 = vpack.c.bf16 %v1417, %v1417
    %v1426 = vpack.c.bf16 %v1418, %v1418
    %v1427 = vsel %vm1155, %v741, inf
    %v1428 = vsel %vm1155, %v744, inf
    %v1429 = vmin.f32 %v1427, %v1428
    %v1430 = vsel %vm1155, %v749, inf
    %v1431 = vmin.f32 %v1429, %v1430
    %v1432 = vsel %vm1155, %v752, inf
    %v1433 = vmin.f32 %v1431, %v1432
    %v1434 = vsel %vm1155, %v757, inf
    %v1435 = vmin.f32 %v1433, %v1434
    %v1436 = vsel %vm1155, %v760, inf
    %v1437 = vmin.f32 %v1435, %v1436
    %v1438 = vsel %vm1155, %v765, inf
    %v1439 = vmin.f32 %v1437, %v1438
    %v1440 = vsel %vm1155, %v768, inf
    %v1441 = vmin.f32 %v1439, %v1440
    %v1442 = vsel %vm1155, %v773, inf
    %v1443 = vmin.f32 %v1441, %v1442
    %v1444 = vsel %vm1155, %v776, inf
    %v1445 = vmin.f32 %v1443, %v1444
    %v1446 = vsel %vm1155, %v781, inf
    %v1447 = vmin.f32 %v1445, %v1446
    %v1448 = vsel %vm1155, %v784, inf
    %v1449 = vmin.f32 %v1447, %v1448
    %v1450 = vsel %vm1155, %v789, inf
    %v1451 = vmin.f32 %v1449, %v1450
    %v1452 = vrot.slane %v1451, 4
    %v1453 = vmin.f32 %v1451, %v1452
    %v1454 = vrot.slane %v1453, 2
    %v1455 = vmin.f32 %v1453, %v1454
    %v1456 = vrot.slane %v1455, 1
    %v1457 = vmin.f32 %v1455, %v1456
    %v1458 = vsel %vm1155, %v792, inf
    %v1459 = vsel %vm1155, %v797, inf
    %v1460 = vmin.f32 %v1458, %v1459
    %v1461 = vsel %vm1155, %v800, inf
    %v1462 = vmin.f32 %v1460, %v1461
    %v1463 = vsel %vm1155, %v805, inf
    %v1464 = vmin.f32 %v1462, %v1463
    %v1465 = vsel %vm1155, %v808, inf
    %v1466 = vmin.f32 %v1464, %v1465
    %v1467 = vsel %vm1155, %v813, inf
    %v1468 = vmin.f32 %v1466, %v1467
    %v1469 = vsel %vm1155, %v816, inf
    %v1470 = vmin.f32 %v1468, %v1469
    %v1471 = vsel %vm1155, %v821, inf
    %v1472 = vmin.f32 %v1470, %v1471
    %v1473 = vsel %vm1155, %v824, inf
    %v1474 = vmin.f32 %v1472, %v1473
    %v1475 = vsel %vm1155, %v829, inf
    %v1476 = vmin.f32 %v1474, %v1475
    %v1477 = vsel %vm1155, %v832, inf
    %v1478 = vmin.f32 %v1476, %v1477
    %v1479 = vsel %vm1155, %v837, inf
    %v1480 = vmin.f32 %v1478, %v1479
    %v1481 = vsel %vm1155, %v840, inf
    %v1482 = vmin.f32 %v1480, %v1481
    %v1483 = vrot.slane %v1482, 4
    %v1484 = vmin.f32 %v1482, %v1483
    %v1485 = vrot.slane %v1484, 2
    %v1486 = vmin.f32 %v1484, %v1485
    %v1487 = vrot.slane %v1486, 1
    %v1488 = vmin.f32 %v1486, %v1487
    %v1489 = vsel %vm1155, %v845, inf
    %v1490 = vsel %vm1155, %v848, inf
    %v1491 = vmin.f32 %v1489, %v1490
    %v1492 = vsel %vm1155, %v853, inf
    %v1493 = vmin.f32 %v1491, %v1492
    %v1494 = vsel %vm1155, %v856, inf
    %v1495 = vmin.f32 %v1493, %v1494
    %v1496 = vsel %vm1155, %v861, inf
    %v1497 = vmin.f32 %v1495, %v1496
    %v1498 = vsel %vm1155, %v864, inf
    %v1499 = vmin.f32 %v1497, %v1498
    %v1500 = vsel %vm1155, %v869, inf
    %v1501 = vmin.f32 %v1499, %v1500
    %v1502 = vsel %vm1155, %v872, inf
    %v1503 = vmin.f32 %v1501, %v1502
    %v1504 = vsel %vm1155, %v877, inf
    %v1505 = vmin.f32 %v1503, %v1504
    %v1506 = vsel %vm1155, %v880, inf
    %v1507 = vmin.f32 %v1505, %v1506
    %v1508 = vsel %vm1155, %v885, inf
    %v1509 = vmin.f32 %v1507, %v1508
    %v1510 = vsel %vm1155, %v888, inf
    %v1511 = vmin.f32 %v1509, %v1510
    %v1512 = vsel %vm1155, %v893, inf
    %v1513 = vmin.f32 %v1511, %v1512
    %v1514 = vrot.slane %v1513, 4
    %v1515 = vmin.f32 %v1513, %v1514
    %v1516 = vrot.slane %v1515, 2
    %v1517 = vmin.f32 %v1515, %v1516
    %v1518 = vrot.slane %v1517, 1
    %v1519 = vmin.f32 %v1517, %v1518
    %v1520 = vsel %vm1155, %v896, inf
    %v1521 = vsel %vm1155, %v901, inf
    %v1522 = vmin.f32 %v1520, %v1521
    %v1523 = vsel %vm1155, %v904, inf
    %v1524 = vmin.f32 %v1522, %v1523
    %v1525 = vsel %vm1155, %v909, inf
    %v1526 = vmin.f32 %v1524, %v1525
    %v1527 = vsel %vm1155, %v912, inf
    %v1528 = vmin.f32 %v1526, %v1527
    %v1529 = vsel %vm1155, %v917, inf
    %v1530 = vmin.f32 %v1528, %v1529
    %v1531 = vsel %vm1155, %v920, inf
    %v1532 = vmin.f32 %v1530, %v1531
    %v1533 = vsel %vm1155, %v925, inf
    %v1534 = vmin.f32 %v1532, %v1533
    %v1535 = vsel %vm1155, %v928, inf
    %v1536 = vmin.f32 %v1534, %v1535
    %v1537 = vsel %vm1155, %v933, inf
    %v1538 = vmin.f32 %v1536, %v1537
    %v1539 = vsel %vm1155, %v936, inf
    %v1540 = vmin.f32 %v1538, %v1539
    %v1541 = vsel %vm1155, %v941, inf
    %v1542 = vmin.f32 %v1540, %v1541
    %v1543 = vsel %vm1155, %v944, inf
    %v1544 = vmin.f32 %v1542, %v1543
    %v1545 = vrot.slane %v1544, 4
    %v1546 = vmin.f32 %v1544, %v1545
    %v1547 = vrot.slane %v1546, 2
    %v1548 = vmin.f32 %v1546, %v1547
    %v1549 = vrot.slane %v1548, 1
    %v1550 = vmin.f32 %v1548, %v1549
    %v1551 = vsel %vm1155, %v949, inf
    %v1552 = vsel %vm1155, %v952, inf
    %v1553 = vmin.f32 %v1551, %v1552
    %v1554 = vsel %vm1155, %v957, inf
    %v1555 = vmin.f32 %v1553, %v1554
    %v1556 = vsel %vm1155, %v960, inf
    %v1557 = vmin.f32 %v1555, %v1556
    %v1558 = vsel %vm1155, %v965, inf
    %v1559 = vmin.f32 %v1557, %v1558
    %v1560 = vsel %vm1155, %v968, inf
    %v1561 = vmin.f32 %v1559, %v1560
    %v1562 = vsel %vm1155, %v973, inf
    %v1563 = vmin.f32 %v1561, %v1562
    %v1564 = vsel %vm1155, %v976, inf
    %v1565 = vmin.f32 %v1563, %v1564
    %v1566 = vsel %vm1155, %v981, inf
    %v1567 = vmin.f32 %v1565, %v1566
    %v1568 = vsel %vm1155, %v984, inf
    %v1569 = vmin.f32 %v1567, %v1568
    %v1570 = vsel %vm1155, %v989, inf
    %v1571 = vmin.f32 %v1569, %v1570
    %v1572 = vsel %vm1155, %v992, inf
    %v1573 = vmin.f32 %v1571, %v1572
    %v1574 = vsel %vm1155, %v997, inf
    %v1575 = vmin.f32 %v1573, %v1574
    %v1576 = vrot.slane %v1575, 4
    %v1577 = vmin.f32 %v1575, %v1576
    %v1578 = vrot.slane %v1577, 2
    %v1579 = vmin.f32 %v1577, %v1578
    %v1580 = vrot.slane %v1579, 1
    %v1581 = vmin.f32 %v1579, %v1580
    %v1582 = vsel %vm1155, %v1000, inf
    %v1583 = vsel %vm1155, %v1005, inf
    %v1584 = vmin.f32 %v1582, %v1583
    %v1585 = vsel %vm1155, %v1008, inf
    %v1586 = vmin.f32 %v1584, %v1585
    %v1587 = vsel %vm1155, %v1013, inf
    %v1588 = vmin.f32 %v1586, %v1587
    %v1589 = vsel %vm1155, %v1016, inf
    %v1590 = vmin.f32 %v1588, %v1589
    %v1591 = vsel %vm1155, %v1021, inf
    %v1592 = vmin.f32 %v1590, %v1591
    %v1593 = vsel %vm1155, %v1024, inf
    %v1594 = vmin.f32 %v1592, %v1593
    %v1595 = vsel %vm1155, %v1029, inf
    %v1596 = vmin.f32 %v1594, %v1595
    %v1597 = vsel %vm1155, %v1032, inf
    %v1598 = vmin.f32 %v1596, %v1597
    %v1599 = vsel %vm1155, %v1037, inf
    %v1600 = vmin.f32 %v1598, %v1599
    %v1601 = vsel %vm1155, %v1040, inf
    %v1602 = vmin.f32 %v1600, %v1601
    %v1603 = vsel %vm1155, %v1045, inf
    %v1604 = vmin.f32 %v1602, %v1603
    %v1605 = vsel %vm1155, %v1048, inf
    %v1606 = vmin.f32 %v1604, %v1605
    %v1607 = vrot.slane %v1606, 4
    %v1608 = vmin.f32 %v1606, %v1607
    %v1609 = vrot.slane %v1608, 2
    %v1610 = vmin.f32 %v1608, %v1609
    %v1611 = vrot.slane %v1610, 1
    %v1612 = vmin.f32 %v1610, %v1611
    %v1613 = vsel %vm1155, %v1053, inf
    %v1614 = vsel %vm1155, %v1056, inf
    %v1615 = vmin.f32 %v1613, %v1614
    %v1616 = vsel %vm1155, %v1061, inf
    %v1617 = vmin.f32 %v1615, %v1616
    %v1618 = vsel %vm1155, %v1064, inf
    %v1619 = vmin.f32 %v1617, %v1618
    %v1620 = vsel %vm1155, %v1069, inf
    %v1621 = vmin.f32 %v1619, %v1620
    %v1622 = vsel %vm1155, %v1072, inf
    %v1623 = vmin.f32 %v1621, %v1622
    %v1624 = vsel %vm1155, %v1077, inf
    %v1625 = vmin.f32 %v1623, %v1624
    %v1626 = vsel %vm1155, %v1080, inf
    %v1627 = vmin.f32 %v1625, %v1626
    %v1628 = vsel %vm1155, %v1085, inf
    %v1629 = vmin.f32 %v1627, %v1628
    %v1630 = vsel %vm1155, %v1088, inf
    %v1631 = vmin.f32 %v1629, %v1630
    %v1632 = vsel %vm1155, %v1093, inf
    %v1633 = vmin.f32 %v1631, %v1632
    %v1634 = vsel %vm1155, %v1096, inf
    %v1635 = vmin.f32 %v1633, %v1634
    %v1636 = vsel %vm1155, %v1101, inf
    %v1637 = vmin.f32 %v1635, %v1636
    %v1638 = vrot.slane %v1637, 4
    %v1639 = vmin.f32 %v1637, %v1638
    %v1640 = vrot.slane %v1639, 2
    %v1641 = vmin.f32 %v1639, %v1640
    %v1642 = vrot.slane %v1641, 1
    %v1643 = vmin.f32 %v1641, %v1642
    %v1644 = vsel %vm1155, %v1104, inf
    %v1645 = vsel %vm1155, %v1109, inf
    %v1646 = vmin.f32 %v1644, %v1645
    %v1647 = vsel %vm1155, %v1112, inf
    %v1648 = vmin.f32 %v1646, %v1647
    %v1649 = vsel %vm1155, %v1117, inf
    %v1650 = vmin.f32 %v1648, %v1649
    %v1651 = vsel %vm1155, %v1120, inf
    %v1652 = vmin.f32 %v1650, %v1651
    %v1653 = vsel %vm1155, %v1125, inf
    %v1654 = vmin.f32 %v1652, %v1653
    %v1655 = vsel %vm1155, %v1128, inf
    %v1656 = vmin.f32 %v1654, %v1655
    %v1657 = vsel %vm1155, %v1133, inf
    %v1658 = vmin.f32 %v1656, %v1657
    %v1659 = vsel %vm1155, %v1136, inf
    %v1660 = vmin.f32 %v1658, %v1659
    %v1661 = vsel %vm1155, %v1141, inf
    %v1662 = vmin.f32 %v1660, %v1661
    %v1663 = vsel %vm1155, %v1144, inf
    %v1664 = vmin.f32 %v1662, %v1663
    %v1665 = vsel %vm1155, %v1149, inf
    %v1666 = vmin.f32 %v1664, %v1665
    %v1667 = vsel %vm1155, %v1152, inf
    %v1668 = vmin.f32 %v1666, %v1667
    %v1669 = vrot.slane %v1668, 4
    %v1670 = vmin.f32 %v1668, %v1669
    %v1671 = vrot.slane %v1670, 2
    %v1672 = vmin.f32 %v1670, %v1671
    %v1673 = vrot.slane %v1672, 1
    %v1674 = vmin.f32 %v1672, %v1673
    %v1675 = vadd.f32 %v1457, %v1409
    %v1676 = vadd.f32 %v1488, %v1409
    %v1677 = vadd.f32 %v1519, %v1409
    %v1678 = vadd.f32 %v1550, %v1409
    %v1679 = vadd.f32 %v1581, %v1409
    %v1680 = vadd.f32 %v1612, %v1409
    %v1681 = vadd.f32 %v1643, %v1409
    %v1682 = vadd.f32 %v1674, %v1409
    %v1683 = vpack.c.bf16 %v1675, %v1675
    %v1684 = vpack.c.bf16 %v1676, %v1676
    %v1685 = vpack.c.bf16 %v1677, %v1677
    %v1686 = vpack.c.bf16 %v1678, %v1678
    %v1687 = vpack.c.bf16 %v1679, %v1679
    %v1688 = vpack.c.bf16 %v1680, %v1680
    %v1689 = vpack.c.bf16 %v1681, %v1681
    %v1690 = vpack.c.bf16 %v1682, %v1682
    %v1691 = vld [vmem:[#allocation7] sm:$0xff]
    %v1692 = vld [vmem:[#allocation7 + $0x8] sm:$0xff]
    %v1693 = vld [vmem:[#allocation7 + $0x10] sm:$0xff]
    %v1694 = vld [vmem:[#allocation7 + $0x18] sm:$0xf]
    %v1695 = vld [vmem:[#allocation7 + $0x1c] sm:$0xff]
    %v1696 = vld [vmem:[#allocation7 + $0x24] sm:$0xff]
    %v1697 = vld [vmem:[#allocation7 + $0x2c] sm:$0xff]
    %v1698 = vld [vmem:[#allocation7 + $0x34] sm:$0xf]
    %v1699 = vld [vmem:[#allocation7 + $0x38] sm:$0xff]
    %v1700 = vld [vmem:[#allocation7 + $0x40] sm:$0xff]
    %v1701 = vld [vmem:[#allocation7 + $0x48] sm:$0xff]
    %v1702 = vld [vmem:[#allocation7 + $0x50] sm:$0xf]
    %v1703 = vld [vmem:[#allocation7 + $0x54] sm:$0xff]
    %v1704 = vld [vmem:[#allocation7 + $0x5c] sm:$0xff]
    %v1705 = vld [vmem:[#allocation7 + $0x64] sm:$0xff]
    %v1706 = vld [vmem:[#allocation7 + $0x6c] sm:$0xf]
    %v1707 = vld [vmem:[#allocation7 + $0x70] sm:$0xff]
    %v1708 = vld [vmem:[#allocation7 + $0x78] sm:$0xff]
    %v1709 = vld [vmem:[#allocation7 + $0x80] sm:$0xff]
    %v1710 = vld [vmem:[#allocation7 + $0x88] sm:$0xf]
    %v1711 = vld [vmem:[#allocation7 + $0x8c] sm:$0xff]
    %v1712 = vld [vmem:[#allocation7 + $0x94] sm:$0xff]
    %v1713 = vld [vmem:[#allocation7 + $0x9c] sm:$0xff]
    %v1714 = vld [vmem:[#allocation7 + $0xa4] sm:$0xf]
    %v1715 = vld [vmem:[#allocation7 + $0xa8] sm:$0xff]
    %v1716 = vld [vmem:[#allocation7 + $0xb0] sm:$0xff]
    %v1717 = vld [vmem:[#allocation7 + $0xb8] sm:$0xff]
    %v1718 = vld [vmem:[#allocation7 + $0xc0] sm:$0xf]
    %v1719 = vld [vmem:[#allocation7 + $0xc4] sm:$0xff]
    %v1720 = vld [vmem:[#allocation7 + $0xcc] sm:$0xff]
    %v1721 = vld [vmem:[#allocation7 + $0xd4] sm:$0xff]
    %v1722 = vld [vmem:[#allocation7 + $0xdc] sm:$0xf]
    %v1723 = vld [vmem:[#allocation8] sm:$0xff]
    %v1724 = vld [vmem:[#allocation8 + $0x8] sm:$0xff]
    %v1725 = vld [vmem:[#allocation8 + $0x10] sm:$0xff]
    %v1726 = vld [vmem:[#allocation8 + $0x18] sm:$0xf]
    %v1727 = vld [vmem:[#allocation8 + $0x1c] sm:$0xff]
    %v1728 = vld [vmem:[#allocation8 + $0x24] sm:$0xff]
    %v1729 = vld [vmem:[#allocation8 + $0x2c] sm:$0xff]
    %v1730 = vld [vmem:[#allocation8 + $0x34] sm:$0xf]
    %v1731 = vld [vmem:[#allocation8 + $0x38] sm:$0xff]
    %v1732 = vld [vmem:[#allocation8 + $0x40] sm:$0xff]
    %v1733 = vld [vmem:[#allocation8 + $0x48] sm:$0xff]
    %v1734 = vld [vmem:[#allocation8 + $0x50] sm:$0xf]
    %v1735 = vld [vmem:[#allocation8 + $0x54] sm:$0xff]
    %v1736 = vld [vmem:[#allocation8 + $0x5c] sm:$0xff]
    %v1737 = vld [vmem:[#allocation8 + $0x64] sm:$0xff]
    %v1738 = vld [vmem:[#allocation8 + $0x6c] sm:$0xf]
    %v1739 = vld [vmem:[#allocation8 + $0x70] sm:$0xff]
    %v1740 = vld [vmem:[#allocation8 + $0x78] sm:$0xff]
    %v1741 = vld [vmem:[#allocation8 + $0x80] sm:$0xff]
    %v1742 = vld [vmem:[#allocation8 + $0x88] sm:$0xf]
    %v1743 = vld [vmem:[#allocation8 + $0x8c] sm:$0xff]
    %v1744 = vld [vmem:[#allocation8 + $0x94] sm:$0xff]
    %v1745 = vld [vmem:[#allocation8 + $0x9c] sm:$0xff]
    %v1746 = vld [vmem:[#allocation8 + $0xa4] sm:$0xf]
    %v1747 = vld [vmem:[#allocation8 + $0xa8] sm:$0xff]
    %v1748 = vld [vmem:[#allocation8 + $0xb0] sm:$0xff]
    %v1749 = vld [vmem:[#allocation8 + $0xb8] sm:$0xff]
    %v1750 = vld [vmem:[#allocation8 + $0xc0] sm:$0xf]
    %v1751 = vld [vmem:[#allocation8 + $0xc4] sm:$0xff]
    %v1752 = vld [vmem:[#allocation8 + $0xcc] sm:$0xff]
    %v1753 = vld [vmem:[#allocation8 + $0xd4] sm:$0xff]
    %v1754 = vld [vmem:[#allocation8 + $0xdc] sm:$0xf]
    %v1763 = vunpack.c.l.b16 %v1683
    %v1764 = vunpack.c.l.b16 %v1684
    %v1765 = vunpack.c.l.b16 %v1685
    %v1766 = vunpack.c.l.b16 %v1686
    %v1767 = vunpack.c.l.b16 %v1687
    %v1768 = vunpack.c.l.b16 %v1688
    %v1769 = vunpack.c.l.b16 %v1689
    %v1770 = vunpack.c.l.b16 %v1690
    %v1771 = vrot.slane %v1764, 7
    %vm1772 = vcmask 1041409
    %v1773 = vsel %vm1772, %v1771, %v1763
    %v1774 = vrot.slane %v1765, 6
    %vm1775 = vcmask 1042434
    %v1776 = vsel %vm1775, %v1774, %v1773
    %v1777 = vrot.slane %v1766, 5
    %vm1778 = vcmask 1043459
    %v1779 = vsel %vm1778, %v1777, %v1776
    %v1780 = vrot.slane %v1767, 4
    %vm1781 = vcmask 1044484
    %v1782 = vsel %vm1781, %v1780, %v1779
    %v1783 = vrot.slane %v1768, 3
    %vm1784 = vcmask 1045509
    %v1785 = vsel %vm1784, %v1783, %v1782
    %v1786 = vrot.slane %v1769, 2
    %vm1787 = vcmask 1046534
    %v1788 = vsel %vm1787, %v1786, %v1785
    %v1789 = vrot.slane %v1770, 1
    %vm1790 = vcmask 1047559
    %v1791 = vsel %vm1790, %v1789, %v1788
    %v1792 = vpack.c.b16 %v1791, %v1791
    %v1825 = vunpack.c.l.b16 %v1723
    %v1826 = vunpack.c.h.b16 %v1723
    %v1827 = vunpack.c.l.b16 %v1724
    %v1828 = vunpack.c.h.b16 %v1724
    %v1829 = vunpack.c.l.b16 %v1725
    %v1830 = vunpack.c.h.b16 %v1725
    %v1831 = vunpack.c.l.b16 %v1726
    %v1832 = vunpack.c.l.b16 %v1727
    %v1833 = vunpack.c.h.b16 %v1727
    %v1834 = vunpack.c.l.b16 %v1728
    %v1835 = vunpack.c.h.b16 %v1728
    %v1836 = vunpack.c.l.b16 %v1729
    %v1837 = vunpack.c.h.b16 %v1729
    %v1838 = vunpack.c.l.b16 %v1730
    %v1839 = vunpack.c.l.b16 %v1731
    %v1840 = vunpack.c.h.b16 %v1731
    %v1841 = vunpack.c.l.b16 %v1732
    %v1842 = vunpack.c.h.b16 %v1732
    %v1843 = vunpack.c.l.b16 %v1733
    %v1844 = vunpack.c.h.b16 %v1733
    %v1845 = vunpack.c.l.b16 %v1734
    %v1846 = vunpack.c.l.b16 %v1735
    %v1847 = vunpack.c.h.b16 %v1735
    %v1848 = vunpack.c.l.b16 %v1736
    %v1849 = vunpack.c.h.b16 %v1736
    %v1850 = vunpack.c.l.b16 %v1737
    %v1851 = vunpack.c.h.b16 %v1737
    %v1852 = vunpack.c.l.b16 %v1738
    %v1853 = vunpack.c.l.b16 %v1739
    %v1854 = vunpack.c.h.b16 %v1739
    %v1855 = vunpack.c.l.b16 %v1740
    %v1856 = vunpack.c.h.b16 %v1740
    %v1857 = vunpack.c.l.b16 %v1741
    %v1858 = vunpack.c.h.b16 %v1741
    %v1859 = vunpack.c.l.b16 %v1742
    %v1860 = vunpack.c.l.b16 %v1743
    %v1861 = vunpack.c.h.b16 %v1743
    %v1862 = vunpack.c.l.b16 %v1744
    %v1863 = vunpack.c.h.b16 %v1744
    %v1864 = vunpack.c.l.b16 %v1745
    %v1865 = vunpack.c.h.b16 %v1745
    %v1866 = vunpack.c.l.b16 %v1746
    %v1867 = vunpack.c.l.b16 %v1747
    %v1868 = vunpack.c.h.b16 %v1747
    %v1869 = vunpack.c.l.b16 %v1748
    %v1870 = vunpack.c.h.b16 %v1748
    %v1871 = vunpack.c.l.b16 %v1749
    %v1872 = vunpack.c.h.b16 %v1749
    %v1873 = vunpack.c.l.b16 %v1750
    %v1874 = vunpack.c.l.b16 %v1751
    %v1875 = vunpack.c.h.b16 %v1751
    %v1876 = vunpack.c.l.b16 %v1752
    %v1877 = vunpack.c.h.b16 %v1752
    %v1878 = vunpack.c.l.b16 %v1753
    %v1879 = vunpack.c.h.b16 %v1753
    %v1880 = vunpack.c.l.b16 %v1754
    %v1881 = vpack.c.b16 %v1832, %v1825
    %v1882 = vpack.c.b16 %v1833, %v1826
    %v1883 = vpack.c.b16 %v1834, %v1827
    %v1884 = vpack.c.b16 %v1835, %v1828
    %v1885 = vpack.c.b16 %v1836, %v1829
    %v1886 = vpack.c.b16 %v1837, %v1830
    %v1887 = vpack.c.b16 %v1838, %v1831
    %v1888 = vpack.c.b16 %v1846, %v1839
    %v1889 = vpack.c.b16 %v1847, %v1840
    %v1890 = vpack.c.b16 %v1848, %v1841
    %v1891 = vpack.c.b16 %v1849, %v1842
    %v1892 = vpack.c.b16 %v1850, %v1843
    %v1893 = vpack.c.b16 %v1851, %v1844
    %v1894 = vpack.c.b16 %v1852, %v1845
    %v1895 = vpack.c.b16 %v1860, %v1853
    %v1896 = vpack.c.b16 %v1861, %v1854
    %v1897 = vpack.c.b16 %v1862, %v1855
    %v1898 = vpack.c.b16 %v1863, %v1856
    %v1899 = vpack.c.b16 %v1864, %v1857
    %v1900 = vpack.c.b16 %v1865, %v1858
    %v1901 = vpack.c.b16 %v1866, %v1859
    %v1902 = vpack.c.b16 %v1874, %v1867
    %v1903 = vpack.c.b16 %v1875, %v1868
    %v1904 = vpack.c.b16 %v1876, %v1869
    %v1905 = vpack.c.b16 %v1877, %v1870
    %v1906 = vpack.c.b16 %v1878, %v1871
    %v1907 = vpack.c.b16 %v1879, %v1872
    %v1908 = vpack.c.b16 %v1880, %v1873
    %v1938 = vsel %vm1155, %v1792, 0
    %1940 = vmatprep.subr.bf16.mxu0 %v1882
    %1941 = vmatpush1.bf16.msra.mxu0 %v1881
    %1942 = vmatprep.subr.bf16.mxu0 %v1889
    %1943 = vmatpush1.bf16.msra.mxu0 %v1888
    %1944 = vmatprep.subr.bf16.mxu0 %v1896
    %1945 = vmatpush1.bf16.msra.mxu0 %v1895
    %1946 = vmatprep.subr.bf16.mxu0 %v1903
    %1947 = vmatpush1.bf16.msra.mxu0 %v1902
    %1948 = vmatprep.subr.bf16.mxu0 0
    %1949 = vmatpush1.bf16.msra.mxu0 0
    %1950 = vmatprep.subr.bf16.mxu0 0
    %1951 = vmatpush1.bf16.msra.mxu0 0
    %1952 = vmatprep.subr.bf16.mxu0 0
    %1953 = vmatpush1.bf16.msra.mxu0 0
    %1954 = vmatprep.subr.bf16.mxu0 0
    %1955 = vmatpush1.bf16.msra.mxu0 0
    %1956 = vmatprep.subr.bf16.mxu0 0
    %1957 = vmatpush1.bf16.msra.mxu0 0
    %1958 = vmatprep.subr.bf16.mxu0 0
    %1959 = vmatpush1.bf16.msra.mxu0 0
    %1960 = vmatprep.subr.bf16.mxu0 0
    %1961 = vmatpush1.bf16.msra.mxu0 0
    %1962 = vmatprep.subr.bf16.mxu0 0
    %1963 = vmatpush1.bf16.msra.mxu0 0
    %1964 = vmatprep.subr.bf16.mxu0 0
    %1965 = vmatpush1.bf16.msra.mxu0 0
    %1966 = vmatprep.subr.bf16.mxu0 0
    %1967 = vmatpush1.bf16.msra.mxu0 0
    %1968 = vmatprep.subr.bf16.mxu0 0
    %1969 = vmatpush1.bf16.msra.mxu0 0
    %1970 = vmatprep.subr.bf16.mxu0 0
    %1971 = vmatpush1.bf16.msra.mxu0 0
    %1972 = vmatprep.mubr.bf16.mxu0 0
    %1973 = vmatmul.mubr.bf16.gmra.mrb[0].mxu0 %v1938
    %v1974 = vpop.f32.mrb[0].mxu0
    %v1975 = vadd.f32 0.0, %v1974
    %v1976 = vpop.f32.mrb[0].mxu0
    %v1977 = vadd.f32 0.0, %v1976
    %v1978 = vpop.f32.mrb[0].mxu0
    %v1979 = vpop.f32.mrb[0].mxu0
    %1980 = vdwg.mxu0
    %1981 = vmatprep.subr.bf16.mxu0 %v1884
    %1982 = vmatpush1.bf16.msra.mxu0 %v1883
    %1983 = vmatprep.subr.bf16.mxu0 %v1891
    %1984 = vmatpush1.bf16.msra.mxu0 %v1890
    %1985 = vmatprep.subr.bf16.mxu0 %v1898
    %1986 = vmatpush1.bf16.msra.mxu0 %v1897
    %1987 = vmatprep.subr.bf16.mxu0 %v1905
    %1988 = vmatpush1.bf16.msra.mxu0 %v1904
    %1989 = vmatprep.subr.bf16.mxu0 0
    %1990 = vmatpush1.bf16.msra.mxu0 0
    %1991 = vmatprep.subr.bf16.mxu0 0
    %1992 = vmatpush1.bf16.msra.mxu0 0
    %1993 = vmatprep.subr.bf16.mxu0 0
    %1994 = vmatpush1.bf16.msra.mxu0 0
    %1995 = vmatprep.subr.bf16.mxu0 0
    %1996 = vmatpush1.bf16.msra.mxu0 0
    %1997 = vmatprep.subr.bf16.mxu0 0
    %1998 = vmatpush1.bf16.msra.mxu0 0
    %1999 = vmatprep.subr.bf16.mxu0 0
    %2000 = vmatpush1.bf16.msra.mxu0 0
    %2001 = vmatprep.subr.bf16.mxu0 0
    %2002 = vmatpush1.bf16.msra.mxu0 0
    %2003 = vmatprep.subr.bf16.mxu0 0
    %2004 = vmatpush1.bf16.msra.mxu0 0
    %2005 = vmatprep.subr.bf16.mxu0 0
    %2006 = vmatpush1.bf16.msra.mxu0 0
    %2007 = vmatprep.subr.bf16.mxu0 0
    %2008 = vmatpush1.bf16.msra.mxu0 0
    %2009 = vmatprep.subr.bf16.mxu0 0
    %2010 = vmatpush1.bf16.msra.mxu0 0
    %2011 = vmatprep.subr.bf16.mxu0 0
    %2012 = vmatpush1.bf16.msra.mxu0 0
    %2013 = vmatprep.mubr.bf16.mxu0 0
    %2014 = vmatmul.mubr.bf16.gmra.mrb[0].mxu0 %v1938
    %v2015 = vpop.f32.mrb[0].mxu0
    %v2016 = vadd.f32 0.0, %v2015
    %v2017 = vpop.f32.mrb[0].mxu0
    %v2018 = vadd.f32 0.0, %v2017
    %v2019 = vpop.f32.mrb[0].mxu0
    %v2020 = vpop.f32.mrb[0].mxu0
    %2021 = vdwg.mxu0
    %2022 = vmatprep.subr.bf16.mxu0 %v1886
    %2023 = vmatpush1.bf16.msra.mxu0 %v1885
    %2024 = vmatprep.subr.bf16.mxu0 %v1893
    %2025 = vmatpush1.bf16.msra.mxu0 %v1892
    %2026 = vmatprep.subr.bf16.mxu0 %v1900
    %2027 = vmatpush1.bf16.msra.mxu0 %v1899
    %2028 = vmatprep.subr.bf16.mxu0 %v1907
    %2029 = vmatpush1.bf16.msra.mxu0 %v1906
    %2030 = vmatprep.subr.bf16.mxu0 0
    %2031 = vmatpush1.bf16.msra.mxu0 0
    %2032 = vmatprep.subr.bf16.mxu0 0
    %2033 = vmatpush1.bf16.msra.mxu0 0
    %2034 = vmatprep.subr.bf16.mxu0 0
    %2035 = vmatpush1.bf16.msra.mxu0 0
    %2036 = vmatprep.subr.bf16.mxu0 0
    %2037 = vmatpush1.bf16.msra.mxu0 0
    %2038 = vmatprep.subr.bf16.mxu0 0
    %2039 = vmatpush1.bf16.msra.mxu0 0
    %2040 = vmatprep.subr.bf16.mxu0 0
    %2041 = vmatpush1.bf16.msra.mxu0 0
    %2042 = vmatprep.subr.bf16.mxu0 0
    %2043 = vmatpush1.bf16.msra.mxu0 0
    %2044 = vmatprep.subr.bf16.mxu0 0
    %2045 = vmatpush1.bf16.msra.mxu0 0
    %2046 = vmatprep.subr.bf16.mxu0 0
    %2047 = vmatpush1.bf16.msra.mxu0 0
    %2048 = vmatprep.subr.bf16.mxu0 0
    %2049 = vmatpush1.bf16.msra.mxu0 0
    %2050 = vmatprep.subr.bf16.mxu0 0
    %2051 = vmatpush1.bf16.msra.mxu0 0
    %2052 = vmatprep.subr.bf16.mxu0 0
    %2053 = vmatpush1.bf16.msra.mxu0 0
    %2054 = vmatprep.mubr.bf16.mxu0 0
    %2055 = vmatmul.mubr.bf16.gmra.mrb[0].mxu0 %v1938
    %v2056 = vpop.f32.mrb[0].mxu0
    %v2057 = vadd.f32 0.0, %v2056
    %v2058 = vpop.f32.mrb[0].mxu0
    %v2059 = vadd.f32 0.0, %v2058
    %v2060 = vpop.f32.mrb[0].mxu0
    %v2061 = vpop.f32.mrb[0].mxu0
    %2062 = vdwg.mxu0
    %2063 = vmatprep.subr.bf16.mxu0 0
    %2064 = vmatpush1.bf16.msra.mxu0 %v1887
    %2065 = vmatprep.subr.bf16.mxu0 0
    %2066 = vmatpush1.bf16.msra.mxu0 %v1894
    %2067 = vmatprep.subr.bf16.mxu0 0
    %2068 = vmatpush1.bf16.msra.mxu0 %v1901
    %2069 = vmatprep.subr.bf16.mxu0 0
    %2070 = vmatpush1.bf16.msra.mxu0 %v1908
    %2071 = vmatprep.subr.bf16.mxu0 0
    %2072 = vmatpush1.bf16.msra.mxu0 0
    %2073 = vmatprep.subr.bf16.mxu0 0
    %2074 = vmatpush1.bf16.msra.mxu0 0
    %2075 = vmatprep.subr.bf16.mxu0 0
    %2076 = vmatpush1.bf16.msra.mxu0 0
    %2077 = vmatprep.subr.bf16.mxu0 0
    %2078 = vmatpush1.bf16.msra.mxu0 0
    %2079 = vmatprep.subr.bf16.mxu0 0
    %2080 = vmatpush1.bf16.msra.mxu0 0
    %2081 = vmatprep.subr.bf16.mxu0 0
    %2082 = vmatpush1.bf16.msra.mxu0 0
    %2083 = vmatprep.subr.bf16.mxu0 0
    %2084 = vmatpush1.bf16.msra.mxu0 0
    %2085 = vmatprep.subr.bf16.mxu0 0
    %2086 = vmatpush1.bf16.msra.mxu0 0
    %2087 = vmatprep.subr.bf16.mxu0 0
    %2088 = vmatpush1.bf16.msra.mxu0 0
    %2089 = vmatprep.subr.bf16.mxu0 0
    %2090 = vmatpush1.bf16.msra.mxu0 0
    %2091 = vmatprep.subr.bf16.mxu0 0
    %2092 = vmatpush1.bf16.msra.mxu0 0
    %2093 = vmatprep.subr.bf16.mxu0 0
    %2094 = vmatpush1.bf16.msra.mxu0 0
    %2095 = vmatprep.mubr.bf16.mxu0 0
    %2096 = vmatmul.mubr.bf16.gmra.mrb[0].mxu0 %v1938
    %v2097 = vpop.f32.mrb[0].mxu0
    %v2098 = vadd.f32 0.0, %v2097
    %v2099 = vpop.f32.mrb[0].mxu0
    %v2100 = vpop.f32.mrb[0].mxu0
    %v2101 = vpop.f32.mrb[0].mxu0
    %2102 = vdwg.mxu0
    %v2111 = vunpack.c.l.b16 %v1419
    %v2112 = vunpack.c.l.b16 %v1420
    %v2113 = vunpack.c.l.b16 %v1421
    %v2114 = vunpack.c.l.b16 %v1422
    %v2115 = vunpack.c.l.b16 %v1423
    %v2116 = vunpack.c.l.b16 %v1424
    %v2117 = vunpack.c.l.b16 %v1425
    %v2118 = vunpack.c.l.b16 %v1426
    %v2119 = vrot.slane %v2112, 7
    %v2120 = vsel %vm1772, %v2119, %v2111
    %v2121 = vrot.slane %v2113, 6
    %v2122 = vsel %vm1775, %v2121, %v2120
    %v2123 = vrot.slane %v2114, 5
    %v2124 = vsel %vm1778, %v2123, %v2122
    %v2125 = vrot.slane %v2115, 4
    %v2126 = vsel %vm1781, %v2125, %v2124
    %v2127 = vrot.slane %v2116, 3
    %v2128 = vsel %vm1784, %v2127, %v2126
    %v2129 = vrot.slane %v2117, 2
    %v2130 = vsel %vm1787, %v2129, %v2128
    %v2131 = vrot.slane %v2118, 1
    %v2132 = vsel %vm1790, %v2131, %v2130
    %v2133 = vpack.c.b16 %v2132, %v2132
    %v2166 = vunpack.c.l.b16 %v1691
    %v2167 = vunpack.c.h.b16 %v1691
    %v2168 = vunpack.c.l.b16 %v1692
    %v2169 = vunpack.c.h.b16 %v1692
    %v2170 = vunpack.c.l.b16 %v1693
    %v2171 = vunpack.c.h.b16 %v1693
    %v2172 = vunpack.c.l.b16 %v1694
    %v2173 = vunpack.c.l.b16 %v1695
    %v2174 = vunpack.c.h.b16 %v1695
    %v2175 = vunpack.c.l.b16 %v1696
    %v2176 = vunpack.c.h.b16 %v1696
    %v2177 = vunpack.c.l.b16 %v1697
    %v2178 = vunpack.c.h.b16 %v1697
    %v2179 = vunpack.c.l.b16 %v1698
    %v2180 = vunpack.c.l.b16 %v1699
    %v2181 = vunpack.c.h.b16 %v1699
    %v2182 = vunpack.c.l.b16 %v1700
    %v2183 = vunpack.c.h.b16 %v1700
    %v2184 = vunpack.c.l.b16 %v1701
    %v2185 = vunpack.c.h.b16 %v1701
    %v2186 = vunpack.c.l.b16 %v1702
    %v2187 = vunpack.c.l.b16 %v1703
    %v2188 = vunpack.c.h.b16 %v1703
    %v2189 = vunpack.c.l.b16 %v1704
    %v2190 = vunpack.c.h.b16 %v1704
    %v2191 = vunpack.c.l.b16 %v1705
    %v2192 = vunpack.c.h.b16 %v1705
    %v2193 = vunpack.c.l.b16 %v1706
    %v2194 = vunpack.c.l.b16 %v1707
    %v2195 = vunpack.c.h.b16 %v1707
    %v2196 = vunpack.c.l.b16 %v1708
    %v2197 = vunpack.c.h.b16 %v1708
    %v2198 = vunpack.c.l.b16 %v1709
    %v2199 = vunpack.c.h.b16 %v1709
    %v2200 = vunpack.c.l.b16 %v1710
    %v2201 = vunpack.c.l.b16 %v1711
    %v2202 = vunpack.c.h.b16 %v1711
    %v2203 = vunpack.c.l.b16 %v1712
    %v2204 = vunpack.c.h.b16 %v1712
    %v2205 = vunpack.c.l.b16 %v1713
    %v2206 = vunpack.c.h.b16 %v1713
    %v2207 = vunpack.c.l.b16 %v1714
    %v2208 = vunpack.c.l.b16 %v1715
    %v2209 = vunpack.c.h.b16 %v1715
    %v2210 = vunpack.c.l.b16 %v1716
    %v2211 = vunpack.c.h.b16 %v1716
    %v2212 = vunpack.c.l.b16 %v1717
    %v2213 = vunpack.c.h.b16 %v1717
    %v2214 = vunpack.c.l.b16 %v1718
    %v2215 = vunpack.c.l.b16 %v1719
    %v2216 = vunpack.c.h.b16 %v1719
    %v2217 = vunpack.c.l.b16 %v1720
    %v2218 = vunpack.c.h.b16 %v1720
    %v2219 = vunpack.c.l.b16 %v1721
    %v2220 = vunpack.c.h.b16 %v1721
    %v2221 = vunpack.c.l.b16 %v1722
    %v2222 = vpack.c.b16 %v2173, %v2166
    %v2223 = vpack.c.b16 %v2174, %v2167
    %v2224 = vpack.c.b16 %v2175, %v2168
    %v2225 = vpack.c.b16 %v2176, %v2169
    %v2226 = vpack.c.b16 %v2177, %v2170
    %v2227 = vpack.c.b16 %v2178, %v2171
    %v2228 = vpack.c.b16 %v2179, %v2172
    %v2229 = vpack.c.b16 %v2187, %v2180
    %v2230 = vpack.c.b16 %v2188, %v2181
    %v2231 = vpack.c.b16 %v2189, %v2182
    %v2232 = vpack.c.b16 %v2190, %v2183
    %v2233 = vpack.c.b16 %v2191, %v2184
    %v2234 = vpack.c.b16 %v2192, %v2185
    %v2235 = vpack.c.b16 %v2193, %v2186
    %v2236 = vpack.c.b16 %v2201, %v2194
    %v2237 = vpack.c.b16 %v2202, %v2195
    %v2238 = vpack.c.b16 %v2203, %v2196
    %v2239 = vpack.c.b16 %v2204, %v2197
    %v2240 = vpack.c.b16 %v2205, %v2198
    %v2241 = vpack.c.b16 %v2206, %v2199
    %v2242 = vpack.c.b16 %v2207, %v2200
    %v2243 = vpack.c.b16 %v2215, %v2208
    %v2244 = vpack.c.b16 %v2216, %v2209
    %v2245 = vpack.c.b16 %v2217, %v2210
    %v2246 = vpack.c.b16 %v2218, %v2211
    %v2247 = vpack.c.b16 %v2219, %v2212
    %v2248 = vpack.c.b16 %v2220, %v2213
    %v2249 = vpack.c.b16 %v2221, %v2214
    %v2279 = vsel %vm1155, %v2133, 0
    %2281 = vmatprep.subr.bf16.mxu0 %v2223
    %2282 = vmatpush1.bf16.msra.mxu0 %v2222
    %2283 = vmatprep.subr.bf16.mxu0 %v2230
    %2284 = vmatpush1.bf16.msra.mxu0 %v2229
    %2285 = vmatprep.subr.bf16.mxu0 %v2237
    %2286 = vmatpush1.bf16.msra.mxu0 %v2236
    %2287 = vmatprep.subr.bf16.mxu0 %v2244
    %2288 = vmatpush1.bf16.msra.mxu0 %v2243
    %2289 = vmatprep.subr.bf16.mxu0 0
    %2290 = vmatpush1.bf16.msra.mxu0 0
    %2291 = vmatprep.subr.bf16.mxu0 0
    %2292 = vmatpush1.bf16.msra.mxu0 0
    %2293 = vmatprep.subr.bf16.mxu0 0
    %2294 = vmatpush1.bf16.msra.mxu0 0
    %2295 = vmatprep.subr.bf16.mxu0 0
    %2296 = vmatpush1.bf16.msra.mxu0 0
    %2297 = vmatprep.subr.bf16.mxu0 0
    %2298 = vmatpush1.bf16.msra.mxu0 0
    %2299 = vmatprep.subr.bf16.mxu0 0
    %2300 = vmatpush1.bf16.msra.mxu0 0
    %2301 = vmatprep.subr.bf16.mxu0 0
    %2302 = vmatpush1.bf16.msra.mxu0 0
    %2303 = vmatprep.subr.bf16.mxu0 0
    %2304 = vmatpush1.bf16.msra.mxu0 0
    %2305 = vmatprep.subr.bf16.mxu0 0
    %2306 = vmatpush1.bf16.msra.mxu0 0
    %2307 = vmatprep.subr.bf16.mxu0 0
    %2308 = vmatpush1.bf16.msra.mxu0 0
    %2309 = vmatprep.subr.bf16.mxu0 0
    %2310 = vmatpush1.bf16.msra.mxu0 0
    %2311 = vmatprep.subr.bf16.mxu0 0
    %2312 = vmatpush1.bf16.msra.mxu0 0
    %2313 = vmatprep.mubr.bf16.mxu0 0
    %2314 = vmatmul.mubr.bf16.gmra.mrb[0].mxu0 %v2279
    %v2315 = vpop.f32.mrb[0].mxu0
    %v2316 = vadd.f32 %v1975, %v2315
    %v2317 = vpop.f32.mrb[0].mxu0
    %v2318 = vadd.f32 %v1977, %v2317
    %v2319 = vpop.f32.mrb[0].mxu0
    %v2320 = vpop.f32.mrb[0].mxu0
    %2321 = vdwg.mxu0
    %2322 = vmatprep.subr.bf16.mxu0 %v2225
    %2323 = vmatpush1.bf16.msra.mxu0 %v2224
    %2324 = vmatprep.subr.bf16.mxu0 %v2232
    %2325 = vmatpush1.bf16.msra.mxu0 %v2231
    %2326 = vmatprep.subr.bf16.mxu0 %v2239
    %2327 = vmatpush1.bf16.msra.mxu0 %v2238
    %2328 = vmatprep.subr.bf16.mxu0 %v2246
    %2329 = vmatpush1.bf16.msra.mxu0 %v2245
    %2330 = vmatprep.subr.bf16.mxu0 0
    %2331 = vmatpush1.bf16.msra.mxu0 0
    %2332 = vmatprep.subr.bf16.mxu0 0
    %2333 = vmatpush1.bf16.msra.mxu0 0
    %2334 = vmatprep.subr.bf16.mxu0 0
    %2335 = vmatpush1.bf16.msra.mxu0 0
    %2336 = vmatprep.subr.bf16.mxu0 0
    %2337 = vmatpush1.bf16.msra.mxu0 0
    %2338 = vmatprep.subr.bf16.mxu0 0
    %2339 = vmatpush1.bf16.msra.mxu0 0
    %2340 = vmatprep.subr.bf16.mxu0 0
    %2341 = vmatpush1.bf16.msra.mxu0 0
    %2342 = vmatprep.subr.bf16.mxu0 0
    %2343 = vmatpush1.bf16.msra.mxu0 0
    %2344 = vmatprep.subr.bf16.mxu0 0
    %2345 = vmatpush1.bf16.msra.mxu0 0
    %2346 = vmatprep.subr.bf16.mxu0 0
    %2347 = vmatpush1.bf16.msra.mxu0 0
    %2348 = vmatprep.subr.bf16.mxu0 0
    %2349 = vmatpush1.bf16.msra.mxu0 0
    %2350 = vmatprep.subr.bf16.mxu0 0
    %2351 = vmatpush1.bf16.msra.mxu0 0
    %2352 = vmatprep.subr.bf16.mxu0 0
    %2353 = vmatpush1.bf16.msra.mxu0 0
    %2354 = vmatprep.mubr.bf16.mxu0 0
    %2355 = vmatmul.mubr.bf16.gmra.mrb[0].mxu0 %v2279
    %v2356 = vpop.f32.mrb[0].mxu0
    %v2357 = vadd.f32 %v2016, %v2356
    %v2358 = vpop.f32.mrb[0].mxu0
    %v2359 = vadd.f32 %v2018, %v2358
    %v2360 = vpop.f32.mrb[0].mxu0
    %v2361 = vpop.f32.mrb[0].mxu0
    %2362 = vdwg.mxu0
    %2363 = vmatprep.subr.bf16.mxu0 %v2227
    %2364 = vmatpush1.bf16.msra.mxu0 %v2226
    %2365 = vmatprep.subr.bf16.mxu0 %v2234
    %2366 = vmatpush1.bf16.msra.mxu0 %v2233
    %2367 = vmatprep.subr.bf16.mxu0 %v2241
    %2368 = vmatpush1.bf16.msra.mxu0 %v2240
    %2369 = vmatprep.subr.bf16.mxu0 %v2248
    %2370 = vmatpush1.bf16.msra.mxu0 %v2247
    %2371 = vmatprep.subr.bf16.mxu0 0
    %2372 = vmatpush1.bf16.msra.mxu0 0
    %2373 = vmatprep.subr.bf16.mxu0 0
    %2374 = vmatpush1.bf16.msra.mxu0 0
    %2375 = vmatprep.subr.bf16.mxu0 0
    %2376 = vmatpush1.bf16.msra.mxu0 0
    %2377 = vmatprep.subr.bf16.mxu0 0
    %2378 = vmatpush1.bf16.msra.mxu0 0
    %2379 = vmatprep.subr.bf16.mxu0 0
    %2380 = vmatpush1.bf16.msra.mxu0 0
    %2381 = vmatprep.subr.bf16.mxu0 0
    %2382 = vmatpush1.bf16.msra.mxu0 0
    %2383 = vmatprep.subr.bf16.mxu0 0
    %2384 = vmatpush1.bf16.msra.mxu0 0
    %2385 = vmatprep.subr.bf16.mxu0 0
    %2386 = vmatpush1.bf16.msra.mxu0 0
    %2387 = vmatprep.subr.bf16.mxu0 0
    %2388 = vmatpush1.bf16.msra.mxu0 0
    %2389 = vmatprep.subr.bf16.mxu0 0
    %2390 = vmatpush1.bf16.msra.mxu0 0
    %2391 = vmatprep.subr.bf16.mxu0 0
    %2392 = vmatpush1.bf16.msra.mxu0 0
    %2393 = vmatprep.subr.bf16.mxu0 0
    %2394 = vmatpush1.bf16.msra.mxu0 0
    %2395 = vmatprep.mubr.bf16.mxu0 0
    %2396 = vmatmul.mubr.bf16.gmra.mrb[0].mxu0 %v2279
    %v2397 = vpop.f32.mrb[0].mxu0
    %v2398 = vadd.f32 %v2057, %v2397
    %v2399 = vpop.f32.mrb[0].mxu0
    %v2400 = vadd.f32 %v2059, %v2399
    %v2401 = vpop.f32.mrb[0].mxu0
    %v2402 = vpop.f32.mrb[0].mxu0
    %2403 = vdwg.mxu0
    %2404 = vmatprep.subr.bf16.mxu0 0
    %2405 = vmatpush1.bf16.msra.mxu0 %v2228
    %2406 = vmatprep.subr.bf16.mxu0 0
    %2407 = vmatpush1.bf16.msra.mxu0 %v2235
    %2408 = vmatprep.subr.bf16.mxu0 0
    %2409 = vmatpush1.bf16.msra.mxu0 %v2242
    %2410 = vmatprep.subr.bf16.mxu0 0
    %2411 = vmatpush1.bf16.msra.mxu0 %v2249
    %2412 = vmatprep.subr.bf16.mxu0 0
    %2413 = vmatpush1.bf16.msra.mxu0 0
    %2414 = vmatprep.subr.bf16.mxu0 0
    %2415 = vmatpush1.bf16.msra.mxu0 0
    %2416 = vmatprep.subr.bf16.mxu0 0
    %2417 = vmatpush1.bf16.msra.mxu0 0
    %2418 = vmatprep.subr.bf16.mxu0 0
    %2419 = vmatpush1.bf16.msra.mxu0 0
    %2420 = vmatprep.subr.bf16.mxu0 0
    %2421 = vmatpush1.bf16.msra.mxu0 0
    %2422 = vmatprep.subr.bf16.mxu0 0
    %2423 = vmatpush1.bf16.msra.mxu0 0
    %2424 = vmatprep.subr.bf16.mxu0 0
    %2425 = vmatpush1.bf16.msra.mxu0 0
    %2426 = vmatprep.subr.bf16.mxu0 0
    %2427 = vmatpush1.bf16.msra.mxu0 0
    %2428 = vmatprep.subr.bf16.mxu0 0
    %2429 = vmatpush1.bf16.msra.mxu0 0
    %2430 = vmatprep.subr.bf16.mxu0 0
    %2431 = vmatpush1.bf16.msra.mxu0 0
    %2432 = vmatprep.subr.bf16.mxu0 0
    %2433 = vmatpush1.bf16.msra.mxu0 0
    %2434 = vmatprep.subr.bf16.mxu0 0
    %2435 = vmatpush1.bf16.msra.mxu0 0
    %2436 = vmatprep.mubr.bf16.mxu0 0
    %2437 = vmatmul.mubr.bf16.gmra.mrb[0].mxu0 %v2279
    %v2438 = vpop.f32.mrb[0].mxu0
    %v2439 = vadd.f32 %v2098, %v2438
    %v2440 = vpop.f32.mrb[0].mxu0
    %v2441 = vpop.f32.mrb[0].mxu0
    %v2442 = vpop.f32.mrb[0].mxu0
    %2443 = vdwg.mxu0
    %v2444 = vld [vmem:[#allocation10] sm:$0x7f]
    %v2446 = vlaneseq
    %v2447 = vshrl.u32 %v2446, 7
    %v2448 = vsub.s32 0, %v2447
    %v2449 = vrot.slane %v2444, %v2448
    %v2450 = vlaneseq
    %v2451 = vshrl.u32 %v2450, 7
    %v2452 = vsub.s32 1, %v2451
    %v2453 = vrot.slane %v2444, %v2452
    %v2454 = vlaneseq
    %v2455 = vshrl.u32 %v2454, 7
    %v2456 = vsub.s32 2, %v2455
    %v2457 = vrot.slane %v2444, %v2456
    %v2458 = vlaneseq
    %v2459 = vshrl.u32 %v2458, 7
    %v2460 = vsub.s32 3, %v2459
    %v2461 = vrot.slane %v2444, %v2460
    %v2462 = vlaneseq
    %v2463 = vshrl.u32 %v2462, 7
    %v2464 = vsub.s32 4, %v2463
    %v2465 = vrot.slane %v2444, %v2464
    %v2466 = vlaneseq
    %v2467 = vshrl.u32 %v2466, 7
    %v2468 = vsub.s32 5, %v2467
    %v2469 = vrot.slane %v2444, %v2468
    %v2470 = vlaneseq
    %v2471 = vshrl.u32 %v2470, 7
    %v2472 = vsub.s32 6, %v2471
    %v2473 = vrot.slane %v2444, %v2472
    %v2481 = vadd.f32 %v2316, %v2449
    %v2482 = vadd.f32 %v2318, %v2453
    %v2483 = vadd.f32 %v2357, %v2457
    %v2484 = vadd.f32 %v2359, %v2461
    %v2485 = vadd.f32 %v2398, %v2465
    %v2486 = vadd.f32 %v2400, %v2469
    %v2487 = vadd.f32 %v2439, %v2473
    %v2488 = vmax.f32 %v2481, 0.0
    %v2489 = vmax.f32 %v2482, 0.0
    %v2490 = vmax.f32 %v2483, 0.0
    %v2491 = vmax.f32 %v2484, 0.0
    %v2492 = vmax.f32 %v2485, 0.0
    %v2493 = vmax.f32 %v2486, 0.0
    %v2494 = vmax.f32 %v2487, 0.0
    %v2495 = vpack.c.bf16 %v2488, %v2488
    %v2496 = vpack.c.bf16 %v2489, %v2489
    %v2497 = vpack.c.bf16 %v2490, %v2490
    %v2498 = vpack.c.bf16 %v2491, %v2491
    %v2499 = vpack.c.bf16 %v2492, %v2492
    %v2500 = vpack.c.bf16 %v2493, %v2493
    %v2501 = vpack.c.bf16 %v2494, %v2494
    %v2502 = vld [vmem:[#allocation11] sm:$0xff]
    %v2503 = vld [vmem:[#allocation11 + $0x8] sm:$0xff]
    %v2504 = vld [vmem:[#allocation11 + $0x10] sm:$0xff]
    %v2505 = vld [vmem:[#allocation11 + $0x18] sm:$0xf]
    %v2506 = vld [vmem:[#allocation11 + $0x1c] sm:$0xff]
    %v2507 = vld [vmem:[#allocation11 + $0x24] sm:$0xff]
    %v2508 = vld [vmem:[#allocation11 + $0x2c] sm:$0xff]
    %v2509 = vld [vmem:[#allocation11 + $0x34] sm:$0xf]
    %v2510 = vld [vmem:[#allocation11 + $0x38] sm:$0xff]
    %v2511 = vld [vmem:[#allocation11 + $0x40] sm:$0xff]
    %v2512 = vld [vmem:[#allocation11 + $0x48] sm:$0xff]
    %v2513 = vld [vmem:[#allocation11 + $0x50] sm:$0xf]
    %v2514 = vld [vmem:[#allocation11 + $0x54] sm:$0xff]
    %v2515 = vld [vmem:[#allocation11 + $0x5c] sm:$0xff]
    %v2516 = vld [vmem:[#allocation11 + $0x64] sm:$0xff]
    %v2517 = vld [vmem:[#allocation11 + $0x6c] sm:$0xf]
    %v2518 = vld [vmem:[#allocation11 + $0x70] sm:$0xff]
    %v2519 = vld [vmem:[#allocation11 + $0x78] sm:$0xff]
    %v2520 = vld [vmem:[#allocation11 + $0x80] sm:$0xff]
    %v2521 = vld [vmem:[#allocation11 + $0x88] sm:$0xf]
    %v2522 = vld [vmem:[#allocation11 + $0x8c] sm:$0xff]
    %v2523 = vld [vmem:[#allocation11 + $0x94] sm:$0xff]
    %v2524 = vld [vmem:[#allocation11 + $0x9c] sm:$0xff]
    %v2525 = vld [vmem:[#allocation11 + $0xa4] sm:$0xf]
    %v2526 = vld [vmem:[#allocation11 + $0xa8] sm:$0xff]
    %v2527 = vld [vmem:[#allocation11 + $0xb0] sm:$0xff]
    %v2528 = vld [vmem:[#allocation11 + $0xb8] sm:$0xff]
    %v2529 = vld [vmem:[#allocation11 + $0xc0] sm:$0xf]
    %v2530 = vld [vmem:[#allocation11 + $0xc4] sm:$0xff]
    %v2531 = vld [vmem:[#allocation11 + $0xcc] sm:$0xff]
    %v2532 = vld [vmem:[#allocation11 + $0xd4] sm:$0xff]
    %v2533 = vld [vmem:[#allocation11 + $0xdc] sm:$0xf]
    %v2534 = vld [vmem:[#allocation11 + $0xe0] sm:$0xff]
    %v2535 = vld [vmem:[#allocation11 + $0xe8] sm:$0xff]
    %v2536 = vld [vmem:[#allocation11 + $0xf0] sm:$0xff]
    %v2537 = vld [vmem:[#allocation11 + $0xf8] sm:$0xf]
    %v2538 = vld [vmem:[#allocation11 + $0xfc] sm:$0xff]
    %v2539 = vld [vmem:[#allocation11 + $0x104] sm:$0xff]
    %v2540 = vld [vmem:[#allocation11 + $0x10c] sm:$0xff]
    %v2541 = vld [vmem:[#allocation11 + $0x114] sm:$0xf]
    %v2542 = vld [vmem:[#allocation11 + $0x118] sm:$0xff]
    %v2543 = vld [vmem:[#allocation11 + $0x120] sm:$0xff]
    %v2544 = vld [vmem:[#allocation11 + $0x128] sm:$0xff]
    %v2545 = vld [vmem:[#allocation11 + $0x130] sm:$0xf]
    %v2546 = vld [vmem:[#allocation11 + $0x134] sm:$0xff]
    %v2547 = vld [vmem:[#allocation11 + $0x13c] sm:$0xff]
    %v2548 = vld [vmem:[#allocation11 + $0x144] sm:$0xff]
    %v2549 = vld [vmem:[#allocation11 + $0x14c] sm:$0xf]
    %v2550 = vld [vmem:[#allocation11 + $0x150] sm:$0xff]
    %v2551 = vld [vmem:[#allocation11 + $0x158] sm:$0xff]
    %v2552 = vld [vmem:[#allocation11 + $0x160] sm:$0xff]
    %v2553 = vld [vmem:[#allocation11 + $0x168] sm:$0xf]
    %v2554 = vld [vmem:[#allocation11 + $0x16c] sm:$0xff]
    %v2555 = vld [vmem:[#allocation11 + $0x174] sm:$0xff]
    %v2556 = vld [vmem:[#allocation11 + $0x17c] sm:$0xff]
    %v2557 = vld [vmem:[#allocation11 + $0x184] sm:$0xf]
    %v2558 = vld [vmem:[#allocation11 + $0x188] sm:$0xff]
    %v2559 = vld [vmem:[#allocation11 + $0x190] sm:$0xff]
    %v2560 = vld [vmem:[#allocation11 + $0x198] sm:$0xff]
    %v2561 = vld [vmem:[#allocation11 + $0x1a0] sm:$0xf]
    %v2562 = vld [vmem:[#allocation11 + $0x1a4] sm:$0xff]
    %v2563 = vld [vmem:[#allocation11 + $0x1ac] sm:$0xff]
    %v2564 = vld [vmem:[#allocation11 + $0x1b4] sm:$0xff]
    %v2565 = vld [vmem:[#allocation11 + $0x1bc] sm:$0xf]
    %v2566 = vld [vmem:[#allocation11 + $0x1c0] sm:$0xff]
    %v2567 = vld [vmem:[#allocation11 + $0x1c8] sm:$0xff]
    %v2568 = vld [vmem:[#allocation11 + $0x1d0] sm:$0xff]
    %v2569 = vld [vmem:[#allocation11 + $0x1d8] sm:$0xf]
    %v2570 = vld [vmem:[#allocation11 + $0x1dc] sm:$0xff]
    %v2571 = vld [vmem:[#allocation11 + $0x1e4] sm:$0xff]
    %v2572 = vld [vmem:[#allocation11 + $0x1ec] sm:$0xff]
    %v2573 = vld [vmem:[#allocation11 + $0x1f4] sm:$0xf]
    %v2574 = vld [vmem:[#allocation11 + $0x1f8] sm:$0xff]
    %v2575 = vld [vmem:[#allocation11 + $0x200] sm:$0xff]
    %v2576 = vld [vmem:[#allocation11 + $0x208] sm:$0xff]
    %v2577 = vld [vmem:[#allocation11 + $0x210] sm:$0xf]
    %v2578 = vld [vmem:[#allocation11 + $0x214] sm:$0xff]
    %v2579 = vld [vmem:[#allocation11 + $0x21c] sm:$0xff]
    %v2580 = vld [vmem:[#allocation11 + $0x224] sm:$0xff]
    %v2581 = vld [vmem:[#allocation11 + $0x22c] sm:$0xf]
    %v2582 = vld [vmem:[#allocation11 + $0x230] sm:$0xff]
    %v2583 = vld [vmem:[#allocation11 + $0x238] sm:$0xff]
    %v2584 = vld [vmem:[#allocation11 + $0x240] sm:$0xff]
    %v2585 = vld [vmem:[#allocation11 + $0x248] sm:$0xf]
    %v2586 = vld [vmem:[#allocation11 + $0x24c] sm:$0xff]
    %v2587 = vld [vmem:[#allocation11 + $0x254] sm:$0xff]
    %v2588 = vld [vmem:[#allocation11 + $0x25c] sm:$0xff]
    %v2589 = vld [vmem:[#allocation11 + $0x264] sm:$0xf]
    %v2590 = vld [vmem:[#allocation11 + $0x268] sm:$0xff]
    %v2591 = vld [vmem:[#allocation11 + $0x270] sm:$0xff]
    %v2592 = vld [vmem:[#allocation11 + $0x278] sm:$0xff]
    %v2593 = vld [vmem:[#allocation11 + $0x280] sm:$0xf]
    %v2594 = vld [vmem:[#allocation11 + $0x284] sm:$0xff]
    %v2595 = vld [vmem:[#allocation11 + $0x28c] sm:$0xff]
    %v2596 = vld [vmem:[#allocation11 + $0x294] sm:$0xff]
    %v2597 = vld [vmem:[#allocation11 + $0x29c] sm:$0xf]
    %v2598 = vld [vmem:[#allocation11 + $0x2a0] sm:$0xff]
    %v2599 = vld [vmem:[#allocation11 + $0x2a8] sm:$0xff]
    %v2600 = vld [vmem:[#allocation11 + $0x2b0] sm:$0xff]
    %v2601 = vld [vmem:[#allocation11 + $0x2b8] sm:$0xf]
    %v2602 = vld [vmem:[#allocation11 + $0x2bc] sm:$0xff]
    %v2603 = vld [vmem:[#allocation11 + $0x2c4] sm:$0xff]
    %v2604 = vld [vmem:[#allocation11 + $0x2cc] sm:$0xff]
    %v2605 = vld [vmem:[#allocation11 + $0x2d4] sm:$0xf]
    %v2606 = vld [vmem:[#allocation11 + $0x2d8] sm:$0xff]
    %v2607 = vld [vmem:[#allocation11 + $0x2e0] sm:$0xff]
    %v2608 = vld [vmem:[#allocation11 + $0x2e8] sm:$0xff]
    %v2609 = vld [vmem:[#allocation11 + $0x2f0] sm:$0xf]
    %v2610 = vld [vmem:[#allocation11 + $0x2f4] sm:$0xff]
    %v2611 = vld [vmem:[#allocation11 + $0x2fc] sm:$0xff]
    %v2612 = vld [vmem:[#allocation11 + $0x304] sm:$0xff]
    %v2613 = vld [vmem:[#allocation11 + $0x30c] sm:$0xf]
    %v2614 = vld [vmem:[#allocation11 + $0x310] sm:$0xff]
    %v2615 = vld [vmem:[#allocation11 + $0x318] sm:$0xff]
    %v2616 = vld [vmem:[#allocation11 + $0x320] sm:$0xff]
    %v2617 = vld [vmem:[#allocation11 + $0x328] sm:$0xf]
    %v2618 = vld [vmem:[#allocation11 + $0x32c] sm:$0xff]
    %v2619 = vld [vmem:[#allocation11 + $0x334] sm:$0xff]
    %v2620 = vld [vmem:[#allocation11 + $0x33c] sm:$0xff]
    %v2621 = vld [vmem:[#allocation11 + $0x344] sm:$0xf]
    %v2622 = vld [vmem:[#allocation11 + $0x348] sm:$0xff]
    %v2623 = vld [vmem:[#allocation11 + $0x350] sm:$0xff]
    %v2624 = vld [vmem:[#allocation11 + $0x358] sm:$0xff]
    %v2625 = vld [vmem:[#allocation11 + $0x360] sm:$0xf]
    %v2626 = vld [vmem:[#allocation11 + $0x364] sm:$0xff]
    %v2627 = vld [vmem:[#allocation11 + $0x36c] sm:$0xff]
    %v2628 = vld [vmem:[#allocation11 + $0x374] sm:$0xff]
    %v2629 = vld [vmem:[#allocation11 + $0x37c] sm:$0xf]
    %v2630 = vld [vmem:[#allocation11 + $0x380] sm:$0xff]
    %v2631 = vld [vmem:[#allocation11 + $0x388] sm:$0xff]
    %v2632 = vld [vmem:[#allocation11 + $0x390] sm:$0xff]
    %v2633 = vld [vmem:[#allocation11 + $0x398] sm:$0xf]
    %v2634 = vld [vmem:[#allocation11 + $0x39c] sm:$0xff]
    %v2635 = vld [vmem:[#allocation11 + $0x3a4] sm:$0xff]
    %v2636 = vld [vmem:[#allocation11 + $0x3ac] sm:$0xff]
    %v2637 = vld [vmem:[#allocation11 + $0x3b4] sm:$0xf]
    %v2638 = vld [vmem:[#allocation11 + $0x3b8] sm:$0xff]
    %v2639 = vld [vmem:[#allocation11 + $0x3c0] sm:$0xff]
    %v2640 = vld [vmem:[#allocation11 + $0x3c8] sm:$0xff]
    %v2641 = vld [vmem:[#allocation11 + $0x3d0] sm:$0xf]
    %v2642 = vld [vmem:[#allocation11 + $0x3d4] sm:$0xff]
    %v2643 = vld [vmem:[#allocation11 + $0x3dc] sm:$0xff]
    %v2644 = vld [vmem:[#allocation11 + $0x3e4] sm:$0xff]
    %v2645 = vld [vmem:[#allocation11 + $0x3ec] sm:$0xf]
    %v2646 = vld [vmem:[#allocation11 + $0x3f0] sm:$0xff]
    %v2647 = vld [vmem:[#allocation11 + $0x3f8] sm:$0xff]
    %v2648 = vld [vmem:[#allocation11 + $0x400] sm:$0xff]
    %v2649 = vld [vmem:[#allocation11 + $0x408] sm:$0xf]
    %v2650 = vld [vmem:[#allocation11 + $0x40c] sm:$0xff]
    %v2651 = vld [vmem:[#allocation11 + $0x414] sm:$0xff]
    %v2652 = vld [vmem:[#allocation11 + $0x41c] sm:$0xff]
    %v2653 = vld [vmem:[#allocation11 + $0x424] sm:$0xf]
    %v2654 = vld [vmem:[#allocation11 + $0x428] sm:$0xff]
    %v2655 = vld [vmem:[#allocation11 + $0x430] sm:$0xff]
    %v2656 = vld [vmem:[#allocation11 + $0x438] sm:$0xff]
    %v2657 = vld [vmem:[#allocation11 + $0x440] sm:$0xf]
    %v2658 = vld [vmem:[#allocation11 + $0x444] sm:$0xff]
    %v2659 = vld [vmem:[#allocation11 + $0x44c] sm:$0xff]
    %v2660 = vld [vmem:[#allocation11 + $0x454] sm:$0xff]
    %v2661 = vld [vmem:[#allocation11 + $0x45c] sm:$0xf]
    %v2662 = vld [vmem:[#allocation11 + $0x460] sm:$0xff]
    %v2663 = vld [vmem:[#allocation11 + $0x468] sm:$0xff]
    %v2664 = vld [vmem:[#allocation11 + $0x470] sm:$0xff]
    %v2665 = vld [vmem:[#allocation11 + $0x478] sm:$0xf]
    %v2666 = vld [vmem:[#allocation11 + $0x47c] sm:$0xff]
    %v2667 = vld [vmem:[#allocation11 + $0x484] sm:$0xff]
    %v2668 = vld [vmem:[#allocation11 + $0x48c] sm:$0xff]
    %v2669 = vld [vmem:[#allocation11 + $0x494] sm:$0xf]
    %v2670 = vld [vmem:[#allocation11 + $0x498] sm:$0xff]
    %v2671 = vld [vmem:[#allocation11 + $0x4a0] sm:$0xff]
    %v2672 = vld [vmem:[#allocation11 + $0x4a8] sm:$0xff]
    %v2673 = vld [vmem:[#allocation11 + $0x4b0] sm:$0xf]
    %v2674 = vld [vmem:[#allocation11 + $0x4b4] sm:$0xff]
    %v2675 = vld [vmem:[#allocation11 + $0x4bc] sm:$0xff]
    %v2676 = vld [vmem:[#allocation11 + $0x4c4] sm:$0xff]
    %v2677 = vld [vmem:[#allocation11 + $0x4cc] sm:$0xf]
    %v2678 = vld [vmem:[#allocation11 + $0x4d0] sm:$0xff]
    %v2679 = vld [vmem:[#allocation11 + $0x4d8] sm:$0xff]
    %v2680 = vld [vmem:[#allocation11 + $0x4e0] sm:$0xff]
    %v2681 = vld [vmem:[#allocation11 + $0x4e8] sm:$0xf]
    %v2682 = vld [vmem:[#allocation11 + $0x4ec] sm:$0xff]
    %v2683 = vld [vmem:[#allocation11 + $0x4f4] sm:$0xff]
    %v2684 = vld [vmem:[#allocation11 + $0x4fc] sm:$0xff]
    %v2685 = vld [vmem:[#allocation11 + $0x504] sm:$0xf]
    %v2686 = vld [vmem:[#allocation11 + $0x508] sm:$0xff]
    %v2687 = vld [vmem:[#allocation11 + $0x510] sm:$0xff]
    %v2688 = vld [vmem:[#allocation11 + $0x518] sm:$0xff]
    %v2689 = vld [vmem:[#allocation11 + $0x520] sm:$0xf]
    %v2690 = vld [vmem:[#allocation11 + $0x524] sm:$0xff]
    %v2691 = vld [vmem:[#allocation11 + $0x52c] sm:$0xff]
    %v2692 = vld [vmem:[#allocation11 + $0x534] sm:$0xff]
    %v2693 = vld [vmem:[#allocation11 + $0x53c] sm:$0xf]
    %v2694 = vld [vmem:[#allocation11 + $0x540] sm:$0xff]
    %v2695 = vld [vmem:[#allocation11 + $0x548] sm:$0xff]
    %v2696 = vld [vmem:[#allocation11 + $0x550] sm:$0xff]
    %v2697 = vld [vmem:[#allocation11 + $0x558] sm:$0xf]
    %v2698 = vld [vmem:[#allocation11 + $0x55c] sm:$0xff]
    %v2699 = vld [vmem:[#allocation11 + $0x564] sm:$0xff]
    %v2700 = vld [vmem:[#allocation11 + $0x56c] sm:$0xff]
    %v2701 = vld [vmem:[#allocation11 + $0x574] sm:$0xf]
    %v2702 = vld [vmem:[#allocation11 + $0x578] sm:$0xff]
    %v2703 = vld [vmem:[#allocation11 + $0x580] sm:$0xff]
    %v2704 = vld [vmem:[#allocation11 + $0x588] sm:$0xff]
    %v2705 = vld [vmem:[#allocation11 + $0x590] sm:$0xf]
    %v2706 = vld [vmem:[#allocation11 + $0x594] sm:$0xff]
    %v2707 = vld [vmem:[#allocation11 + $0x59c] sm:$0xff]
    %v2708 = vld [vmem:[#allocation11 + $0x5a4] sm:$0xff]
    %v2709 = vld [vmem:[#allocation11 + $0x5ac] sm:$0xf]
    %v2710 = vld [vmem:[#allocation11 + $0x5b0] sm:$0xff]
    %v2711 = vld [vmem:[#allocation11 + $0x5b8] sm:$0xff]
    %v2712 = vld [vmem:[#allocation11 + $0x5c0] sm:$0xff]
    %v2713 = vld [vmem:[#allocation11 + $0x5c8] sm:$0xf]
    %v2714 = vld [vmem:[#allocation11 + $0x5cc] sm:$0xff]
    %v2715 = vld [vmem:[#allocation11 + $0x5d4] sm:$0xff]
    %v2716 = vld [vmem:[#allocation11 + $0x5dc] sm:$0xff]
    %v2717 = vld [vmem:[#allocation11 + $0x5e4] sm:$0xf]
    %v2718 = vld [vmem:[#allocation11 + $0x5e8] sm:$0xff]
    %v2719 = vld [vmem:[#allocation11 + $0x5f0] sm:$0xff]
    %v2720 = vld [vmem:[#allocation11 + $0x5f8] sm:$0xff]
    %v2721 = vld [vmem:[#allocation11 + $0x600] sm:$0xf]
    %v2722 = vld [vmem:[#allocation11 + $0x604] sm:$0xff]
    %v2723 = vld [vmem:[#allocation11 + $0x60c] sm:$0xff]
    %v2724 = vld [vmem:[#allocation11 + $0x614] sm:$0xff]
    %v2725 = vld [vmem:[#allocation11 + $0x61c] sm:$0xf]
    %v2726 = vld [vmem:[#allocation11 + $0x620] sm:$0xff]
    %v2727 = vld [vmem:[#allocation11 + $0x628] sm:$0xff]
    %v2728 = vld [vmem:[#allocation11 + $0x630] sm:$0xff]
    %v2729 = vld [vmem:[#allocation11 + $0x638] sm:$0xf]
    %v2730 = vld [vmem:[#allocation11 + $0x63c] sm:$0xff]
    %v2731 = vld [vmem:[#allocation11 + $0x644] sm:$0xff]
    %v2732 = vld [vmem:[#allocation11 + $0x64c] sm:$0xff]
    %v2733 = vld [vmem:[#allocation11 + $0x654] sm:$0xf]
    %v2734 = vld [vmem:[#allocation11 + $0x658] sm:$0xff]
    %v2735 = vld [vmem:[#allocation11 + $0x660] sm:$0xff]
    %v2736 = vld [vmem:[#allocation11 + $0x668] sm:$0xff]
    %v2737 = vld [vmem:[#allocation11 + $0x670] sm:$0xf]
    %v2738 = vld [vmem:[#allocation11 + $0x674] sm:$0xff]
    %v2739 = vld [vmem:[#allocation11 + $0x67c] sm:$0xff]
    %v2740 = vld [vmem:[#allocation11 + $0x684] sm:$0xff]
    %v2741 = vld [vmem:[#allocation11 + $0x68c] sm:$0xf]
    %v2742 = vld [vmem:[#allocation11 + $0x690] sm:$0xff]
    %v2743 = vld [vmem:[#allocation11 + $0x698] sm:$0xff]
    %v2744 = vld [vmem:[#allocation11 + $0x6a0] sm:$0xff]
    %v2745 = vld [vmem:[#allocation11 + $0x6a8] sm:$0xf]
    %v2746 = vld [vmem:[#allocation11 + $0x6ac] sm:$0xff]
    %v2747 = vld [vmem:[#allocation11 + $0x6b4] sm:$0xff]
    %v2748 = vld [vmem:[#allocation11 + $0x6bc] sm:$0xff]
    %v2749 = vld [vmem:[#allocation11 + $0x6c4] sm:$0xf]
    %v2750 = vld [vmem:[#allocation11 + $0x6c8] sm:$0xff]
    %v2751 = vld [vmem:[#allocation11 + $0x6d0] sm:$0xff]
    %v2752 = vld [vmem:[#allocation11 + $0x6d8] sm:$0xff]
    %v2753 = vld [vmem:[#allocation11 + $0x6e0] sm:$0xf]
    %v2754 = vld [vmem:[#allocation11 + $0x6e4] sm:$0xff]
    %v2755 = vld [vmem:[#allocation11 + $0x6ec] sm:$0xff]
    %v2756 = vld [vmem:[#allocation11 + $0x6f4] sm:$0xff]
    %v2757 = vld [vmem:[#allocation11 + $0x6fc] sm:$0xf]
    %v2758 = vld [vmem:[#allocation11 + $0x700] sm:$0xff]
    %v2759 = vld [vmem:[#allocation11 + $0x708] sm:$0xff]
    %v2760 = vld [vmem:[#allocation11 + $0x710] sm:$0xff]
    %v2761 = vld [vmem:[#allocation11 + $0x718] sm:$0xf]
    %v2762 = vld [vmem:[#allocation11 + $0x71c] sm:$0xff]
    %v2763 = vld [vmem:[#allocation11 + $0x724] sm:$0xff]
    %v2764 = vld [vmem:[#allocation11 + $0x72c] sm:$0xff]
    %v2765 = vld [vmem:[#allocation11 + $0x734] sm:$0xf]
    %v2766 = vld [vmem:[#allocation11 + $0x738] sm:$0xff]
    %v2767 = vld [vmem:[#allocation11 + $0x740] sm:$0xff]
    %v2768 = vld [vmem:[#allocation11 + $0x748] sm:$0xff]
    %v2769 = vld [vmem:[#allocation11 + $0x750] sm:$0xf]
    %v2770 = vld [vmem:[#allocation11 + $0x754] sm:$0xff]
    %v2771 = vld [vmem:[#allocation11 + $0x75c] sm:$0xff]
    %v2772 = vld [vmem:[#allocation11 + $0x764] sm:$0xff]
    %v2773 = vld [vmem:[#allocation11 + $0x76c] sm:$0xf]
    %v2774 = vld [vmem:[#allocation11 + $0x770] sm:$0xff]
    %v2775 = vld [vmem:[#allocation11 + $0x778] sm:$0xff]
    %v2776 = vld [vmem:[#allocation11 + $0x780] sm:$0xff]
    %v2777 = vld [vmem:[#allocation11 + $0x788] sm:$0xf]
    %v2778 = vld [vmem:[#allocation11 + $0x78c] sm:$0xff]
    %v2779 = vld [vmem:[#allocation11 + $0x794] sm:$0xff]
    %v2780 = vld [vmem:[#allocation11 + $0x79c] sm:$0xff]
    %v2781 = vld [vmem:[#allocation11 + $0x7a4] sm:$0xf]
    %v2782 = vld [vmem:[#allocation11 + $0x7a8] sm:$0xff]
    %v2783 = vld [vmem:[#allocation11 + $0x7b0] sm:$0xff]
    %v2784 = vld [vmem:[#allocation11 + $0x7b8] sm:$0xff]
    %v2785 = vld [vmem:[#allocation11 + $0x7c0] sm:$0xf]
    %v2786 = vld [vmem:[#allocation11 + $0x7c4] sm:$0xff]
    %v2787 = vld [vmem:[#allocation11 + $0x7cc] sm:$0xff]
    %v2788 = vld [vmem:[#allocation11 + $0x7d4] sm:$0xff]
    %v2789 = vld [vmem:[#allocation11 + $0x7dc] sm:$0xf]
    %v2790 = vld [vmem:[#allocation11 + $0x7e0] sm:$0xff]
    %v2791 = vld [vmem:[#allocation11 + $0x7e8] sm:$0xff]
    %v2792 = vld [vmem:[#allocation11 + $0x7f0] sm:$0xff]
    %v2793 = vld [vmem:[#allocation11 + $0x7f8] sm:$0xf]
    %v2794 = vld [vmem:[#allocation11 + $0x7fc] sm:$0xff]
    %v2795 = vld [vmem:[#allocation11 + $0x804] sm:$0xff]
    %v2796 = vld [vmem:[#allocation11 + $0x80c] sm:$0xff]
    %v2797 = vld [vmem:[#allocation11 + $0x814] sm:$0xf]
    %v2798 = vld [vmem:[#allocation11 + $0x818] sm:$0xff]
    %v2799 = vld [vmem:[#allocation11 + $0x820] sm:$0xff]
    %v2800 = vld [vmem:[#allocation11 + $0x828] sm:$0xff]
    %v2801 = vld [vmem:[#allocation11 + $0x830] sm:$0xf]
    %v2802 = vld [vmem:[#allocation11 + $0x834] sm:$0xff]
    %v2803 = vld [vmem:[#allocation11 + $0x83c] sm:$0xff]
    %v2804 = vld [vmem:[#allocation11 + $0x844] sm:$0xff]
    %v2805 = vld [vmem:[#allocation11 + $0x84c] sm:$0xf]
    %v2806 = vld [vmem:[#allocation11 + $0x850] sm:$0xff]
    %v2807 = vld [vmem:[#allocation11 + $0x858] sm:$0xff]
    %v2808 = vld [vmem:[#allocation11 + $0x860] sm:$0xff]
    %v2809 = vld [vmem:[#allocation11 + $0x868] sm:$0xf]
    %v2810 = vld [vmem:[#allocation11 + $0x86c] sm:$0xff]
    %v2811 = vld [vmem:[#allocation11 + $0x874] sm:$0xff]
    %v2812 = vld [vmem:[#allocation11 + $0x87c] sm:$0xff]
    %v2813 = vld [vmem:[#allocation11 + $0x884] sm:$0xf]
    %v2814 = vld [vmem:[#allocation11 + $0x888] sm:$0xff]
    %v2815 = vld [vmem:[#allocation11 + $0x890] sm:$0xff]
    %v2816 = vld [vmem:[#allocation11 + $0x898] sm:$0xff]
    %v2817 = vld [vmem:[#allocation11 + $0x8a0] sm:$0xf]
    %v2818 = vld [vmem:[#allocation11 + $0x8a4] sm:$0xff]
    %v2819 = vld [vmem:[#allocation11 + $0x8ac] sm:$0xff]
    %v2820 = vld [vmem:[#allocation11 + $0x8b4] sm:$0xff]
    %v2821 = vld [vmem:[#allocation11 + $0x8bc] sm:$0xf]
    %v2822 = vld [vmem:[#allocation11 + $0x8c0] sm:$0xff]
    %v2823 = vld [vmem:[#allocation11 + $0x8c8] sm:$0xff]
    %v2824 = vld [vmem:[#allocation11 + $0x8d0] sm:$0xff]
    %v2825 = vld [vmem:[#allocation11 + $0x8d8] sm:$0xf]
    %v2826 = vld [vmem:[#allocation11 + $0x8dc] sm:$0xff]
    %v2827 = vld [vmem:[#allocation11 + $0x8e4] sm:$0xff]
    %v2828 = vld [vmem:[#allocation11 + $0x8ec] sm:$0xff]
    %v2829 = vld [vmem:[#allocation11 + $0x8f4] sm:$0xf]
    %v2830 = vld [vmem:[#allocation11 + $0x8f8] sm:$0xff]
    %v2831 = vld [vmem:[#allocation11 + $0x900] sm:$0xff]
    %v2832 = vld [vmem:[#allocation11 + $0x908] sm:$0xff]
    %v2833 = vld [vmem:[#allocation11 + $0x910] sm:$0xf]
    %v2834 = vld [vmem:[#allocation11 + $0x914] sm:$0xff]
    %v2835 = vld [vmem:[#allocation11 + $0x91c] sm:$0xff]
    %v2836 = vld [vmem:[#allocation11 + $0x924] sm:$0xff]
    %v2837 = vld [vmem:[#allocation11 + $0x92c] sm:$0xf]
    %v2838 = vld [vmem:[#allocation11 + $0x930] sm:$0xff]
    %v2839 = vld [vmem:[#allocation11 + $0x938] sm:$0xff]
    %v2840 = vld [vmem:[#allocation11 + $0x940] sm:$0xff]
    %v2841 = vld [vmem:[#allocation11 + $0x948] sm:$0xf]
    %v2842 = vld [vmem:[#allocation11 + $0x94c] sm:$0xff]
    %v2843 = vld [vmem:[#allocation11 + $0x954] sm:$0xff]
    %v2844 = vld [vmem:[#allocation11 + $0x95c] sm:$0xff]
    %v2845 = vld [vmem:[#allocation11 + $0x964] sm:$0xf]
    %v2846 = vld [vmem:[#allocation11 + $0x968] sm:$0xff]
    %v2847 = vld [vmem:[#allocation11 + $0x970] sm:$0xff]
    %v2848 = vld [vmem:[#allocation11 + $0x978] sm:$0xff]
    %v2849 = vld [vmem:[#allocation11 + $0x980] sm:$0xf]
    %v2850 = vld [vmem:[#allocation11 + $0x984] sm:$0xff]
    %v2851 = vld [vmem:[#allocation11 + $0x98c] sm:$0xff]
    %v2852 = vld [vmem:[#allocation11 + $0x994] sm:$0xff]
    %v2853 = vld [vmem:[#allocation11 + $0x99c] sm:$0xf]
    %v2854 = vld [vmem:[#allocation11 + $0x9a0] sm:$0xff]
    %v2855 = vld [vmem:[#allocation11 + $0x9a8] sm:$0xff]
    %v2856 = vld [vmem:[#allocation11 + $0x9b0] sm:$0xff]
    %v2857 = vld [vmem:[#allocation11 + $0x9b8] sm:$0xf]
    %v2858 = vld [vmem:[#allocation11 + $0x9bc] sm:$0xff]
    %v2859 = vld [vmem:[#allocation11 + $0x9c4] sm:$0xff]
    %v2860 = vld [vmem:[#allocation11 + $0x9cc] sm:$0xff]
    %v2861 = vld [vmem:[#allocation11 + $0x9d4] sm:$0xf]
    %v2862 = vld [vmem:[#allocation11 + $0x9d8] sm:$0xff]
    %v2863 = vld [vmem:[#allocation11 + $0x9e0] sm:$0xff]
    %v2864 = vld [vmem:[#allocation11 + $0x9e8] sm:$0xff]
    %v2865 = vld [vmem:[#allocation11 + $0x9f0] sm:$0xf]
    %v2866 = vld [vmem:[#allocation11 + $0x9f4] sm:$0xff]
    %v2867 = vld [vmem:[#allocation11 + $0x9fc] sm:$0xff]
    %v2868 = vld [vmem:[#allocation11 + $0xa04] sm:$0xff]
    %v2869 = vld [vmem:[#allocation11 + $0xa0c] sm:$0xf]
    %v2870 = vld [vmem:[#allocation11 + $0xa10] sm:$0xff]
    %v2871 = vld [vmem:[#allocation11 + $0xa18] sm:$0xff]
    %v2872 = vld [vmem:[#allocation11 + $0xa20] sm:$0xff]
    %v2873 = vld [vmem:[#allocation11 + $0xa28] sm:$0xf]
    %v2874 = vld [vmem:[#allocation11 + $0xa2c] sm:$0xff]
    %v2875 = vld [vmem:[#allocation11 + $0xa34] sm:$0xff]
    %v2876 = vld [vmem:[#allocation11 + $0xa3c] sm:$0xff]
    %v2877 = vld [vmem:[#allocation11 + $0xa44] sm:$0xf]
    %v2878 = vld [vmem:[#allocation11 + $0xa48] sm:$0xff]
    %v2879 = vld [vmem:[#allocation11 + $0xa50] sm:$0xff]
    %v2880 = vld [vmem:[#allocation11 + $0xa58] sm:$0xff]
    %v2881 = vld [vmem:[#allocation11 + $0xa60] sm:$0xf]
    %v2882 = vld [vmem:[#allocation11 + $0xa64] sm:$0xff]
    %v2883 = vld [vmem:[#allocation11 + $0xa6c] sm:$0xff]
    %v2884 = vld [vmem:[#allocation11 + $0xa74] sm:$0xff]
    %v2885 = vld [vmem:[#allocation11 + $0xa7c] sm:$0xf]
    %v2886 = vld [vmem:[#allocation11 + $0xa80] sm:$0xff]
    %v2887 = vld [vmem:[#allocation11 + $0xa88] sm:$0xff]
    %v2888 = vld [vmem:[#allocation11 + $0xa90] sm:$0xff]
    %v2889 = vld [vmem:[#allocation11 + $0xa98] sm:$0xf]
    %v2890 = vld [vmem:[#allocation11 + $0xa9c] sm:$0xff]
    %v2891 = vld [vmem:[#allocation11 + $0xaa4] sm:$0xff]
    %v2892 = vld [vmem:[#allocation11 + $0xaac] sm:$0xff]
    %v2893 = vld [vmem:[#allocation11 + $0xab4] sm:$0xf]
    %v2894 = vld [vmem:[#allocation11 + $0xab8] sm:$0xff]
    %v2895 = vld [vmem:[#allocation11 + $0xac0] sm:$0xff]
    %v2896 = vld [vmem:[#allocation11 + $0xac8] sm:$0xff]
    %v2897 = vld [vmem:[#allocation11 + $0xad0] sm:$0xf]
    %v2898 = vld [vmem:[#allocation11 + $0xad4] sm:$0xff]
    %v2899 = vld [vmem:[#allocation11 + $0xadc] sm:$0xff]
    %v2900 = vld [vmem:[#allocation11 + $0xae4] sm:$0xff]
    %v2901 = vld [vmem:[#allocation11 + $0xaec] sm:$0xf]
    %v2902 = vld [vmem:[#allocation13] sm:$0x7f]
    %v2904 = vlaneseq
    %v2905 = vshrl.u32 %v2904, 7
    %v2906 = vsub.s32 0, %v2905
    %v2907 = vrot.slane %v2902, %v2906
    %v2908 = vlaneseq
    %v2909 = vshrl.u32 %v2908, 7
    %v2910 = vsub.s32 1, %v2909
    %v2911 = vrot.slane %v2902, %v2910
    %v2912 = vlaneseq
    %v2913 = vshrl.u32 %v2912, 7
    %v2914 = vsub.s32 2, %v2913
    %v2915 = vrot.slane %v2902, %v2914
    %v2916 = vlaneseq
    %v2917 = vshrl.u32 %v2916, 7
    %v2918 = vsub.s32 3, %v2917
    %v2919 = vrot.slane %v2902, %v2918
    %v2920 = vlaneseq
    %v2921 = vshrl.u32 %v2920, 7
    %v2922 = vsub.s32 4, %v2921
    %v2923 = vrot.slane %v2902, %v2922
    %v2924 = vlaneseq
    %v2925 = vshrl.u32 %v2924, 7
    %v2926 = vsub.s32 5, %v2925
    %v2927 = vrot.slane %v2902, %v2926
    %v2928 = vlaneseq
    %v2929 = vshrl.u32 %v2928, 7
    %v2930 = vsub.s32 6, %v2929
    %v2931 = vrot.slane %v2902, %v2930
    %v3339 = vunpack.c.l.b16 %v2502
    %v3340 = vunpack.c.h.b16 %v2502
    %v3341 = vunpack.c.l.b16 %v2503
    %v3342 = vunpack.c.h.b16 %v2503
    %v3343 = vunpack.c.l.b16 %v2504
    %v3344 = vunpack.c.h.b16 %v2504
    %v3345 = vunpack.c.l.b16 %v2505
    %v3346 = vunpack.c.l.b16 %v2506
    %v3347 = vunpack.c.h.b16 %v2506
    %v3348 = vunpack.c.l.b16 %v2507
    %v3349 = vunpack.c.h.b16 %v2507
    %v3350 = vunpack.c.l.b16 %v2508
    %v3351 = vunpack.c.h.b16 %v2508
    %v3352 = vunpack.c.l.b16 %v2509
    %v3353 = vunpack.c.l.b16 %v2510
    %v3354 = vunpack.c.h.b16 %v2510
    %v3355 = vunpack.c.l.b16 %v2511
    %v3356 = vunpack.c.h.b16 %v2511
    %v3357 = vunpack.c.l.b16 %v2512
    %v3358 = vunpack.c.h.b16 %v2512
    %v3359 = vunpack.c.l.b16 %v2513
    %v3360 = vunpack.c.l.b16 %v2514
    %v3361 = vunpack.c.h.b16 %v2514
    %v3362 = vunpack.c.l.b16 %v2515
    %v3363 = vunpack.c.h.b16 %v2515
    %v3364 = vunpack.c.l.b16 %v2516
    %v3365 = vunpack.c.h.b16 %v2516
    %v3366 = vunpack.c.l.b16 %v2517
    %v3367 = vunpack.c.l.b16 %v2518
    %v3368 = vunpack.c.h.b16 %v2518
    %v3369 = vunpack.c.l.b16 %v2519
    %v3370 = vunpack.c.h.b16 %v2519
    %v3371 = vunpack.c.l.b16 %v2520
    %v3372 = vunpack.c.h.b16 %v2520
    %v3373 = vunpack.c.l.b16 %v2521
    %v3374 = vunpack.c.l.b16 %v2522
    %v3375 = vunpack.c.h.b16 %v2522
    %v3376 = vunpack.c.l.b16 %v2523
    %v3377 = vunpack.c.h.b16 %v2523
    %v3378 = vunpack.c.l.b16 %v2524
    %v3379 = vunpack.c.h.b16 %v2524
    %v3380 = vunpack.c.l.b16 %v2525
    %v3381 = vunpack.c.l.b16 %v2526
    %v3382 = vunpack.c.h.b16 %v2526
    %v3383 = vunpack.c.l.b16 %v2527
    %v3384 = vunpack.c.h.b16 %v2527
    %v3385 = vunpack.c.l.b16 %v2528
    %v3386 = vunpack.c.h.b16 %v2528
    %v3387 = vunpack.c.l.b16 %v2529
    %v3388 = vunpack.c.l.b16 %v2530
    %v3389 = vunpack.c.h.b16 %v2530
    %v3390 = vunpack.c.l.b16 %v2531
    %v3391 = vunpack.c.h.b16 %v2531
    %v3392 = vunpack.c.l.b16 %v2532
    %v3393 = vunpack.c.h.b16 %v2532
    %v3394 = vunpack.c.l.b16 %v2533
    %v3395 = vunpack.c.l.b16 %v2534
    %v3396 = vunpack.c.h.b16 %v2534
    %v3397 = vunpack.c.l.b16 %v2535
    %v3398 = vunpack.c.h.b16 %v2535
    %v3399 = vunpack.c.l.b16 %v2536
    %v3400 = vunpack.c.h.b16 %v2536
    %v3401 = vunpack.c.l.b16 %v2537
    %v3402 = vunpack.c.l.b16 %v2538
    %v3403 = vunpack.c.h.b16 %v2538
    %v3404 = vunpack.c.l.b16 %v2539
    %v3405 = vunpack.c.h.b16 %v2539
    %v3406 = vunpack.c.l.b16 %v2540
    %v3407 = vunpack.c.h.b16 %v2540
    %v3408 = vunpack.c.l.b16 %v2541
    %v3409 = vunpack.c.l.b16 %v2542
    %v3410 = vunpack.c.h.b16 %v2542
    %v3411 = vunpack.c.l.b16 %v2543
    %v3412 = vunpack.c.h.b16 %v2543
    %v3413 = vunpack.c.l.b16 %v2544
    %v3414 = vunpack.c.h.b16 %v2544
    %v3415 = vunpack.c.l.b16 %v2545
    %v3416 = vunpack.c.l.b16 %v2546
    %v3417 = vunpack.c.h.b16 %v2546
    %v3418 = vunpack.c.l.b16 %v2547
    %v3419 = vunpack.c.h.b16 %v2547
    %v3420 = vunpack.c.l.b16 %v2548
    %v3421 = vunpack.c.h.b16 %v2548
    %v3422 = vunpack.c.l.b16 %v2549
    %v3423 = vunpack.c.l.b16 %v2550
    %v3424 = vunpack.c.h.b16 %v2550
    %v3425 = vunpack.c.l.b16 %v2551
    %v3426 = vunpack.c.h.b16 %v2551
    %v3427 = vunpack.c.l.b16 %v2552
    %v3428 = vunpack.c.h.b16 %v2552
    %v3429 = vunpack.c.l.b16 %v2553
    %v3430 = vunpack.c.l.b16 %v2554
    %v3431 = vunpack.c.h.b16 %v2554
    %v3432 = vunpack.c.l.b16 %v2555
    %v3433 = vunpack.c.h.b16 %v2555
    %v3434 = vunpack.c.l.b16 %v2556
    %v3435 = vunpack.c.h.b16 %v2556
    %v3436 = vunpack.c.l.b16 %v2557
    %v3437 = vunpack.c.l.b16 %v2558
    %v3438 = vunpack.c.h.b16 %v2558
    %v3439 = vunpack.c.l.b16 %v2559
    %v3440 = vunpack.c.h.b16 %v2559
    %v3441 = vunpack.c.l.b16 %v2560
    %v3442 = vunpack.c.h.b16 %v2560
    %v3443 = vunpack.c.l.b16 %v2561
    %v3444 = vunpack.c.l.b16 %v2562
    %v3445 = vunpack.c.h.b16 %v2562
    %v3446 = vunpack.c.l.b16 %v2563
    %v3447 = vunpack.c.h.b16 %v2563
    %v3448 = vunpack.c.l.b16 %v2564
    %v3449 = vunpack.c.h.b16 %v2564
    %v3450 = vunpack.c.l.b16 %v2565
    %v3451 = vunpack.c.l.b16 %v2566
    %v3452 = vunpack.c.h.b16 %v2566
    %v3453 = vunpack.c.l.b16 %v2567
    %v3454 = vunpack.c.h.b16 %v2567
    %v3455 = vunpack.c.l.b16 %v2568
    %v3456 = vunpack.c.h.b16 %v2568
    %v3457 = vunpack.c.l.b16 %v2569
    %v3458 = vunpack.c.l.b16 %v2570
    %v3459 = vunpack.c.h.b16 %v2570
    %v3460 = vunpack.c.l.b16 %v2571
    %v3461 = vunpack.c.h.b16 %v2571
    %v3462 = vunpack.c.l.b16 %v2572
    %v3463 = vunpack.c.h.b16 %v2572
    %v3464 = vunpack.c.l.b16 %v2573
    %v3465 = vunpack.c.l.b16 %v2574
    %v3466 = vunpack.c.h.b16 %v2574
    %v3467 = vunpack.c.l.b16 %v2575
    %v3468 = vunpack.c.h.b16 %v2575
    %v3469 = vunpack.c.l.b16 %v2576
    %v3470 = vunpack.c.h.b16 %v2576
    %v3471 = vunpack.c.l.b16 %v2577
    %v3472 = vunpack.c.l.b16 %v2578
    %v3473 = vunpack.c.h.b16 %v2578
    %v3474 = vunpack.c.l.b16 %v2579
    %v3475 = vunpack.c.h.b16 %v2579
    %v3476 = vunpack.c.l.b16 %v2580
    %v3477 = vunpack.c.h.b16 %v2580
    %v3478 = vunpack.c.l.b16 %v2581
    %v3479 = vunpack.c.l.b16 %v2582
    %v3480 = vunpack.c.h.b16 %v2582
    %v3481 = vunpack.c.l.b16 %v2583
    %v3482 = vunpack.c.h.b16 %v2583
    %v3483 = vunpack.c.l.b16 %v2584
    %v3484 = vunpack.c.h.b16 %v2584
    %v3485 = vunpack.c.l.b16 %v2585
    %v3486 = vunpack.c.l.b16 %v2586
    %v3487 = vunpack.c.h.b16 %v2586
    %v3488 = vunpack.c.l.b16 %v2587
    %v3489 = vunpack.c.h.b16 %v2587
    %v3490 = vunpack.c.l.b16 %v2588
    %v3491 = vunpack.c.h.b16 %v2588
    %v3492 = vunpack.c.l.b16 %v2589
    %v3493 = vunpack.c.l.b16 %v2590
    %v3494 = vunpack.c.h.b16 %v2590
    %v3495 = vunpack.c.l.b16 %v2591
    %v3496 = vunpack.c.h.b16 %v2591
    %v3497 = vunpack.c.l.b16 %v2592
    %v3498 = vunpack.c.h.b16 %v2592
    %v3499 = vunpack.c.l.b16 %v2593
    %v3500 = vunpack.c.l.b16 %v2594
    %v3501 = vunpack.c.h.b16 %v2594
    %v3502 = vunpack.c.l.b16 %v2595
    %v3503 = vunpack.c.h.b16 %v2595
    %v3504 = vunpack.c.l.b16 %v2596
    %v3505 = vunpack.c.h.b16 %v2596
    %v3506 = vunpack.c.l.b16 %v2597
    %v3507 = vunpack.c.l.b16 %v2598
    %v3508 = vunpack.c.h.b16 %v2598
    %v3509 = vunpack.c.l.b16 %v2599
    %v3510 = vunpack.c.h.b16 %v2599
    %v3511 = vunpack.c.l.b16 %v2600
    %v3512 = vunpack.c.h.b16 %v2600
    %v3513 = vunpack.c.l.b16 %v2601
    %v3514 = vunpack.c.l.b16 %v2602
    %v3515 = vunpack.c.h.b16 %v2602
    %v3516 = vunpack.c.l.b16 %v2603
    %v3517 = vunpack.c.h.b16 %v2603
    %v3518 = vunpack.c.l.b16 %v2604
    %v3519 = vunpack.c.h.b16 %v2604
    %v3520 = vunpack.c.l.b16 %v2605
    %v3521 = vunpack.c.l.b16 %v2606
    %v3522 = vunpack.c.h.b16 %v2606
    %v3523 = vunpack.c.l.b16 %v2607
    %v3524 = vunpack.c.h.b16 %v2607
    %v3525 = vunpack.c.l.b16 %v2608
    %v3526 = vunpack.c.h.b16 %v2608
    %v3527 = vunpack.c.l.b16 %v2609
    %v3528 = vunpack.c.l.b16 %v2610
    %v3529 = vunpack.c.h.b16 %v2610
    %v3530 = vunpack.c.l.b16 %v2611
    %v3531 = vunpack.c.h.b16 %v2611
    %v3532 = vunpack.c.l.b16 %v2612
    %v3533 = vunpack.c.h.b16 %v2612
    %v3534 = vunpack.c.l.b16 %v2613
    %v3535 = vunpack.c.l.b16 %v2614
    %v3536 = vunpack.c.h.b16 %v2614
    %v3537 = vunpack.c.l.b16 %v2615
    %v3538 = vunpack.c.h.b16 %v2615
    %v3539 = vunpack.c.l.b16 %v2616
    %v3540 = vunpack.c.h.b16 %v2616
    %v3541 = vunpack.c.l.b16 %v2617
    %v3542 = vunpack.c.l.b16 %v2618
    %v3543 = vunpack.c.h.b16 %v2618
    %v3544 = vunpack.c.l.b16 %v2619
    %v3545 = vunpack.c.h.b16 %v2619
    %v3546 = vunpack.c.l.b16 %v2620
    %v3547 = vunpack.c.h.b16 %v2620
    %v3548 = vunpack.c.l.b16 %v2621
    %v3549 = vunpack.c.l.b16 %v2622
    %v3550 = vunpack.c.h.b16 %v2622
    %v3551 = vunpack.c.l.b16 %v2623
    %v3552 = vunpack.c.h.b16 %v2623
    %v3553 = vunpack.c.l.b16 %v2624
    %v3554 = vunpack.c.h.b16 %v2624
    %v3555 = vunpack.c.l.b16 %v2625
    %v3556 = vunpack.c.l.b16 %v2626
    %v3557 = vunpack.c.h.b16 %v2626
    %v3558 = vunpack.c.l.b16 %v2627
    %v3559 = vunpack.c.h.b16 %v2627
    %v3560 = vunpack.c.l.b16 %v2628
    %v3561 = vunpack.c.h.b16 %v2628
    %v3562 = vunpack.c.l.b16 %v2629
    %v3563 = vunpack.c.l.b16 %v2630
    %v3564 = vunpack.c.h.b16 %v2630
    %v3565 = vunpack.c.l.b16 %v2631
    %v3566 = vunpack.c.h.b16 %v2631
    %v3567 = vunpack.c.l.b16 %v2632
    %v3568 = vunpack.c.h.b16 %v2632
    %v3569 = vunpack.c.l.b16 %v2633
    %v3570 = vunpack.c.l.b16 %v2634
    %v3571 = vunpack.c.h.b16 %v2634
    %v3572 = vunpack.c.l.b16 %v2635
    %v3573 = vunpack.c.h.b16 %v2635
    %v3574 = vunpack.c.l.b16 %v2636
    %v3575 = vunpack.c.h.b16 %v2636
    %v3576 = vunpack.c.l.b16 %v2637
    %v3577 = vunpack.c.l.b16 %v2638
    %v3578 = vunpack.c.h.b16 %v2638
    %v3579 = vunpack.c.l.b16 %v2639
    %v3580 = vunpack.c.h.b16 %v2639
    %v3581 = vunpack.c.l.b16 %v2640
    %v3582 = vunpack.c.h.b16 %v2640
    %v3583 = vunpack.c.l.b16 %v2641
    %v3584 = vunpack.c.l.b16 %v2642
    %v3585 = vunpack.c.h.b16 %v2642
    %v3586 = vunpack.c.l.b16 %v2643
    %v3587 = vunpack.c.h.b16 %v2643
    %v3588 = vunpack.c.l.b16 %v2644
    %v3589 = vunpack.c.h.b16 %v2644
    %v3590 = vunpack.c.l.b16 %v2645
    %v3591 = vunpack.c.l.b16 %v2646
    %v3592 = vunpack.c.h.b16 %v2646
    %v3593 = vunpack.c.l.b16 %v2647
    %v3594 = vunpack.c.h.b16 %v2647
    %v3595 = vunpack.c.l.b16 %v2648
    %v3596 = vunpack.c.h.b16 %v2648
    %v3597 = vunpack.c.l.b16 %v2649
    %v3598 = vunpack.c.l.b16 %v2650
    %v3599 = vunpack.c.h.b16 %v2650
    %v3600 = vunpack.c.l.b16 %v2651
    %v3601 = vunpack.c.h.b16 %v2651
    %v3602 = vunpack.c.l.b16 %v2652
    %v3603 = vunpack.c.h.b16 %v2652
    %v3604 = vunpack.c.l.b16 %v2653
    %v3605 = vunpack.c.l.b16 %v2654
    %v3606 = vunpack.c.h.b16 %v2654
    %v3607 = vunpack.c.l.b16 %v2655
    %v3608 = vunpack.c.h.b16 %v2655
    %v3609 = vunpack.c.l.b16 %v2656
    %v3610 = vunpack.c.h.b16 %v2656
    %v3611 = vunpack.c.l.b16 %v2657
    %v3612 = vunpack.c.l.b16 %v2658
    %v3613 = vunpack.c.h.b16 %v2658
    %v3614 = vunpack.c.l.b16 %v2659
    %v3615 = vunpack.c.h.b16 %v2659
    %v3616 = vunpack.c.l.b16 %v2660
    %v3617 = vunpack.c.h.b16 %v2660
    %v3618 = vunpack.c.l.b16 %v2661
    %v3619 = vunpack.c.l.b16 %v2662
    %v3620 = vunpack.c.h.b16 %v2662
    %v3621 = vunpack.c.l.b16 %v2663
    %v3622 = vunpack.c.h.b16 %v2663
    %v3623 = vunpack.c.l.b16 %v2664
    %v3624 = vunpack.c.h.b16 %v2664
    %v3625 = vunpack.c.l.b16 %v2665
    %v3626 = vunpack.c.l.b16 %v2666
    %v3627 = vunpack.c.h.b16 %v2666
    %v3628 = vunpack.c.l.b16 %v2667
    %v3629 = vunpack.c.h.b16 %v2667
    %v3630 = vunpack.c.l.b16 %v2668
    %v3631 = vunpack.c.h.b16 %v2668
    %v3632 = vunpack.c.l.b16 %v2669
    %v3633 = vunpack.c.l.b16 %v2670
    %v3634 = vunpack.c.h.b16 %v2670
    %v3635 = vunpack.c.l.b16 %v2671
    %v3636 = vunpack.c.h.b16 %v2671
    %v3637 = vunpack.c.l.b16 %v2672
    %v3638 = vunpack.c.h.b16 %v2672
    %v3639 = vunpack.c.l.b16 %v2673
    %v3640 = vunpack.c.l.b16 %v2674
    %v3641 = vunpack.c.h.b16 %v2674
    %v3642 = vunpack.c.l.b16 %v2675
    %v3643 = vunpack.c.h.b16 %v2675
    %v3644 = vunpack.c.l.b16 %v2676
    %v3645 = vunpack.c.h.b16 %v2676
    %v3646 = vunpack.c.l.b16 %v2677
    %v3647 = vunpack.c.l.b16 %v2678
    %v3648 = vunpack.c.h.b16 %v2678
    %v3649 = vunpack.c.l.b16 %v2679
    %v3650 = vunpack.c.h.b16 %v2679
    %v3651 = vunpack.c.l.b16 %v2680
    %v3652 = vunpack.c.h.b16 %v2680
    %v3653 = vunpack.c.l.b16 %v2681
    %v3654 = vunpack.c.l.b16 %v2682
    %v3655 = vunpack.c.h.b16 %v2682
    %v3656 = vunpack.c.l.b16 %v2683
    %v3657 = vunpack.c.h.b16 %v2683
    %v3658 = vunpack.c.l.b16 %v2684
    %v3659 = vunpack.c.h.b16 %v2684
    %v3660 = vunpack.c.l.b16 %v2685
    %v3661 = vunpack.c.l.b16 %v2686
    %v3662 = vunpack.c.h.b16 %v2686
    %v3663 = vunpack.c.l.b16 %v2687
    %v3664 = vunpack.c.h.b16 %v2687
    %v3665 = vunpack.c.l.b16 %v2688
    %v3666 = vunpack.c.h.b16 %v2688
    %v3667 = vunpack.c.l.b16 %v2689
    %v3668 = vunpack.c.l.b16 %v2690
    %v3669 = vunpack.c.h.b16 %v2690
    %v3670 = vunpack.c.l.b16 %v2691
    %v3671 = vunpack.c.h.b16 %v2691
    %v3672 = vunpack.c.l.b16 %v2692
    %v3673 = vunpack.c.h.b16 %v2692
    %v3674 = vunpack.c.l.b16 %v2693
    %v3675 = vunpack.c.l.b16 %v2694
    %v3676 = vunpack.c.h.b16 %v2694
    %v3677 = vunpack.c.l.b16 %v2695
    %v3678 = vunpack.c.h.b16 %v2695
    %v3679 = vunpack.c.l.b16 %v2696
    %v3680 = vunpack.c.h.b16 %v2696
    %v3681 = vunpack.c.l.b16 %v2697
    %v3682 = vunpack.c.l.b16 %v2698
    %v3683 = vunpack.c.h.b16 %v2698
    %v3684 = vunpack.c.l.b16 %v2699
    %v3685 = vunpack.c.h.b16 %v2699
    %v3686 = vunpack.c.l.b16 %v2700
    %v3687 = vunpack.c.h.b16 %v2700
    %v3688 = vunpack.c.l.b16 %v2701
    %v3689 = vunpack.c.l.b16 %v2702
    %v3690 = vunpack.c.h.b16 %v2702
    %v3691 = vunpack.c.l.b16 %v2703
    %v3692 = vunpack.c.h.b16 %v2703
    %v3693 = vunpack.c.l.b16 %v2704
    %v3694 = vunpack.c.h.b16 %v2704
    %v3695 = vunpack.c.l.b16 %v2705
    %v3696 = vunpack.c.l.b16 %v2706
    %v3697 = vunpack.c.h.b16 %v2706
    %v3698 = vunpack.c.l.b16 %v2707
    %v3699 = vunpack.c.h.b16 %v2707
    %v3700 = vunpack.c.l.b16 %v2708
    %v3701 = vunpack.c.h.b16 %v2708
    %v3702 = vunpack.c.l.b16 %v2709
    %v3703 = vunpack.c.l.b16 %v2710
    %v3704 = vunpack.c.h.b16 %v2710
    %v3705 = vunpack.c.l.b16 %v2711
    %v3706 = vunpack.c.h.b16 %v2711
    %v3707 = vunpack.c.l.b16 %v2712
    %v3708 = vunpack.c.h.b16 %v2712
    %v3709 = vunpack.c.l.b16 %v2713
    %v3710 = vunpack.c.l.b16 %v2714
    %v3711 = vunpack.c.h.b16 %v2714
    %v3712 = vunpack.c.l.b16 %v2715
    %v3713 = vunpack.c.h.b16 %v2715
    %v3714 = vunpack.c.l.b16 %v2716
    %v3715 = vunpack.c.h.b16 %v2716
    %v3716 = vunpack.c.l.b16 %v2717
    %v3717 = vunpack.c.l.b16 %v2718
    %v3718 = vunpack.c.h.b16 %v2718
    %v3719 = vunpack.c.l.b16 %v2719
    %v3720 = vunpack.c.h.b16 %v2719
    %v3721 = vunpack.c.l.b16 %v2720
    %v3722 = vunpack.c.h.b16 %v2720
    %v3723 = vunpack.c.l.b16 %v2721
    %v3724 = vunpack.c.l.b16 %v2722
    %v3725 = vunpack.c.h.b16 %v2722
    %v3726 = vunpack.c.l.b16 %v2723
    %v3727 = vunpack.c.h.b16 %v2723
    %v3728 = vunpack.c.l.b16 %v2724
    %v3729 = vunpack.c.h.b16 %v2724
    %v3730 = vunpack.c.l.b16 %v2725
    %v3731 = vunpack.c.l.b16 %v2726
    %v3732 = vunpack.c.h.b16 %v2726
    %v3733 = vunpack.c.l.b16 %v2727
    %v3734 = vunpack.c.h.b16 %v2727
    %v3735 = vunpack.c.l.b16 %v2728
    %v3736 = vunpack.c.h.b16 %v2728
    %v3737 = vunpack.c.l.b16 %v2729
    %v3738 = vunpack.c.l.b16 %v2730
    %v3739 = vunpack.c.h.b16 %v2730
    %v3740 = vunpack.c.l.b16 %v2731
    %v3741 = vunpack.c.h.b16 %v2731
    %v3742 = vunpack.c.l.b16 %v2732
    %v3743 = vunpack.c.h.b16 %v2732
    %v3744 = vunpack.c.l.b16 %v2733
    %v3745 = vunpack.c.l.b16 %v2734
    %v3746 = vunpack.c.h.b16 %v2734
    %v3747 = vunpack.c.l.b16 %v2735
    %v3748 = vunpack.c.h.b16 %v2735
    %v3749 = vunpack.c.l.b16 %v2736
    %v3750 = vunpack.c.h.b16 %v2736
    %v3751 = vunpack.c.l.b16 %v2737
    %v3752 = vunpack.c.l.b16 %v2738
    %v3753 = vunpack.c.h.b16 %v2738
    %v3754 = vunpack.c.l.b16 %v2739
    %v3755 = vunpack.c.h.b16 %v2739
    %v3756 = vunpack.c.l.b16 %v2740
    %v3757 = vunpack.c.h.b16 %v2740
    %v3758 = vunpack.c.l.b16 %v2741
    %v3759 = vunpack.c.l.b16 %v2742
    %v3760 = vunpack.c.h.b16 %v2742
    %v3761 = vunpack.c.l.b16 %v2743
    %v3762 = vunpack.c.h.b16 %v2743
    %v3763 = vunpack.c.l.b16 %v2744
    %v3764 = vunpack.c.h.b16 %v2744
    %v3765 = vunpack.c.l.b16 %v2745
    %v3766 = vunpack.c.l.b16 %v2746
    %v3767 = vunpack.c.h.b16 %v2746
    %v3768 = vunpack.c.l.b16 %v2747
    %v3769 = vunpack.c.h.b16 %v2747
    %v3770 = vunpack.c.l.b16 %v2748
    %v3771 = vunpack.c.h.b16 %v2748
    %v3772 = vunpack.c.l.b16 %v2749
    %v3773 = vunpack.c.l.b16 %v2750
    %v3774 = vunpack.c.h.b16 %v2750
    %v3775 = vunpack.c.l.b16 %v2751
    %v3776 = vunpack.c.h.b16 %v2751
    %v3777 = vunpack.c.l.b16 %v2752
    %v3778 = vunpack.c.h.b16 %v2752
    %v3779 = vunpack.c.l.b16 %v2753
    %v3780 = vunpack.c.l.b16 %v2754
    %v3781 = vunpack.c.h.b16 %v2754
    %v3782 = vunpack.c.l.b16 %v2755
    %v3783 = vunpack.c.h.b16 %v2755
    %v3784 = vunpack.c.l.b16 %v2756
    %v3785 = vunpack.c.h.b16 %v2756
    %v3786 = vunpack.c.l.b16 %v2757
    %v3787 = vunpack.c.l.b16 %v2758
    %v3788 = vunpack.c.h.b16 %v2758
    %v3789 = vunpack.c.l.b16 %v2759
    %v3790 = vunpack.c.h.b16 %v2759
    %v3791 = vunpack.c.l.b16 %v2760
    %v3792 = vunpack.c.h.b16 %v2760
    %v3793 = vunpack.c.l.b16 %v2761
    %v3794 = vunpack.c.l.b16 %v2762
    %v3795 = vunpack.c.h.b16 %v2762
    %v3796 = vunpack.c.l.b16 %v2763
    %v3797 = vunpack.c.h.b16 %v2763
    %v3798 = vunpack.c.l.b16 %v2764
    %v3799 = vunpack.c.h.b16 %v2764
    %v3800 = vunpack.c.l.b16 %v2765
    %v3801 = vunpack.c.l.b16 %v2766
    %v3802 = vunpack.c.h.b16 %v2766
    %v3803 = vunpack.c.l.b16 %v2767
    %v3804 = vunpack.c.h.b16 %v2767
    %v3805 = vunpack.c.l.b16 %v2768
    %v3806 = vunpack.c.h.b16 %v2768
    %v3807 = vunpack.c.l.b16 %v2769
    %v3808 = vunpack.c.l.b16 %v2770
    %v3809 = vunpack.c.h.b16 %v2770
    %v3810 = vunpack.c.l.b16 %v2771
    %v3811 = vunpack.c.h.b16 %v2771
    %v3812 = vunpack.c.l.b16 %v2772
    %v3813 = vunpack.c.h.b16 %v2772
    %v3814 = vunpack.c.l.b16 %v2773
    %v3815 = vunpack.c.l.b16 %v2774
    %v3816 = vunpack.c.h.b16 %v2774
    %v3817 = vunpack.c.l.b16 %v2775
    %v3818 = vunpack.c.h.b16 %v2775
    %v3819 = vunpack.c.l.b16 %v2776
    %v3820 = vunpack.c.h.b16 %v2776
    %v3821 = vunpack.c.l.b16 %v2777
    %v3822 = vunpack.c.l.b16 %v2778
    %v3823 = vunpack.c.h.b16 %v2778
    %v3824 = vunpack.c.l.b16 %v2779
    %v3825 = vunpack.c.h.b16 %v2779
    %v3826 = vunpack.c.l.b16 %v2780
    %v3827 = vunpack.c.h.b16 %v2780
    %v3828 = vunpack.c.l.b16 %v2781
    %v3829 = vunpack.c.l.b16 %v2782
    %v3830 = vunpack.c.h.b16 %v2782
    %v3831 = vunpack.c.l.b16 %v2783
    %v3832 = vunpack.c.h.b16 %v2783
    %v3833 = vunpack.c.l.b16 %v2784
    %v3834 = vunpack.c.h.b16 %v2784
    %v3835 = vunpack.c.l.b16 %v2785
    %v3836 = vunpack.c.l.b16 %v2786
    %v3837 = vunpack.c.h.b16 %v2786
    %v3838 = vunpack.c.l.b16 %v2787
    %v3839 = vunpack.c.h.b16 %v2787
    %v3840 = vunpack.c.l.b16 %v2788
    %v3841 = vunpack.c.h.b16 %v2788
    %v3842 = vunpack.c.l.b16 %v2789
    %v3843 = vunpack.c.l.b16 %v2790
    %v3844 = vunpack.c.h.b16 %v2790
    %v3845 = vunpack.c.l.b16 %v2791
    %v3846 = vunpack.c.h.b16 %v2791
    %v3847 = vunpack.c.l.b16 %v2792
    %v3848 = vunpack.c.h.b16 %v2792
    %v3849 = vunpack.c.l.b16 %v2793
    %v3850 = vunpack.c.l.b16 %v2794
    %v3851 = vunpack.c.h.b16 %v2794
    %v3852 = vunpack.c.l.b16 %v2795
    %v3853 = vunpack.c.h.b16 %v2795
    %v3854 = vunpack.c.l.b16 %v2796
    %v3855 = vunpack.c.h.b16 %v2796
    %v3856 = vunpack.c.l.b16 %v2797
    %v3857 = vunpack.c.l.b16 %v2798
    %v3858 = vunpack.c.h.b16 %v2798
    %v3859 = vunpack.c.l.b16 %v2799
    %v3860 = vunpack.c.h.b16 %v2799
    %v3861 = vunpack.c.l.b16 %v2800
    %v3862 = vunpack.c.h.b16 %v2800
    %v3863 = vunpack.c.l.b16 %v2801
    %v3864 = vunpack.c.l.b16 %v2802
    %v3865 = vunpack.c.h.b16 %v2802
    %v3866 = vunpack.c.l.b16 %v2803
    %v3867 = vunpack.c.h.b16 %v2803
    %v3868 = vunpack.c.l.b16 %v2804
    %v3869 = vunpack.c.h.b16 %v2804
    %v3870 = vunpack.c.l.b16 %v2805
    %v3871 = vunpack.c.l.b16 %v2806
    %v3872 = vunpack.c.h.b16 %v2806
    %v3873 = vunpack.c.l.b16 %v2807
    %v3874 = vunpack.c.h.b16 %v2807
    %v3875 = vunpack.c.l.b16 %v2808
    %v3876 = vunpack.c.h.b16 %v2808
    %v3877 = vunpack.c.l.b16 %v2809
    %v3878 = vunpack.c.l.b16 %v2810
    %v3879 = vunpack.c.h.b16 %v2810
    %v3880 = vunpack.c.l.b16 %v2811
    %v3881 = vunpack.c.h.b16 %v2811
    %v3882 = vunpack.c.l.b16 %v2812
    %v3883 = vunpack.c.h.b16 %v2812
    %v3884 = vunpack.c.l.b16 %v2813
    %v3885 = vunpack.c.l.b16 %v2814
    %v3886 = vunpack.c.h.b16 %v2814
    %v3887 = vunpack.c.l.b16 %v2815
    %v3888 = vunpack.c.h.b16 %v2815
    %v3889 = vunpack.c.l.b16 %v2816
    %v3890 = vunpack.c.h.b16 %v2816
    %v3891 = vunpack.c.l.b16 %v2817
    %v3892 = vunpack.c.l.b16 %v2818
    %v3893 = vunpack.c.h.b16 %v2818
    %v3894 = vunpack.c.l.b16 %v2819
    %v3895 = vunpack.c.h.b16 %v2819
    %v3896 = vunpack.c.l.b16 %v2820
    %v3897 = vunpack.c.h.b16 %v2820
    %v3898 = vunpack.c.l.b16 %v2821
    %v3899 = vunpack.c.l.b16 %v2822
    %v3900 = vunpack.c.h.b16 %v2822
    %v3901 = vunpack.c.l.b16 %v2823
    %v3902 = vunpack.c.h.b16 %v2823
    %v3903 = vunpack.c.l.b16 %v2824
    %v3904 = vunpack.c.h.b16 %v2824
    %v3905 = vunpack.c.l.b16 %v2825
    %v3906 = vunpack.c.l.b16 %v2826
    %v3907 = vunpack.c.h.b16 %v2826
    %v3908 = vunpack.c.l.b16 %v2827
    %v3909 = vunpack.c.h.b16 %v2827
    %v3910 = vunpack.c.l.b16 %v2828
    %v3911 = vunpack.c.h.b16 %v2828
    %v3912 = vunpack.c.l.b16 %v2829
    %v3913 = vunpack.c.l.b16 %v2830
    %v3914 = vunpack.c.h.b16 %v2830
    %v3915 = vunpack.c.l.b16 %v2831
    %v3916 = vunpack.c.h.b16 %v2831
    %v3917 = vunpack.c.l.b16 %v2832
    %v3918 = vunpack.c.h.b16 %v2832
    %v3919 = vunpack.c.l.b16 %v2833
    %v3920 = vunpack.c.l.b16 %v2834
    %v3921 = vunpack.c.h.b16 %v2834
    %v3922 = vunpack.c.l.b16 %v2835
    %v3923 = vunpack.c.h.b16 %v2835
    %v3924 = vunpack.c.l.b16 %v2836
    %v3925 = vunpack.c.h.b16 %v2836
    %v3926 = vunpack.c.l.b16 %v2837
    %v3927 = vunpack.c.l.b16 %v2838
    %v3928 = vunpack.c.h.b16 %v2838
    %v3929 = vunpack.c.l.b16 %v2839
    %v3930 = vunpack.c.h.b16 %v2839
    %v3931 = vunpack.c.l.b16 %v2840
    %v3932 = vunpack.c.h.b16 %v2840
    %v3933 = vunpack.c.l.b16 %v2841
    %v3934 = vunpack.c.l.b16 %v2842
    %v3935 = vunpack.c.h.b16 %v2842
    %v3936 = vunpack.c.l.b16 %v2843
    %v3937 = vunpack.c.h.b16 %v2843
    %v3938 = vunpack.c.l.b16 %v2844
    %v3939 = vunpack.c.h.b16 %v2844
    %v3940 = vunpack.c.l.b16 %v2845
    %v3941 = vunpack.c.l.b16 %v2846
    %v3942 = vunpack.c.h.b16 %v2846
    %v3943 = vunpack.c.l.b16 %v2847
    %v3944 = vunpack.c.h.b16 %v2847
    %v3945 = vunpack.c.l.b16 %v2848
    %v3946 = vunpack.c.h.b16 %v2848
    %v3947 = vunpack.c.l.b16 %v2849
    %v3948 = vunpack.c.l.b16 %v2850
    %v3949 = vunpack.c.h.b16 %v2850
    %v3950 = vunpack.c.l.b16 %v2851
    %v3951 = vunpack.c.h.b16 %v2851
    %v3952 = vunpack.c.l.b16 %v2852
    %v3953 = vunpack.c.h.b16 %v2852
    %v3954 = vunpack.c.l.b16 %v2853
    %v3955 = vunpack.c.l.b16 %v2854
    %v3956 = vunpack.c.h.b16 %v2854
    %v3957 = vunpack.c.l.b16 %v2855
    %v3958 = vunpack.c.h.b16 %v2855
    %v3959 = vunpack.c.l.b16 %v2856
    %v3960 = vunpack.c.h.b16 %v2856
    %v3961 = vunpack.c.l.b16 %v2857
    %v3962 = vunpack.c.l.b16 %v2858
    %v3963 = vunpack.c.h.b16 %v2858
    %v3964 = vunpack.c.l.b16 %v2859
    %v3965 = vunpack.c.h.b16 %v2859
    %v3966 = vunpack.c.l.b16 %v2860
    %v3967 = vunpack.c.h.b16 %v2860
    %v3968 = vunpack.c.l.b16 %v2861
    %v3969 = vunpack.c.l.b16 %v2862
    %v3970 = vunpack.c.h.b16 %v2862
    %v3971 = vunpack.c.l.b16 %v2863
    %v3972 = vunpack.c.h.b16 %v2863
    %v3973 = vunpack.c.l.b16 %v2864
    %v3974 = vunpack.c.h.b16 %v2864
    %v3975 = vunpack.c.l.b16 %v2865
    %v3976 = vunpack.c.l.b16 %v2866
    %v3977 = vunpack.c.h.b16 %v2866
    %v3978 = vunpack.c.l.b16 %v2867
    %v3979 = vunpack.c.h.b16 %v2867
    %v3980 = vunpack.c.l.b16 %v2868
    %v3981 = vunpack.c.h.b16 %v2868
    %v3982 = vunpack.c.l.b16 %v2869
    %v3983 = vunpack.c.l.b16 %v2870
    %v3984 = vunpack.c.h.b16 %v2870
    %v3985 = vunpack.c.l.b16 %v2871
    %v3986 = vunpack.c.h.b16 %v2871
    %v3987 = vunpack.c.l.b16 %v2872
    %v3988 = vunpack.c.h.b16 %v2872
    %v3989 = vunpack.c.l.b16 %v2873
    %v3990 = vunpack.c.l.b16 %v2874
    %v3991 = vunpack.c.h.b16 %v2874
    %v3992 = vunpack.c.l.b16 %v2875
    %v3993 = vunpack.c.h.b16 %v2875
    %v3994 = vunpack.c.l.b16 %v2876
    %v3995 = vunpack.c.h.b16 %v2876
    %v3996 = vunpack.c.l.b16 %v2877
    %v3997 = vunpack.c.l.b16 %v2878
    %v3998 = vunpack.c.h.b16 %v2878
    %v3999 = vunpack.c.l.b16 %v2879
    %v4000 = vunpack.c.h.b16 %v2879
    %v4001 = vunpack.c.l.b16 %v2880
    %v4002 = vunpack.c.h.b16 %v2880
    %v4003 = vunpack.c.l.b16 %v2881
    %v4004 = vunpack.c.l.b16 %v2882
    %v4005 = vunpack.c.h.b16 %v2882
    %v4006 = vunpack.c.l.b16 %v2883
    %v4007 = vunpack.c.h.b16 %v2883
    %v4008 = vunpack.c.l.b16 %v2884
    %v4009 = vunpack.c.h.b16 %v2884
    %v4010 = vunpack.c.l.b16 %v2885
    %v4011 = vunpack.c.l.b16 %v2886
    %v4012 = vunpack.c.h.b16 %v2886
    %v4013 = vunpack.c.l.b16 %v2887
    %v4014 = vunpack.c.h.b16 %v2887
    %v4015 = vunpack.c.l.b16 %v2888
    %v4016 = vunpack.c.h.b16 %v2888
    %v4017 = vunpack.c.l.b16 %v2889
    %v4018 = vunpack.c.l.b16 %v2890
    %v4019 = vunpack.c.h.b16 %v2890
    %v4020 = vunpack.c.l.b16 %v2891
    %v4021 = vunpack.c.h.b16 %v2891
    %v4022 = vunpack.c.l.b16 %v2892
    %v4023 = vunpack.c.h.b16 %v2892
    %v4024 = vunpack.c.l.b16 %v2893
    %v4025 = vunpack.c.l.b16 %v2894
    %v4026 = vunpack.c.h.b16 %v2894
    %v4027 = vunpack.c.l.b16 %v2895
    %v4028 = vunpack.c.h.b16 %v2895
    %v4029 = vunpack.c.l.b16 %v2896
    %v4030 = vunpack.c.h.b16 %v2896
    %v4031 = vunpack.c.l.b16 %v2897
    %v4032 = vunpack.c.l.b16 %v2898
    %v4033 = vunpack.c.h.b16 %v2898
    %v4034 = vunpack.c.l.b16 %v2899
    %v4035 = vunpack.c.h.b16 %v2899
    %v4036 = vunpack.c.l.b16 %v2900
    %v4037 = vunpack.c.h.b16 %v2900
    %v4038 = vunpack.c.l.b16 %v2901
    %v4039 = vpack.c.b16 %v3346, %v3339
    %v4040 = vpack.c.b16 %v3347, %v3340
    %v4041 = vpack.c.b16 %v3348, %v3341
    %v4042 = vpack.c.b16 %v3349, %v3342
    %v4043 = vpack.c.b16 %v3350, %v3343
    %v4044 = vpack.c.b16 %v3351, %v3344
    %v4045 = vpack.c.b16 %v3352, %v3345
    %v4046 = vpack.c.b16 %v3360, %v3353
    %v4047 = vpack.c.b16 %v3361, %v3354
    %v4048 = vpack.c.b16 %v3362, %v3355
    %v4049 = vpack.c.b16 %v3363, %v3356
    %v4050 = vpack.c.b16 %v3364, %v3357
    %v4051 = vpack.c.b16 %v3365, %v3358
    %v4052 = vpack.c.b16 %v3366, %v3359
    %v4053 = vpack.c.b16 %v3374, %v3367
    %v4054 = vpack.c.b16 %v3375, %v3368
    %v4055 = vpack.c.b16 %v3376, %v3369
    %v4056 = vpack.c.b16 %v3377, %v3370
    %v4057 = vpack.c.b16 %v3378, %v3371
    %v4058 = vpack.c.b16 %v3379, %v3372
    %v4059 = vpack.c.b16 %v3380, %v3373
    %v4060 = vpack.c.b16 %v3388, %v3381
    %v4061 = vpack.c.b16 %v3389, %v3382
    %v4062 = vpack.c.b16 %v3390, %v3383
    %v4063 = vpack.c.b16 %v3391, %v3384
    %v4064 = vpack.c.b16 %v3392, %v3385
    %v4065 = vpack.c.b16 %v3393, %v3386
    %v4066 = vpack.c.b16 %v3394, %v3387
    %v4067 = vpack.c.b16 %v3402, %v3395
    %v4068 = vpack.c.b16 %v3403, %v3396
    %v4069 = vpack.c.b16 %v3404, %v3397
    %v4070 = vpack.c.b16 %v3405, %v3398
    %v4071 = vpack.c.b16 %v3406, %v3399
    %v4072 = vpack.c.b16 %v3407, %v3400
    %v4073 = vpack.c.b16 %v3408, %v3401
    %v4074 = vpack.c.b16 %v3416, %v3409
    %v4075 = vpack.c.b16 %v3417, %v3410
    %v4076 = vpack.c.b16 %v3418, %v3411
    %v4077 = vpack.c.b16 %v3419, %v3412
    %v4078 = vpack.c.b16 %v3420, %v3413
    %v4079 = vpack.c.b16 %v3421, %v3414
    %v4080 = vpack.c.b16 %v3422, %v3415
    %v4081 = vpack.c.b16 %v3430, %v3423
    %v4082 = vpack.c.b16 %v3431, %v3424
    %v4083 = vpack.c.b16 %v3432, %v3425
    %v4084 = vpack.c.b16 %v3433, %v3426
    %v4085 = vpack.c.b16 %v3434, %v3427
    %v4086 = vpack.c.b16 %v3435, %v3428
    %v4087 = vpack.c.b16 %v3436, %v3429
    %v4088 = vpack.c.b16 %v3444, %v3437
    %v4089 = vpack.c.b16 %v3445, %v3438
    %v4090 = vpack.c.b16 %v3446, %v3439
    %v4091 = vpack.c.b16 %v3447, %v3440
    %v4092 = vpack.c.b16 %v3448, %v3441
    %v4093 = vpack.c.b16 %v3449, %v3442
    %v4094 = vpack.c.b16 %v3450, %v3443
    %v4095 = vpack.c.b16 %v3458, %v3451
    %v4096 = vpack.c.b16 %v3459, %v3452
    %v4097 = vpack.c.b16 %v3460, %v3453
    %v4098 = vpack.c.b16 %v3461, %v3454
    %v4099 = vpack.c.b16 %v3462, %v3455
    %v4100 = vpack.c.b16 %v3463, %v3456
    %v4101 = vpack.c.b16 %v3464, %v3457
    %v4102 = vpack.c.b16 %v3472, %v3465
    %v4103 = vpack.c.b16 %v3473, %v3466
    %v4104 = vpack.c.b16 %v3474, %v3467
    %v4105 = vpack.c.b16 %v3475, %v3468
    %v4106 = vpack.c.b16 %v3476, %v3469
    %v4107 = vpack.c.b16 %v3477, %v3470
    %v4108 = vpack.c.b16 %v3478, %v3471
    %v4109 = vpack.c.b16 %v3486, %v3479
    %v4110 = vpack.c.b16 %v3487, %v3480
    %v4111 = vpack.c.b16 %v3488, %v3481
    %v4112 = vpack.c.b16 %v3489, %v3482
    %v4113 = vpack.c.b16 %v3490, %v3483
    %v4114 = vpack.c.b16 %v3491, %v3484
    %v4115 = vpack.c.b16 %v3492, %v3485
    %v4116 = vpack.c.b16 %v3500, %v3493
    %v4117 = vpack.c.b16 %v3501, %v3494
    %v4118 = vpack.c.b16 %v3502, %v3495
    %v4119 = vpack.c.b16 %v3503, %v3496
    %v4120 = vpack.c.b16 %v3504, %v3497
    %v4121 = vpack.c.b16 %v3505, %v3498
    %v4122 = vpack.c.b16 %v3506, %v3499
    %v4123 = vpack.c.b16 %v3514, %v3507
    %v4124 = vpack.c.b16 %v3515, %v3508
    %v4125 = vpack.c.b16 %v3516, %v3509
    %v4126 = vpack.c.b16 %v3517, %v3510
    %v4127 = vpack.c.b16 %v3518, %v3511
    %v4128 = vpack.c.b16 %v3519, %v3512
    %v4129 = vpack.c.b16 %v3520, %v3513
    %v4130 = vpack.c.b16 %v3528, %v3521
    %v4131 = vpack.c.b16 %v3529, %v3522
    %v4132 = vpack.c.b16 %v3530, %v3523
    %v4133 = vpack.c.b16 %v3531, %v3524
    %v4134 = vpack.c.b16 %v3532, %v3525
    %v4135 = vpack.c.b16 %v3533, %v3526
    %v4136 = vpack.c.b16 %v3534, %v3527
    %v4137 = vpack.c.b16 %v3542, %v3535
    %v4138 = vpack.c.b16 %v3543, %v3536
    %v4139 = vpack.c.b16 %v3544, %v3537
    %v4140 = vpack.c.b16 %v3545, %v3538
    %v4141 = vpack.c.b16 %v3546, %v3539
    %v4142 = vpack.c.b16 %v3547, %v3540
    %v4143 = vpack.c.b16 %v3548, %v3541
    %v4144 = vpack.c.b16 %v3556, %v3549
    %v4145 = vpack.c.b16 %v3557, %v3550
    %v4146 = vpack.c.b16 %v3558, %v3551
    %v4147 = vpack.c.b16 %v3559, %v3552
    %v4148 = vpack.c.b16 %v3560, %v3553
    %v4149 = vpack.c.b16 %v3561, %v3554
    %v4150 = vpack.c.b16 %v3562, %v3555
    %v4151 = vpack.c.b16 %v3570, %v3563
    %v4152 = vpack.c.b16 %v3571, %v3564
    %v4153 = vpack.c.b16 %v3572, %v3565
    %v4154 = vpack.c.b16 %v3573, %v3566
    %v4155 = vpack.c.b16 %v3574, %v3567
    %v4156 = vpack.c.b16 %v3575, %v3568
    %v4157 = vpack.c.b16 %v3576, %v3569
    %v4158 = vpack.c.b16 %v3584, %v3577
    %v4159 = vpack.c.b16 %v3585, %v3578
    %v4160 = vpack.c.b16 %v3586, %v3579
    %v4161 = vpack.c.b16 %v3587, %v3580
    %v4162 = vpack.c.b16 %v3588, %v3581
    %v4163 = vpack.c.b16 %v3589, %v3582
    %v4164 = vpack.c.b16 %v3590, %v3583
    %v4165 = vpack.c.b16 %v3598, %v3591
    %v4166 = vpack.c.b16 %v3599, %v3592
    %v4167 = vpack.c.b16 %v3600, %v3593
    %v4168 = vpack.c.b16 %v3601, %v3594
    %v4169 = vpack.c.b16 %v3602, %v3595
    %v4170 = vpack.c.b16 %v3603, %v3596
    %v4171 = vpack.c.b16 %v3604, %v3597
    %v4172 = vpack.c.b16 %v3612, %v3605
    %v4173 = vpack.c.b16 %v3613, %v3606
    %v4174 = vpack.c.b16 %v3614, %v3607
    %v4175 = vpack.c.b16 %v3615, %v3608
    %v4176 = vpack.c.b16 %v3616, %v3609
    %v4177 = vpack.c.b16 %v3617, %v3610
    %v4178 = vpack.c.b16 %v3618, %v3611
    %v4179 = vpack.c.b16 %v3626, %v3619
    %v4180 = vpack.c.b16 %v3627, %v3620
    %v4181 = vpack.c.b16 %v3628, %v3621
    %v4182 = vpack.c.b16 %v3629, %v3622
    %v4183 = vpack.c.b16 %v3630, %v3623
    %v4184 = vpack.c.b16 %v3631, %v3624
    %v4185 = vpack.c.b16 %v3632, %v3625
    %v4186 = vpack.c.b16 %v3640, %v3633
    %v4187 = vpack.c.b16 %v3641, %v3634
    %v4188 = vpack.c.b16 %v3642, %v3635
    %v4189 = vpack.c.b16 %v3643, %v3636
    %v4190 = vpack.c.b16 %v3644, %v3637
    %v4191 = vpack.c.b16 %v3645, %v3638
    %v4192 = vpack.c.b16 %v3646, %v3639
    %v4193 = vpack.c.b16 %v3654, %v3647
    %v4194 = vpack.c.b16 %v3655, %v3648
    %v4195 = vpack.c.b16 %v3656, %v3649
    %v4196 = vpack.c.b16 %v3657, %v3650
    %v4197 = vpack.c.b16 %v3658, %v3651
    %v4198 = vpack.c.b16 %v3659, %v3652
    %v4199 = vpack.c.b16 %v3660, %v3653
    %v4200 = vpack.c.b16 %v3668, %v3661
    %v4201 = vpack.c.b16 %v3669, %v3662
    %v4202 = vpack.c.b16 %v3670, %v3663
    %v4203 = vpack.c.b16 %v3671, %v3664
    %v4204 = vpack.c.b16 %v3672, %v3665
    %v4205 = vpack.c.b16 %v3673, %v3666
    %v4206 = vpack.c.b16 %v3674, %v3667
    %v4207 = vpack.c.b16 %v3682, %v3675
    %v4208 = vpack.c.b16 %v3683, %v3676
    %v4209 = vpack.c.b16 %v3684, %v3677
    %v4210 = vpack.c.b16 %v3685, %v3678
    %v4211 = vpack.c.b16 %v3686, %v3679
    %v4212 = vpack.c.b16 %v3687, %v3680
    %v4213 = vpack.c.b16 %v3688, %v3681
    %v4214 = vpack.c.b16 %v3696, %v3689
    %v4215 = vpack.c.b16 %v3697, %v3690
    %v4216 = vpack.c.b16 %v3698, %v3691
    %v4217 = vpack.c.b16 %v3699, %v3692
    %v4218 = vpack.c.b16 %v3700, %v3693
    %v4219 = vpack.c.b16 %v3701, %v3694
    %v4220 = vpack.c.b16 %v3702, %v3695
    %v4221 = vpack.c.b16 %v3710, %v3703
    %v4222 = vpack.c.b16 %v3711, %v3704
    %v4223 = vpack.c.b16 %v3712, %v3705
    %v4224 = vpack.c.b16 %v3713, %v3706
    %v4225 = vpack.c.b16 %v3714, %v3707
    %v4226 = vpack.c.b16 %v3715, %v3708
    %v4227 = vpack.c.b16 %v3716, %v3709
    %v4228 = vpack.c.b16 %v3724, %v3717
    %v4229 = vpack.c.b16 %v3725, %v3718
    %v4230 = vpack.c.b16 %v3726, %v3719
    %v4231 = vpack.c.b16 %v3727, %v3720
    %v4232 = vpack.c.b16 %v3728, %v3721
    %v4233 = vpack.c.b16 %v3729, %v3722
    %v4234 = vpack.c.b16 %v3730, %v3723
    %v4235 = vpack.c.b16 %v3738, %v3731
    %v4236 = vpack.c.b16 %v3739, %v3732
    %v4237 = vpack.c.b16 %v3740, %v3733
    %v4238 = vpack.c.b16 %v3741, %v3734
    %v4239 = vpack.c.b16 %v3742, %v3735
    %v4240 = vpack.c.b16 %v3743, %v3736
    %v4241 = vpack.c.b16 %v3744, %v3737
    %v4242 = vpack.c.b16 %v3752, %v3745
    %v4243 = vpack.c.b16 %v3753, %v3746
    %v4244 = vpack.c.b16 %v3754, %v3747
    %v4245 = vpack.c.b16 %v3755, %v3748
    %v4246 = vpack.c.b16 %v3756, %v3749
    %v4247 = vpack.c.b16 %v3757, %v3750
    %v4248 = vpack.c.b16 %v3758, %v3751
    %v4249 = vpack.c.b16 %v3766, %v3759
    %v4250 = vpack.c.b16 %v3767, %v3760
    %v4251 = vpack.c.b16 %v3768, %v3761
    %v4252 = vpack.c.b16 %v3769, %v3762
    %v4253 = vpack.c.b16 %v3770, %v3763
    %v4254 = vpack.c.b16 %v3771, %v3764
    %v4255 = vpack.c.b16 %v3772, %v3765
    %v4256 = vpack.c.b16 %v3780, %v3773
    %v4257 = vpack.c.b16 %v3781, %v3774
    %v4258 = vpack.c.b16 %v3782, %v3775
    %v4259 = vpack.c.b16 %v3783, %v3776
    %v4260 = vpack.c.b16 %v3784, %v3777
    %v4261 = vpack.c.b16 %v3785, %v3778
    %v4262 = vpack.c.b16 %v3786, %v3779
    %v4263 = vpack.c.b16 %v3794, %v3787
    %v4264 = vpack.c.b16 %v3795, %v3788
    %v4265 = vpack.c.b16 %v3796, %v3789
    %v4266 = vpack.c.b16 %v3797, %v3790
    %v4267 = vpack.c.b16 %v3798, %v3791
    %v4268 = vpack.c.b16 %v3799, %v3792
    %v4269 = vpack.c.b16 %v3800, %v3793
    %v4270 = vpack.c.b16 %v3808, %v3801
    %v4271 = vpack.c.b16 %v3809, %v3802
    %v4272 = vpack.c.b16 %v3810, %v3803
    %v4273 = vpack.c.b16 %v3811, %v3804
    %v4274 = vpack.c.b16 %v3812, %v3805
    %v4275 = vpack.c.b16 %v3813, %v3806
    %v4276 = vpack.c.b16 %v3814, %v3807
    %v4277 = vpack.c.b16 %v3822, %v3815
    %v4278 = vpack.c.b16 %v3823, %v3816
    %v4279 = vpack.c.b16 %v3824, %v3817
    %v4280 = vpack.c.b16 %v3825, %v3818
    %v4281 = vpack.c.b16 %v3826, %v3819
    %v4282 = vpack.c.b16 %v3827, %v3820
    %v4283 = vpack.c.b16 %v3828, %v3821
    %v4284 = vpack.c.b16 %v3836, %v3829
    %v4285 = vpack.c.b16 %v3837, %v3830
    %v4286 = vpack.c.b16 %v3838, %v3831
    %v4287 = vpack.c.b16 %v3839, %v3832
    %v4288 = vpack.c.b16 %v3840, %v3833
    %v4289 = vpack.c.b16 %v3841, %v3834
    %v4290 = vpack.c.b16 %v3842, %v3835
    %v4291 = vpack.c.b16 %v3850, %v3843
    %v4292 = vpack.c.b16 %v3851, %v3844
    %v4293 = vpack.c.b16 %v3852, %v3845
    %v4294 = vpack.c.b16 %v3853, %v3846
    %v4295 = vpack.c.b16 %v3854, %v3847
    %v4296 = vpack.c.b16 %v3855, %v3848
    %v4297 = vpack.c.b16 %v3856, %v3849
    %v4298 = vpack.c.b16 %v3864, %v3857
    %v4299 = vpack.c.b16 %v3865, %v3858
    %v4300 = vpack.c.b16 %v3866, %v3859
    %v4301 = vpack.c.b16 %v3867, %v3860
    %v4302 = vpack.c.b16 %v3868, %v3861
    %v4303 = vpack.c.b16 %v3869, %v3862
    %v4304 = vpack.c.b16 %v3870, %v3863
    %v4305 = vpack.c.b16 %v3878, %v3871
    %v4306 = vpack.c.b16 %v3879, %v3872
    %v4307 = vpack.c.b16 %v3880, %v3873
    %v4308 = vpack.c.b16 %v3881, %v3874
    %v4309 = vpack.c.b16 %v3882, %v3875
    %v4310 = vpack.c.b16 %v3883, %v3876
    %v4311 = vpack.c.b16 %v3884, %v3877
    %v4312 = vpack.c.b16 %v3892, %v3885
    %v4313 = vpack.c.b16 %v3893, %v3886
    %v4314 = vpack.c.b16 %v3894, %v3887
    %v4315 = vpack.c.b16 %v3895, %v3888
    %v4316 = vpack.c.b16 %v3896, %v3889
    %v4317 = vpack.c.b16 %v3897, %v3890
    %v4318 = vpack.c.b16 %v3898, %v3891
    %v4319 = vpack.c.b16 %v3906, %v3899
    %v4320 = vpack.c.b16 %v3907, %v3900
    %v4321 = vpack.c.b16 %v3908, %v3901
    %v4322 = vpack.c.b16 %v3909, %v3902
    %v4323 = vpack.c.b16 %v3910, %v3903
    %v4324 = vpack.c.b16 %v3911, %v3904
    %v4325 = vpack.c.b16 %v3912, %v3905
    %v4326 = vpack.c.b16 %v3920, %v3913
    %v4327 = vpack.c.b16 %v3921, %v3914
    %v4328 = vpack.c.b16 %v3922, %v3915
    %v4329 = vpack.c.b16 %v3923, %v3916
    %v4330 = vpack.c.b16 %v3924, %v3917
    %v4331 = vpack.c.b16 %v3925, %v3918
    %v4332 = vpack.c.b16 %v3926, %v3919
    %v4333 = vpack.c.b16 %v3934, %v3927
    %v4334 = vpack.c.b16 %v3935, %v3928
    %v4335 = vpack.c.b16 %v3936, %v3929
    %v4336 = vpack.c.b16 %v3937, %v3930
    %v4337 = vpack.c.b16 %v3938, %v3931
    %v4338 = vpack.c.b16 %v3939, %v3932
    %v4339 = vpack.c.b16 %v3940, %v3933
    %v4340 = vpack.c.b16 %v3948, %v3941
    %v4341 = vpack.c.b16 %v3949, %v3942
    %v4342 = vpack.c.b16 %v3950, %v3943
    %v4343 = vpack.c.b16 %v3951, %v3944
    %v4344 = vpack.c.b16 %v3952, %v3945
    %v4345 = vpack.c.b16 %v3953, %v3946
    %v4346 = vpack.c.b16 %v3954, %v3947
    %v4347 = vpack.c.b16 %v3962, %v3955
    %v4348 = vpack.c.b16 %v3963, %v3956
    %v4349 = vpack.c.b16 %v3964, %v3957
    %v4350 = vpack.c.b16 %v3965, %v3958
    %v4351 = vpack.c.b16 %v3966, %v3959
    %v4352 = vpack.c.b16 %v3967, %v3960
    %v4353 = vpack.c.b16 %v3968, %v3961
    %v4354 = vpack.c.b16 %v3976, %v3969
    %v4355 = vpack.c.b16 %v3977, %v3970
    %v4356 = vpack.c.b16 %v3978, %v3971
    %v4357 = vpack.c.b16 %v3979, %v3972
    %v4358 = vpack.c.b16 %v3980, %v3973
    %v4359 = vpack.c.b16 %v3981, %v3974
    %v4360 = vpack.c.b16 %v3982, %v3975
    %v4361 = vpack.c.b16 %v3990, %v3983
    %v4362 = vpack.c.b16 %v3991, %v3984
    %v4363 = vpack.c.b16 %v3992, %v3985
    %v4364 = vpack.c.b16 %v3993, %v3986
    %v4365 = vpack.c.b16 %v3994, %v3987
    %v4366 = vpack.c.b16 %v3995, %v3988
    %v4367 = vpack.c.b16 %v3996, %v3989
    %v4368 = vpack.c.b16 %v4004, %v3997
    %v4369 = vpack.c.b16 %v4005, %v3998
    %v4370 = vpack.c.b16 %v4006, %v3999
    %v4371 = vpack.c.b16 %v4007, %v4000
    %v4372 = vpack.c.b16 %v4008, %v4001
    %v4373 = vpack.c.b16 %v4009, %v4002
    %v4374 = vpack.c.b16 %v4010, %v4003
    %v4375 = vpack.c.b16 %v4018, %v4011
    %v4376 = vpack.c.b16 %v4019, %v4012
    %v4377 = vpack.c.b16 %v4020, %v4013
    %v4378 = vpack.c.b16 %v4021, %v4014
    %v4379 = vpack.c.b16 %v4022, %v4015
    %v4380 = vpack.c.b16 %v4023, %v4016
    %v4381 = vpack.c.b16 %v4024, %v4017
    %v4382 = vpack.c.b16 %v4032, %v4025
    %v4383 = vpack.c.b16 %v4033, %v4026
    %v4384 = vpack.c.b16 %v4034, %v4027
    %v4385 = vpack.c.b16 %v4035, %v4028
    %v4386 = vpack.c.b16 %v4036, %v4029
    %v4387 = vpack.c.b16 %v4037, %v4030
    %v4388 = vpack.c.b16 %v4038, %v4031
    %vm4739 = vcmask 261120
    %v4741 = vsel %vm4739, %v2501, 0
    %4743 = vmatprep.subr.bf16.mxu0 %v4040
    %4744 = vmatpush1.bf16.msra.mxu0 %v4039
    %4745 = vmatprep.subr.bf16.mxu0 %v4047
    %4746 = vmatpush1.bf16.msra.mxu0 %v4046
    %4747 = vmatprep.subr.bf16.mxu0 %v4054
    %4748 = vmatpush1.bf16.msra.mxu0 %v4053
    %4749 = vmatprep.subr.bf16.mxu0 %v4061
    %4750 = vmatpush1.bf16.msra.mxu0 %v4060
    %4751 = vmatprep.subr.bf16.mxu0 %v4068
    %4752 = vmatpush1.bf16.msra.mxu0 %v4067
    %4753 = vmatprep.subr.bf16.mxu0 %v4075
    %4754 = vmatpush1.bf16.msra.mxu0 %v4074
    %4755 = vmatprep.subr.bf16.mxu0 %v4082
    %4756 = vmatpush1.bf16.msra.mxu0 %v4081
    %4757 = vmatprep.subr.bf16.mxu0 %v4089
    %4758 = vmatpush1.bf16.msra.mxu0 %v4088
    %4759 = vmatprep.subr.bf16.mxu0 %v4096
    %4760 = vmatpush1.bf16.msra.mxu0 %v4095
    %4761 = vmatprep.subr.bf16.mxu0 %v4103
    %4762 = vmatpush1.bf16.msra.mxu0 %v4102
    %4763 = vmatprep.subr.bf16.mxu0 %v4110
    %4764 = vmatpush1.bf16.msra.mxu0 %v4109
    %4765 = vmatprep.subr.bf16.mxu0 %v4117
    %4766 = vmatpush1.bf16.msra.mxu0 %v4116
    %4767 = vmatprep.subr.bf16.mxu0 %v4124
    %4768 = vmatpush1.bf16.msra.mxu0 %v4123
    %4769 = vmatprep.subr.bf16.mxu0 %v4131
    %4770 = vmatpush1.bf16.msra.mxu0 %v4130
    %4771 = vmatprep.subr.bf16.mxu0 %v4138
    %4772 = vmatpush1.bf16.msra.mxu0 %v4137
    %4773 = vmatprep.subr.bf16.mxu0 %v4145
    %4774 = vmatpush1.bf16.msra.mxu0 %v4144
    %4775 = vmatprep.mubr.bf16.mxu0 %v2496
    %4776 = vmatmul.mubr.bf16.gmra.mrb[0].mxu0 %v2495
    %v4777 = vpop.f32.mrb[0].mxu0
    %v4778 = vadd.f32 %v2907, %v4777
    %v4779 = vpop.f32.mrb[0].mxu0
    %v4780 = vadd.f32 %v2911, %v4779
    %v4781 = vpop.f32.mrb[0].mxu0
    %v4782 = vpop.f32.mrb[0].mxu0
    %4783 = vdwg.mxu0
    %4784 = vmatprep.subr.bf16.mxu0 %v4152
    %4785 = vmatpush1.bf16.msra.mxu0 %v4151
    %4786 = vmatprep.subr.bf16.mxu0 %v4159
    %4787 = vmatpush1.bf16.msra.mxu0 %v4158
    %4788 = vmatprep.subr.bf16.mxu0 %v4166
    %4789 = vmatpush1.bf16.msra.mxu0 %v4165
    %4790 = vmatprep.subr.bf16.mxu0 %v4173
    %4791 = vmatpush1.bf16.msra.mxu0 %v4172
    %4792 = vmatprep.subr.bf16.mxu0 %v4180
    %4793 = vmatpush1.bf16.msra.mxu0 %v4179
    %4794 = vmatprep.subr.bf16.mxu0 %v4187
    %4795 = vmatpush1.bf16.msra.mxu0 %v4186
    %4796 = vmatprep.subr.bf16.mxu0 %v4194
    %4797 = vmatpush1.bf16.msra.mxu0 %v4193
    %4798 = vmatprep.subr.bf16.mxu0 %v4201
    %4799 = vmatpush1.bf16.msra.mxu0 %v4200
    %4800 = vmatprep.subr.bf16.mxu0 %v4208
    %4801 = vmatpush1.bf16.msra.mxu0 %v4207
    %4802 = vmatprep.subr.bf16.mxu0 %v4215
    %4803 = vmatpush1.bf16.msra.mxu0 %v4214
    %4804 = vmatprep.subr.bf16.mxu0 %v4222
    %4805 = vmatpush1.bf16.msra.mxu0 %v4221
    %4806 = vmatprep.subr.bf16.mxu0 %v4229
    %4807 = vmatpush1.bf16.msra.mxu0 %v4228
    %4808 = vmatprep.subr.bf16.mxu0 %v4236
    %4809 = vmatpush1.bf16.msra.mxu0 %v4235
    %4810 = vmatprep.subr.bf16.mxu0 %v4243
    %4811 = vmatpush1.bf16.msra.mxu0 %v4242
    %4812 = vmatprep.subr.bf16.mxu0 %v4250
    %4813 = vmatpush1.bf16.msra.mxu0 %v4249
    %4814 = vmatprep.subr.bf16.mxu0 %v4257
    %4815 = vmatpush1.bf16.msra.mxu0 %v4256
    %4816 = vmatprep.mubr.bf16.mxu0 %v2498
    %4817 = vmatmul.mubr.bf16.gmra.mrb[0].mxu0 %v2497
    %v4818 = vpop.f32.mrb[0].mxu0
    %v4819 = vadd.f32 %v4778, %v4818
    %v4820 = vpop.f32.mrb[0].mxu0
    %v4821 = vadd.f32 %v4780, %v4820
    %v4822 = vpop.f32.mrb[0].mxu0
    %v4823 = vpop.f32.mrb[0].mxu0
    %4824 = vdwg.mxu0
    %4825 = vmatprep.subr.bf16.mxu0 %v4264
    %4826 = vmatpush1.bf16.msra.mxu0 %v4263
    %4827 = vmatprep.subr.bf16.mxu0 %v4271
    %4828 = vmatpush1.bf16.msra.mxu0 %v4270
    %4829 = vmatprep.subr.bf16.mxu0 %v4278
    %4830 = vmatpush1.bf16.msra.mxu0 %v4277
    %4831 = vmatprep.subr.bf16.mxu0 %v4285
    %4832 = vmatpush1.bf16.msra.mxu0 %v4284
    %4833 = vmatprep.subr.bf16.mxu0 %v4292
    %4834 = vmatpush1.bf16.msra.mxu0 %v4291
    %4835 = vmatprep.subr.bf16.mxu0 %v4299
    %4836 = vmatpush1.bf16.msra.mxu0 %v4298
    %4837 = vmatprep.subr.bf16.mxu0 %v4306
    %4838 = vmatpush1.bf16.msra.mxu0 %v4305
    %4839 = vmatprep.subr.bf16.mxu0 %v4313
    %4840 = vmatpush1.bf16.msra.mxu0 %v4312
    %4841 = vmatprep.subr.bf16.mxu0 %v4320
    %4842 = vmatpush1.bf16.msra.mxu0 %v4319
    %4843 = vmatprep.subr.bf16.mxu0 %v4327
    %4844 = vmatpush1.bf16.msra.mxu0 %v4326
    %4845 = vmatprep.subr.bf16.mxu0 %v4334
    %4846 = vmatpush1.bf16.msra.mxu0 %v4333
    %4847 = vmatprep.subr.bf16.mxu0 %v4341
    %4848 = vmatpush1.bf16.msra.mxu0 %v4340
    %4849 = vmatprep.subr.bf16.mxu0 %v4348
    %4850 = vmatpush1.bf16.msra.mxu0 %v4347
    %4851 = vmatprep.subr.bf16.mxu0 %v4355
    %4852 = vmatpush1.bf16.msra.mxu0 %v4354
    %4853 = vmatprep.subr.bf16.mxu0 %v4362
    %4854 = vmatpush1.bf16.msra.mxu0 %v4361
    %4855 = vmatprep.subr.bf16.mxu0 %v4369
    %4856 = vmatpush1.bf16.msra.mxu0 %v4368
    %4857 = vmatprep.mubr.bf16.mxu0 %v2500
    %4858 = vmatmul.mubr.bf16.gmra.mrb[0].mxu0 %v2499
    %v4859 = vpop.f32.mrb[0].mxu0
    %v4860 = vadd.f32 %v4819, %v4859
    %v4861 = vpop.f32.mrb[0].mxu0
    %v4862 = vadd.f32 %v4821, %v4861
    %v4863 = vpop.f32.mrb[0].mxu0
    %v4864 = vpop.f32.mrb[0].mxu0
    %4865 = vdwg.mxu0
    %4866 = vmatprep.subr.bf16.mxu0 %v4376
    %4867 = vmatpush1.bf16.msra.mxu0 %v4375
    %4868 = vmatprep.subr.bf16.mxu0 %v4383
    %4869 = vmatpush1.bf16.msra.mxu0 %v4382
    %4870 = vmatprep.subr.bf16.mxu0 0
    %4871 = vmatpush1.bf16.msra.mxu0 0
    %4872 = vmatprep.subr.bf16.mxu0 0
    %4873 = vmatpush1.bf16.msra.mxu0 0
    %4874 = vmatprep.subr.bf16.mxu0 0
    %4875 = vmatpush1.bf16.msra.mxu0 0
    %4876 = vmatprep.subr.bf16.mxu0 0
    %4877 = vmatpush1.bf16.msra.mxu0 0
    %4878 = vmatprep.subr.bf16.mxu0 0
    %4879 = vmatpush1.bf16.msra.mxu0 0
    %4880 = vmatprep.subr.bf16.mxu0 0
    %4881 = vmatpush1.bf16.msra.mxu0 0
    %4882 = vmatprep.subr.bf16.mxu0 0
    %4883 = vmatpush1.bf16.msra.mxu0 0
    %4884 = vmatprep.subr.bf16.mxu0 0
    %4885 = vmatpush1.bf16.msra.mxu0 0
    %4886 = vmatprep.subr.bf16.mxu0 0
    %4887 = vmatpush1.bf16.msra.mxu0 0
    %4888 = vmatprep.subr.bf16.mxu0 0
    %4889 = vmatpush1.bf16.msra.mxu0 0
    %4890 = vmatprep.subr.bf16.mxu0 0
    %4891 = vmatpush1.bf16.msra.mxu0 0
    %4892 = vmatprep.subr.bf16.mxu0 0
    %4893 = vmatpush1.bf16.msra.mxu0 0
    %4894 = vmatprep.subr.bf16.mxu0 0
    %4895 = vmatpush1.bf16.msra.mxu0 0
    %4896 = vmatprep.subr.bf16.mxu0 0
    %4897 = vmatpush1.bf16.msra.mxu0 0
    %4898 = vmatprep.mubr.bf16.mxu0 0
    %4899 = vmatmul.mubr.bf16.gmra.mrb[0].mxu0 %v4741
    %v4900 = vpop.f32.mrb[0].mxu0
    %v4901 = vadd.f32 %v4860, %v4900
    %v4902 = vpop.f32.mrb[0].mxu0
    %v4903 = vadd.f32 %v4862, %v4902
    %v4904 = vpop.f32.mrb[0].mxu0
    %v4905 = vpop.f32.mrb[0].mxu0
    %4906 = vdwg.mxu0
    %4907 = vmatprep.subr.bf16.mxu0 %v4042
    %4908 = vmatpush1.bf16.msra.mxu0 %v4041
    %4909 = vmatprep.subr.bf16.mxu0 %v4049
    %4910 = vmatpush1.bf16.msra.mxu0 %v4048
    %4911 = vmatprep.subr.bf16.mxu0 %v4056
    %4912 = vmatpush1.bf16.msra.mxu0 %v4055
    %4913 = vmatprep.subr.bf16.mxu0 %v4063
    %4914 = vmatpush1.bf16.msra.mxu0 %v4062
    %4915 = vmatprep.subr.bf16.mxu0 %v4070
    %4916 = vmatpush1.bf16.msra.mxu0 %v4069
    %4917 = vmatprep.subr.bf16.mxu0 %v4077
    %4918 = vmatpush1.bf16.msra.mxu0 %v4076
    %4919 = vmatprep.subr.bf16.mxu0 %v4084
    %4920 = vmatpush1.bf16.msra.mxu0 %v4083
    %4921 = vmatprep.subr.bf16.mxu0 %v4091
    %4922 = vmatpush1.bf16.msra.mxu0 %v4090
    %4923 = vmatprep.subr.bf16.mxu0 %v4098
    %4924 = vmatpush1.bf16.msra.mxu0 %v4097
    %4925 = vmatprep.subr.bf16.mxu0 %v4105
    %4926 = vmatpush1.bf16.msra.mxu0 %v4104
    %4927 = vmatprep.subr.bf16.mxu0 %v4112
    %4928 = vmatpush1.bf16.msra.mxu0 %v4111
    %4929 = vmatprep.subr.bf16.mxu0 %v4119
    %4930 = vmatpush1.bf16.msra.mxu0 %v4118
    %4931 = vmatprep.subr.bf16.mxu0 %v4126
    %4932 = vmatpush1.bf16.msra.mxu0 %v4125
    %4933 = vmatprep.subr.bf16.mxu0 %v4133
    %4934 = vmatpush1.bf16.msra.mxu0 %v4132
    %4935 = vmatprep.subr.bf16.mxu0 %v4140
    %4936 = vmatpush1.bf16.msra.mxu0 %v4139
    %4937 = vmatprep.subr.bf16.mxu0 %v4147
    %4938 = vmatpush1.bf16.msra.mxu0 %v4146
    %4939 = vmatprep.mubr.bf16.mxu0 %v2496
    %4940 = vmatmul.mubr.bf16.gmra.mrb[0].mxu0 %v2495
    %v4941 = vpop.f32.mrb[0].mxu0
    %v4942 = vadd.f32 %v2915, %v4941
    %v4943 = vpop.f32.mrb[0].mxu0
    %v4944 = vadd.f32 %v2919, %v4943
    %v4945 = vpop.f32.mrb[0].mxu0
    %v4946 = vpop.f32.mrb[0].mxu0
    %4947 = vdwg.mxu0
    %4948 = vmatprep.subr.bf16.mxu0 %v4154
    %4949 = vmatpush1.bf16.msra.mxu0 %v4153
    %4950 = vmatprep.subr.bf16.mxu0 %v4161
    %4951 = vmatpush1.bf16.msra.mxu0 %v4160
    %4952 = vmatprep.subr.bf16.mxu0 %v4168
    %4953 = vmatpush1.bf16.msra.mxu0 %v4167
    %4954 = vmatprep.subr.bf16.mxu0 %v4175
    %4955 = vmatpush1.bf16.msra.mxu0 %v4174
    %4956 = vmatprep.subr.bf16.mxu0 %v4182
    %4957 = vmatpush1.bf16.msra.mxu0 %v4181
    %4958 = vmatprep.subr.bf16.mxu0 %v4189
    %4959 = vmatpush1.bf16.msra.mxu0 %v4188
    %4960 = vmatprep.subr.bf16.mxu0 %v4196
    %4961 = vmatpush1.bf16.msra.mxu0 %v4195
    %4962 = vmatprep.subr.bf16.mxu0 %v4203
    %4963 = vmatpush1.bf16.msra.mxu0 %v4202
    %4964 = vmatprep.subr.bf16.mxu0 %v4210
    %4965 = vmatpush1.bf16.msra.mxu0 %v4209
    %4966 = vmatprep.subr.bf16.mxu0 %v4217
    %4967 = vmatpush1.bf16.msra.mxu0 %v4216
    %4968 = vmatprep.subr.bf16.mxu0 %v4224
    %4969 = vmatpush1.bf16.msra.mxu0 %v4223
    %4970 = vmatprep.subr.bf16.mxu0 %v4231
    %4971 = vmatpush1.bf16.msra.mxu0 %v4230
    %4972 = vmatprep.subr.bf16.mxu0 %v4238
    %4973 = vmatpush1.bf16.msra.mxu0 %v4237
    %4974 = vmatprep.subr.bf16.mxu0 %v4245
    %4975 = vmatpush1.bf16.msra.mxu0 %v4244
    %4976 = vmatprep.subr.bf16.mxu0 %v4252
    %4977 = vmatpush1.bf16.msra.mxu0 %v4251
    %4978 = vmatprep.subr.bf16.mxu0 %v4259
    %4979 = vmatpush1.bf16.msra.mxu0 %v4258
    %4980 = vmatprep.mubr.bf16.mxu0 %v2498
    %4981 = vmatmul.mubr.bf16.gmra.mrb[0].mxu0 %v2497
    %v4982 = vpop.f32.mrb[0].mxu0
    %v4983 = vadd.f32 %v4942, %v4982
    %v4984 = vpop.f32.mrb[0].mxu0
    %v4985 = vadd.f32 %v4944, %v4984
    %v4986 = vpop.f32.mrb[0].mxu0
    %v4987 = vpop.f32.mrb[0].mxu0
    %4988 = vdwg.mxu0
    %4989 = vmatprep.subr.bf16.mxu0 %v4266
    %4990 = vmatpush1.bf16.msra.mxu0 %v4265
    %4991 = vmatprep.subr.bf16.mxu0 %v4273
    %4992 = vmatpush1.bf16.msra.mxu0 %v4272
    %4993 = vmatprep.subr.bf16.mxu0 %v4280
    %4994 = vmatpush1.bf16.msra.mxu0 %v4279
    %4995 = vmatprep.subr.bf16.mxu0 %v4287
    %4996 = vmatpush1.bf16.msra.mxu0 %v4286
    %4997 = vmatprep.subr.bf16.mxu0 %v4294
    %4998 = vmatpush1.bf16.msra.mxu0 %v4293
    %4999 = vmatprep.subr.bf16.mxu0 %v4301
    %5000 = vmatpush1.bf16.msra.mxu0 %v4300
    %5001 = vmatprep.subr.bf16.mxu0 %v4308
    %5002 = vmatpush1.bf16.msra.mxu0 %v4307
    %5003 = vmatprep.subr.bf16.mxu0 %v4315
    %5004 = vmatpush1.bf16.msra.mxu0 %v4314
    %5005 = vmatprep.subr.bf16.mxu0 %v4322
    %5006 = vmatpush1.bf16.msra.mxu0 %v4321
    %5007 = vmatprep.subr.bf16.mxu0 %v4329
    %5008 = vmatpush1.bf16.msra.mxu0 %v4328
    %5009 = vmatprep.subr.bf16.mxu0 %v4336
    %5010 = vmatpush1.bf16.msra.mxu0 %v4335
    %5011 = vmatprep.subr.bf16.mxu0 %v4343
    %5012 = vmatpush1.bf16.msra.mxu0 %v4342
    %5013 = vmatprep.subr.bf16.mxu0 %v4350
    %5014 = vmatpush1.bf16.msra.mxu0 %v4349
    %5015 = vmatprep.subr.bf16.mxu0 %v4357
    %5016 = vmatpush1.bf16.msra.mxu0 %v4356
    %5017 = vmatprep.subr.bf16.mxu0 %v4364
    %5018 = vmatpush1.bf16.msra.mxu0 %v4363
    %5019 = vmatprep.subr.bf16.mxu0 %v4371
    %5020 = vmatpush1.bf16.msra.mxu0 %v4370
    %5021 = vmatprep.mubr.bf16.mxu0 %v2500
    %5022 = vmatmul.mubr.bf16.gmra.mrb[0].mxu0 %v2499
    %v5023 = vpop.f32.mrb[0].mxu0
    %v5024 = vadd.f32 %v4983, %v5023
    %v5025 = vpop.f32.mrb[0].mxu0
    %v5026 = vadd.f32 %v4985, %v5025
    %v5027 = vpop.f32.mrb[0].mxu0
    %v5028 = vpop.f32.mrb[0].mxu0
    %5029 = vdwg.mxu0
    %5030 = vmatprep.subr.bf16.mxu0 %v4378
    %5031 = vmatpush1.bf16.msra.mxu0 %v4377
    %5032 = vmatprep.subr.bf16.mxu0 %v4385
    %5033 = vmatpush1.bf16.msra.mxu0 %v4384
    %5034 = vmatprep.subr.bf16.mxu0 0
    %5035 = vmatpush1.bf16.msra.mxu0 0
    %5036 = vmatprep.subr.bf16.mxu0 0
    %5037 = vmatpush1.bf16.msra.mxu0 0
    %5038 = vmatprep.subr.bf16.mxu0 0
    %5039 = vmatpush1.bf16.msra.mxu0 0
    %5040 = vmatprep.subr.bf16.mxu0 0
    %5041 = vmatpush1.bf16.msra.mxu0 0
    %5042 = vmatprep.subr.bf16.mxu0 0
    %5043 = vmatpush1.bf16.msra.mxu0 0
    %5044 = vmatprep.subr.bf16.mxu0 0
    %5045 = vmatpush1.bf16.msra.mxu0 0
    %5046 = vmatprep.subr.bf16.mxu0 0
    %5047 = vmatpush1.bf16.msra.mxu0 0
    %5048 = vmatprep.subr.bf16.mxu0 0
    %5049 = vmatpush1.bf16.msra.mxu0 0
    %5050 = vmatprep.subr.bf16.mxu0 0
    %5051 = vmatpush1.bf16.msra.mxu0 0
    %5052 = vmatprep.subr.bf16.mxu0 0
    %5053 = vmatpush1.bf16.msra.mxu0 0
    %5054 = vmatprep.subr.bf16.mxu0 0
    %5055 = vmatpush1.bf16.msra.mxu0 0
    %5056 = vmatprep.subr.bf16.mxu0 0
    %5057 = vmatpush1.bf16.msra.mxu0 0
    %5058 = vmatprep.subr.bf16.mxu0 0
    %5059 = vmatpush1.bf16.msra.mxu0 0
    %5060 = vmatprep.subr.bf16.mxu0 0
    %5061 = vmatpush1.bf16.msra.mxu0 0
    %5062 = vmatprep.mubr.bf16.mxu0 0
    %5063 = vmatmul.mubr.bf16.gmra.mrb[0].mxu0 %v4741
    %v5064 = vpop.f32.mrb[0].mxu0
    %v5065 = vadd.f32 %v5024, %v5064
    %v5066 = vpop.f32.mrb[0].mxu0
    %v5067 = vadd.f32 %v5026, %v5066
    %v5068 = vpop.f32.mrb[0].mxu0
    %v5069 = vpop.f32.mrb[0].mxu0
    %5070 = vdwg.mxu0
    %5071 = vmatprep.subr.bf16.mxu0 %v4044
    %5072 = vmatpush1.bf16.msra.mxu0 %v4043
    %5073 = vmatprep.subr.bf16.mxu0 %v4051
    %5074 = vmatpush1.bf16.msra.mxu0 %v4050
    %5075 = vmatprep.subr.bf16.mxu0 %v4058
    %5076 = vmatpush1.bf16.msra.mxu0 %v4057
    %5077 = vmatprep.subr.bf16.mxu0 %v4065
    %5078 = vmatpush1.bf16.msra.mxu0 %v4064
    %5079 = vmatprep.subr.bf16.mxu0 %v4072
    %5080 = vmatpush1.bf16.msra.mxu0 %v4071
    %5081 = vmatprep.subr.bf16.mxu0 %v4079
    %5082 = vmatpush1.bf16.msra.mxu0 %v4078
    %5083 = vmatprep.subr.bf16.mxu0 %v4086
    %5084 = vmatpush1.bf16.msra.mxu0 %v4085
    %5085 = vmatprep.subr.bf16.mxu0 %v4093
    %5086 = vmatpush1.bf16.msra.mxu0 %v4092
    %5087 = vmatprep.subr.bf16.mxu0 %v4100
    %5088 = vmatpush1.bf16.msra.mxu0 %v4099
    %5089 = vmatprep.subr.bf16.mxu0 %v4107
    %5090 = vmatpush1.bf16.msra.mxu0 %v4106
    %5091 = vmatprep.subr.bf16.mxu0 %v4114
    %5092 = vmatpush1.bf16.msra.mxu0 %v4113
    %5093 = vmatprep.subr.bf16.mxu0 %v4121
    %5094 = vmatpush1.bf16.msra.mxu0 %v4120
    %5095 = vmatprep.subr.bf16.mxu0 %v4128
    %5096 = vmatpush1.bf16.msra.mxu0 %v4127
    %5097 = vmatprep.subr.bf16.mxu0 %v4135
    %5098 = vmatpush1.bf16.msra.mxu0 %v4134
    %5099 = vmatprep.subr.bf16.mxu0 %v4142
    %5100 = vmatpush1.bf16.msra.mxu0 %v4141
    %5101 = vmatprep.subr.bf16.mxu0 %v4149
    %5102 = vmatpush1.bf16.msra.mxu0 %v4148
    %5103 = vmatprep.mubr.bf16.mxu0 %v2496
    %5104 = vmatmul.mubr.bf16.gmra.mrb[0].mxu0 %v2495
    %v5105 = vpop.f32.mrb[0].mxu0
    %v5106 = vadd.f32 %v2923, %v5105
    %v5107 = vpop.f32.mrb[0].mxu0
    %v5108 = vadd.f32 %v2927, %v5107
    %v5109 = vpop.f32.mrb[0].mxu0
    %v5110 = vpop.f32.mrb[0].mxu0
    %5111 = vdwg.mxu0
    %5112 = vmatprep.subr.bf16.mxu0 %v4156
    %5113 = vmatpush1.bf16.msra.mxu0 %v4155
    %5114 = vmatprep.subr.bf16.mxu0 %v4163
    %5115 = vmatpush1.bf16.msra.mxu0 %v4162
    %5116 = vmatprep.subr.bf16.mxu0 %v4170
    %5117 = vmatpush1.bf16.msra.mxu0 %v4169
    %5118 = vmatprep.subr.bf16.mxu0 %v4177
    %5119 = vmatpush1.bf16.msra.mxu0 %v4176
    %5120 = vmatprep.subr.bf16.mxu0 %v4184
    %5121 = vmatpush1.bf16.msra.mxu0 %v4183
    %5122 = vmatprep.subr.bf16.mxu0 %v4191
    %5123 = vmatpush1.bf16.msra.mxu0 %v4190
    %5124 = vmatprep.subr.bf16.mxu0 %v4198
    %5125 = vmatpush1.bf16.msra.mxu0 %v4197
    %5126 = vmatprep.subr.bf16.mxu0 %v4205
    %5127 = vmatpush1.bf16.msra.mxu0 %v4204
    %5128 = vmatprep.subr.bf16.mxu0 %v4212
    %5129 = vmatpush1.bf16.msra.mxu0 %v4211
    %5130 = vmatprep.subr.bf16.mxu0 %v4219
    %5131 = vmatpush1.bf16.msra.mxu0 %v4218
    %5132 = vmatprep.subr.bf16.mxu0 %v4226
    %5133 = vmatpush1.bf16.msra.mxu0 %v4225
    %5134 = vmatprep.subr.bf16.mxu0 %v4233
    %5135 = vmatpush1.bf16.msra.mxu0 %v4232
    %5136 = vmatprep.subr.bf16.mxu0 %v4240
    %5137 = vmatpush1.bf16.msra.mxu0 %v4239
    %5138 = vmatprep.subr.bf16.mxu0 %v4247
    %5139 = vmatpush1.bf16.msra.mxu0 %v4246
    %5140 = vmatprep.subr.bf16.mxu0 %v4254
    %5141 = vmatpush1.bf16.msra.mxu0 %v4253
    %5142 = vmatprep.subr.bf16.mxu0 %v4261
    %5143 = vmatpush1.bf16.msra.mxu0 %v4260
    %5144 = vmatprep.mubr.bf16.mxu0 %v2498
    %5145 = vmatmul.mubr.bf16.gmra.mrb[0].mxu0 %v2497
    %v5146 = vpop.f32.mrb[0].mxu0
    %v5147 = vadd.f32 %v5106, %v5146
    %v5148 = vpop.f32.mrb[0].mxu0
    %v5149 = vadd.f32 %v5108, %v5148
    %v5150 = vpop.f32.mrb[0].mxu0
    %v5151 = vpop.f32.mrb[0].mxu0
    %5152 = vdwg.mxu0
    %5153 = vmatprep.subr.bf16.mxu0 %v4268
    %5154 = vmatpush1.bf16.msra.mxu0 %v4267
    %5155 = vmatprep.subr.bf16.mxu0 %v4275
    %5156 = vmatpush1.bf16.msra.mxu0 %v4274
    %5157 = vmatprep.subr.bf16.mxu0 %v4282
    %5158 = vmatpush1.bf16.msra.mxu0 %v4281
    %5159 = vmatprep.subr.bf16.mxu0 %v4289
    %5160 = vmatpush1.bf16.msra.mxu0 %v4288
    %5161 = vmatprep.subr.bf16.mxu0 %v4296
    %5162 = vmatpush1.bf16.msra.mxu0 %v4295
    %5163 = vmatprep.subr.bf16.mxu0 %v4303
    %5164 = vmatpush1.bf16.msra.mxu0 %v4302
    %5165 = vmatprep.subr.bf16.mxu0 %v4310
    %5166 = vmatpush1.bf16.msra.mxu0 %v4309
    %5167 = vmatprep.subr.bf16.mxu0 %v4317
    %5168 = vmatpush1.bf16.msra.mxu0 %v4316
    %5169 = vmatprep.subr.bf16.mxu0 %v4324
    %5170 = vmatpush1.bf16.msra.mxu0 %v4323
    %5171 = vmatprep.subr.bf16.mxu0 %v4331
    %5172 = vmatpush1.bf16.msra.mxu0 %v4330
    %5173 = vmatprep.subr.bf16.mxu0 %v4338
    %5174 = vmatpush1.bf16.msra.mxu0 %v4337
    %5175 = vmatprep.subr.bf16.mxu0 %v4345
    %5176 = vmatpush1.bf16.msra.mxu0 %v4344
    %5177 = vmatprep.subr.bf16.mxu0 %v4352
    %5178 = vmatpush1.bf16.msra.mxu0 %v4351
    %5179 = vmatprep.subr.bf16.mxu0 %v4359
    %5180 = vmatpush1.bf16.msra.mxu0 %v4358
    %5181 = vmatprep.subr.bf16.mxu0 %v4366
    %5182 = vmatpush1.bf16.msra.mxu0 %v4365
    %5183 = vmatprep.subr.bf16.mxu0 %v4373
    %5184 = vmatpush1.bf16.msra.mxu0 %v4372
    %5185 = vmatprep.mubr.bf16.mxu0 %v2500
    %5186 = vmatmul.mubr.bf16.gmra.mrb[0].mxu0 %v2499
    %v5187 = vpop.f32.mrb[0].mxu0
    %v5188 = vadd.f32 %v5147, %v5187
    %v5189 = vpop.f32.mrb[0].mxu0
    %v5190 = vadd.f32 %v5149, %v5189
    %v5191 = vpop.f32.mrb[0].mxu0
    %v5192 = vpop.f32.mrb[0].mxu0
    %5193 = vdwg.mxu0
    %5194 = vmatprep.subr.bf16.mxu0 %v4380
    %5195 = vmatpush1.bf16.msra.mxu0 %v4379
    %5196 = vmatprep.subr.bf16.mxu0 %v4387
    %5197 = vmatpush1.bf16.msra.mxu0 %v4386
    %5198 = vmatprep.subr.bf16.mxu0 0
    %5199 = vmatpush1.bf16.msra.mxu0 0
    %5200 = vmatprep.subr.bf16.mxu0 0
    %5201 = vmatpush1.bf16.msra.mxu0 0
    %5202 = vmatprep.subr.bf16.mxu0 0
    %5203 = vmatpush1.bf16.msra.mxu0 0
    %5204 = vmatprep.subr.bf16.mxu0 0
    %5205 = vmatpush1.bf16.msra.mxu0 0
    %5206 = vmatprep.subr.bf16.mxu0 0
    %5207 = vmatpush1.bf16.msra.mxu0 0
    %5208 = vmatprep.subr.bf16.mxu0 0
    %5209 = vmatpush1.bf16.msra.mxu0 0
    %5210 = vmatprep.subr.bf16.mxu0 0
    %5211 = vmatpush1.bf16.msra.mxu0 0
    %5212 = vmatprep.subr.bf16.mxu0 0
    %5213 = vmatpush1.bf16.msra.mxu0 0
    %5214 = vmatprep.subr.bf16.mxu0 0
    %5215 = vmatpush1.bf16.msra.mxu0 0
    %5216 = vmatprep.subr.bf16.mxu0 0
    %5217 = vmatpush1.bf16.msra.mxu0 0
    %5218 = vmatprep.subr.bf16.mxu0 0
    %5219 = vmatpush1.bf16.msra.mxu0 0
    %5220 = vmatprep.subr.bf16.mxu0 0
    %5221 = vmatpush1.bf16.msra.mxu0 0
    %5222 = vmatprep.subr.bf16.mxu0 0
    %5223 = vmatpush1.bf16.msra.mxu0 0
    %5224 = vmatprep.subr.bf16.mxu0 0
    %5225 = vmatpush1.bf16.msra.mxu0 0
    %5226 = vmatprep.mubr.bf16.mxu0 0
    %5227 = vmatmul.mubr.bf16.gmra.mrb[0].mxu0 %v4741
    %v5228 = vpop.f32.mrb[0].mxu0
    %v5229 = vadd.f32 %v5188, %v5228
    %v5230 = vpop.f32.mrb[0].mxu0
    %v5231 = vadd.f32 %v5190, %v5230
    %v5232 = vpop.f32.mrb[0].mxu0
    %v5233 = vpop.f32.mrb[0].mxu0
    %5234 = vdwg.mxu0
    %5235 = vmatprep.subr.bf16.mxu0 0
    %5236 = vmatpush1.bf16.msra.mxu0 %v4045
    %5237 = vmatprep.subr.bf16.mxu0 0
    %5238 = vmatpush1.bf16.msra.mxu0 %v4052
    %5239 = vmatprep.subr.bf16.mxu0 0
    %5240 = vmatpush1.bf16.msra.mxu0 %v4059
    %5241 = vmatprep.subr.bf16.mxu0 0
    %5242 = vmatpush1.bf16.msra.mxu0 %v4066
    %5243 = vmatprep.subr.bf16.mxu0 0
    %5244 = vmatpush1.bf16.msra.mxu0 %v4073
    %5245 = vmatprep.subr.bf16.mxu0 0
    %5246 = vmatpush1.bf16.msra.mxu0 %v4080
    %5247 = vmatprep.subr.bf16.mxu0 0
    %5248 = vmatpush1.bf16.msra.mxu0 %v4087
    %5249 = vmatprep.subr.bf16.mxu0 0
    %5250 = vmatpush1.bf16.msra.mxu0 %v4094
    %5251 = vmatprep.subr.bf16.mxu0 0
    %5252 = vmatpush1.bf16.msra.mxu0 %v4101
    %5253 = vmatprep.subr.bf16.mxu0 0
    %5254 = vmatpush1.bf16.msra.mxu0 %v4108
    %5255 = vmatprep.subr.bf16.mxu0 0
    %5256 = vmatpush1.bf16.msra.mxu0 %v4115
    %5257 = vmatprep.subr.bf16.mxu0 0
    %5258 = vmatpush1.bf16.msra.mxu0 %v4122
    %5259 = vmatprep.subr.bf16.mxu0 0
    %5260 = vmatpush1.bf16.msra.mxu0 %v4129
    %5261 = vmatprep.subr.bf16.mxu0 0
    %5262 = vmatpush1.bf16.msra.mxu0 %v4136
    %5263 = vmatprep.subr.bf16.mxu0 0
    %5264 = vmatpush1.bf16.msra.mxu0 %v4143
    %5265 = vmatprep.subr.bf16.mxu0 0
    %5266 = vmatpush1.bf16.msra.mxu0 %v4150
    %5267 = vmatprep.mubr.bf16.mxu0 %v2496
    %5268 = vmatmul.mubr.bf16.gmra.mrb[0].mxu0 %v2495
    %v5269 = vpop.f32.mrb[0].mxu0
    %v5270 = vadd.f32 %v2931, %v5269
    %v5271 = vpop.f32.mrb[0].mxu0
    %v5272 = vpop.f32.mrb[0].mxu0
    %v5273 = vpop.f32.mrb[0].mxu0
    %5274 = vdwg.mxu0
    %5275 = vmatprep.subr.bf16.mxu0 0
    %5276 = vmatpush1.bf16.msra.mxu0 %v4157
    %5277 = vmatprep.subr.bf16.mxu0 0
    %5278 = vmatpush1.bf16.msra.mxu0 %v4164
    %5279 = vmatprep.subr.bf16.mxu0 0
    %5280 = vmatpush1.bf16.msra.mxu0 %v4171
    %5281 = vmatprep.subr.bf16.mxu0 0
    %5282 = vmatpush1.bf16.msra.mxu0 %v4178
    %5283 = vmatprep.subr.bf16.mxu0 0
    %5284 = vmatpush1.bf16.msra.mxu0 %v4185
    %5285 = vmatprep.subr.bf16.mxu0 0
    %5286 = vmatpush1.bf16.msra.mxu0 %v4192
    %5287 = vmatprep.subr.bf16.mxu0 0
    %5288 = vmatpush1.bf16.msra.mxu0 %v4199
    %5289 = vmatprep.subr.bf16.mxu0 0
    %5290 = vmatpush1.bf16.msra.mxu0 %v4206
    %5291 = vmatprep.subr.bf16.mxu0 0
    %5292 = vmatpush1.bf16.msra.mxu0 %v4213
    %5293 = vmatprep.subr.bf16.mxu0 0
    %5294 = vmatpush1.bf16.msra.mxu0 %v4220
    %5295 = vmatprep.subr.bf16.mxu0 0
    %5296 = vmatpush1.bf16.msra.mxu0 %v4227
    %5297 = vmatprep.subr.bf16.mxu0 0
    %5298 = vmatpush1.bf16.msra.mxu0 %v4234
    %5299 = vmatprep.subr.bf16.mxu0 0
    %5300 = vmatpush1.bf16.msra.mxu0 %v4241
    %5301 = vmatprep.subr.bf16.mxu0 0
    %5302 = vmatpush1.bf16.msra.mxu0 %v4248
    %5303 = vmatprep.subr.bf16.mxu0 0
    %5304 = vmatpush1.bf16.msra.mxu0 %v4255
    %5305 = vmatprep.subr.bf16.mxu0 0
    %5306 = vmatpush1.bf16.msra.mxu0 %v4262
    %5307 = vmatprep.mubr.bf16.mxu0 %v2498
    %5308 = vmatmul.mubr.bf16.gmra.mrb[0].mxu0 %v2497
    %v5309 = vpop.f32.mrb[0].mxu0
    %v5310 = vadd.f32 %v5270, %v5309
    %v5311 = vpop.f32.mrb[0].mxu0
    %v5312 = vpop.f32.mrb[0].mxu0
    %v5313 = vpop.f32.mrb[0].mxu0
    %5314 = vdwg.mxu0
    %5315 = vmatprep.subr.bf16.mxu0 0
    %5316 = vmatpush1.bf16.msra.mxu0 %v4269
    %5317 = vmatprep.subr.bf16.mxu0 0
    %5318 = vmatpush1.bf16.msra.mxu0 %v4276
    %5319 = vmatprep.subr.bf16.mxu0 0
    %5320 = vmatpush1.bf16.msra.mxu0 %v4283
    %5321 = vmatprep.subr.bf16.mxu0 0
    %5322 = vmatpush1.bf16.msra.mxu0 %v4290
    %5323 = vmatprep.subr.bf16.mxu0 0
    %5324 = vmatpush1.bf16.msra.mxu0 %v4297
    %5325 = vmatprep.subr.bf16.mxu0 0
    %5326 = vmatpush1.bf16.msra.mxu0 %v4304
    %5327 = vmatprep.subr.bf16.mxu0 0
    %5328 = vmatpush1.bf16.msra.mxu0 %v4311
    %5329 = vmatprep.subr.bf16.mxu0 0
    %5330 = vmatpush1.bf16.msra.mxu0 %v4318
    %5331 = vmatprep.subr.bf16.mxu0 0
    %5332 = vmatpush1.bf16.msra.mxu0 %v4325
    %5333 = vmatprep.subr.bf16.mxu0 0
    %5334 = vmatpush1.bf16.msra.mxu0 %v4332
    %5335 = vmatprep.subr.bf16.mxu0 0
    %5336 = vmatpush1.bf16.msra.mxu0 %v4339
    %5337 = vmatprep.subr.bf16.mxu0 0
    %5338 = vmatpush1.bf16.msra.mxu0 %v4346
    %5339 = vmatprep.subr.bf16.mxu0 0
    %5340 = vmatpush1.bf16.msra.mxu0 %v4353
    %5341 = vmatprep.subr.bf16.mxu0 0
    %5342 = vmatpush1.bf16.msra.mxu0 %v4360
    %5343 = vmatprep.subr.bf16.mxu0 0
    %5344 = vmatpush1.bf16.msra.mxu0 %v4367
    %5345 = vmatprep.subr.bf16.mxu0 0
    %5346 = vmatpush1.bf16.msra.mxu0 %v4374
    %5347 = vmatprep.mubr.bf16.mxu0 %v2500
    %5348 = vmatmul.mubr.bf16.gmra.mrb[0].mxu0 %v2499
    %v5349 = vpop.f32.mrb[0].mxu0
    %v5350 = vadd.f32 %v5310, %v5349
    %v5351 = vpop.f32.mrb[0].mxu0
    %v5352 = vpop.f32.mrb[0].mxu0
    %v5353 = vpop.f32.mrb[0].mxu0
    %5354 = vdwg.mxu0
    %5355 = vmatprep.subr.bf16.mxu0 0
    %5356 = vmatpush1.bf16.msra.mxu0 %v4381
    %5357 = vmatprep.subr.bf16.mxu0 0
    %5358 = vmatpush1.bf16.msra.mxu0 %v4388
    %5359 = vmatprep.subr.bf16.mxu0 0
    %5360 = vmatpush1.bf16.msra.mxu0 0
    %5361 = vmatprep.subr.bf16.mxu0 0
    %5362 = vmatpush1.bf16.msra.mxu0 0
    %5363 = vmatprep.subr.bf16.mxu0 0
    %5364 = vmatpush1.bf16.msra.mxu0 0
    %5365 = vmatprep.subr.bf16.mxu0 0
    %5366 = vmatpush1.bf16.msra.mxu0 0
    %5367 = vmatprep.subr.bf16.mxu0 0
    %5368 = vmatpush1.bf16.msra.mxu0 0
    %5369 = vmatprep.subr.bf16.mxu0 0
    %5370 = vmatpush1.bf16.msra.mxu0 0
    %5371 = vmatprep.subr.bf16.mxu0 0
    %5372 = vmatpush1.bf16.msra.mxu0 0
    %5373 = vmatprep.subr.bf16.mxu0 0
    %5374 = vmatpush1.bf16.msra.mxu0 0
    %5375 = vmatprep.subr.bf16.mxu0 0
    %5376 = vmatpush1.bf16.msra.mxu0 0
    %5377 = vmatprep.subr.bf16.mxu0 0
    %5378 = vmatpush1.bf16.msra.mxu0 0
    %5379 = vmatprep.subr.bf16.mxu0 0
    %5380 = vmatpush1.bf16.msra.mxu0 0
    %5381 = vmatprep.subr.bf16.mxu0 0
    %5382 = vmatpush1.bf16.msra.mxu0 0
    %5383 = vmatprep.subr.bf16.mxu0 0
    %5384 = vmatpush1.bf16.msra.mxu0 0
    %5385 = vmatprep.subr.bf16.mxu0 0
    %5386 = vmatpush1.bf16.msra.mxu0 0
    %5387 = vmatprep.mubr.bf16.mxu0 0
    %5388 = vmatmul.mubr.bf16.gmra.mrb[0].mxu0 %v4741
    %v5389 = vpop.f32.mrb[0].mxu0
    %v5390 = vadd.f32 %v5350, %v5389
    %v5391 = vpop.f32.mrb[0].mxu0
    %v5392 = vpop.f32.mrb[0].mxu0
    %v5393 = vpop.f32.mrb[0].mxu0
    %5394 = vdwg.mxu0
    %v5395 = vmax.f32 %v4901, 0.0
    %v5396 = vmax.f32 %v4903, 0.0
    %v5397 = vmax.f32 %v5065, 0.0
    %v5398 = vmax.f32 %v5067, 0.0
    %v5399 = vmax.f32 %v5229, 0.0
    %v5400 = vmax.f32 %v5231, 0.0
    %v5401 = vmax.f32 %v5390, 0.0
    %v5402 = vpack.c.bf16 %v5395, %v5395
    %v5403 = vpack.c.bf16 %v5396, %v5396
    %v5404 = vpack.c.bf16 %v5397, %v5397
    %v5405 = vpack.c.bf16 %v5398, %v5398
    %v5406 = vpack.c.bf16 %v5399, %v5399
    %v5407 = vpack.c.bf16 %v5400, %v5400
    %v5408 = vpack.c.bf16 %v5401, %v5401
    %v5409 = vld [vmem:[#allocation14] sm:$0xf]
    %v5410 = vld [vmem:[#allocation14 + $0x4] sm:$0xf]
    %v5411 = vld [vmem:[#allocation14 + $0x8] sm:$0xf]
    %v5412 = vld [vmem:[#allocation14 + $0xc] sm:$0xf]
    %v5413 = vld [vmem:[#allocation14 + $0x10] sm:$0xf]
    %v5414 = vld [vmem:[#allocation14 + $0x14] sm:$0xf]
    %v5415 = vld [vmem:[#allocation14 + $0x18] sm:$0xf]
    %v5416 = vld [vmem:[#allocation14 + $0x1c] sm:$0xf]
    %v5417 = vld [vmem:[#allocation14 + $0x20] sm:$0xf]
    %v5418 = vld [vmem:[#allocation14 + $0x24] sm:$0xf]
    %v5419 = vld [vmem:[#allocation14 + $0x28] sm:$0xf]
    %v5420 = vld [vmem:[#allocation14 + $0x2c] sm:$0xf]
    %v5421 = vld [vmem:[#allocation14 + $0x30] sm:$0xf]
    %v5422 = vld [vmem:[#allocation14 + $0x34] sm:$0xf]
    %v5423 = vld [vmem:[#allocation14 + $0x38] sm:$0xf]
    %v5424 = vld [vmem:[#allocation14 + $0x3c] sm:$0xf]
    %v5425 = vld [vmem:[#allocation14 + $0x40] sm:$0xf]
    %v5426 = vld [vmem:[#allocation14 + $0x44] sm:$0xf]
    %v5427 = vld [vmem:[#allocation14 + $0x48] sm:$0xf]
    %v5428 = vld [vmem:[#allocation14 + $0x4c] sm:$0xf]
    %v5429 = vld [vmem:[#allocation14 + $0x50] sm:$0xf]
    %v5430 = vld [vmem:[#allocation14 + $0x54] sm:$0xf]
    %v5431 = vld [vmem:[#allocation14 + $0x58] sm:$0xf]
    %v5432 = vld [vmem:[#allocation14 + $0x5c] sm:$0xf]
    %v5433 = vld [vmem:[#allocation14 + $0x60] sm:$0xf]
    %v5434 = vld [vmem:[#allocation14 + $0x64] sm:$0xf]
    %v5435 = vld [vmem:[#allocation14 + $0x68] sm:$0xf]
    %v5436 = vld [vmem:[#allocation14 + $0x6c] sm:$0xf]
    %v5437 = vld [vmem:[#allocation14 + $0x70] sm:$0xf]
    %v5438 = vld [vmem:[#allocation14 + $0x74] sm:$0xf]
    %v5439 = vld [vmem:[#allocation14 + $0x78] sm:$0xf]
    %v5440 = vld [vmem:[#allocation14 + $0x7c] sm:$0xf]
    %v5441 = vld [vmem:[#allocation14 + $0x80] sm:$0xf]
    %v5442 = vld [vmem:[#allocation14 + $0x84] sm:$0xf]
    %v5443 = vld [vmem:[#allocation14 + $0x88] sm:$0xf]
    %v5444 = vld [vmem:[#allocation14 + $0x8c] sm:$0xf]
    %v5445 = vld [vmem:[#allocation14 + $0x90] sm:$0xf]
    %v5446 = vld [vmem:[#allocation14 + $0x94] sm:$0xf]
    %v5447 = vld [vmem:[#allocation14 + $0x98] sm:$0xf]
    %v5448 = vld [vmem:[#allocation14 + $0x9c] sm:$0xf]
    %v5449 = vld [vmem:[#allocation14 + $0xa0] sm:$0xf]
    %v5450 = vld [vmem:[#allocation14 + $0xa4] sm:$0xf]
    %v5451 = vld [vmem:[#allocation14 + $0xa8] sm:$0xf]
    %v5452 = vld [vmem:[#allocation14 + $0xac] sm:$0xf]
    %v5453 = vld [vmem:[#allocation14 + $0xb0] sm:$0xf]
    %v5454 = vld [vmem:[#allocation14 + $0xb4] sm:$0xf]
    %v5455 = vld [vmem:[#allocation14 + $0xb8] sm:$0xf]
    %v5456 = vld [vmem:[#allocation14 + $0xbc] sm:$0xf]
    %v5457 = vld [vmem:[#allocation14 + $0xc0] sm:$0xf]
    %v5458 = vld [vmem:[#allocation14 + $0xc4] sm:$0xf]
    %v5459 = vld [vmem:[#allocation14 + $0xc8] sm:$0xf]
    %v5460 = vld [vmem:[#allocation14 + $0xcc] sm:$0xf]
    %v5461 = vld [vmem:[#allocation14 + $0xd0] sm:$0xf]
    %v5462 = vld [vmem:[#allocation14 + $0xd4] sm:$0xf]
    %v5463 = vld [vmem:[#allocation14 + $0xd8] sm:$0xf]
    %v5464 = vld [vmem:[#allocation14 + $0xdc] sm:$0xf]
    %v5465 = vld [vmem:[#allocation14 + $0xe0] sm:$0xf]
    %v5466 = vld [vmem:[#allocation14 + $0xe4] sm:$0xf]
    %v5467 = vld [vmem:[#allocation14 + $0xe8] sm:$0xf]
    %v5468 = vld [vmem:[#allocation14 + $0xec] sm:$0xf]
    %v5469 = vld [vmem:[#allocation14 + $0xf0] sm:$0xf]
    %v5470 = vld [vmem:[#allocation14 + $0xf4] sm:$0xf]
    %v5471 = vld [vmem:[#allocation14 + $0xf8] sm:$0xf]
    %v5472 = vld [vmem:[#allocation14 + $0xfc] sm:$0xf]
    %v5473 = vld [vmem:[#allocation14 + $0x100] sm:$0xf]
    %v5474 = vld [vmem:[#allocation14 + $0x104] sm:$0xf]
    %v5475 = vld [vmem:[#allocation14 + $0x108] sm:$0xf]
    %v5476 = vld [vmem:[#allocation14 + $0x10c] sm:$0xf]
    %v5477 = vld [vmem:[#allocation14 + $0x110] sm:$0xf]
    %v5478 = vld [vmem:[#allocation14 + $0x114] sm:$0xf]
    %v5479 = vld [vmem:[#allocation14 + $0x118] sm:$0xf]
    %v5480 = vld [vmem:[#allocation14 + $0x11c] sm:$0xf]
    %v5481 = vld [vmem:[#allocation14 + $0x120] sm:$0xf]
    %v5482 = vld [vmem:[#allocation14 + $0x124] sm:$0xf]
    %v5483 = vld [vmem:[#allocation14 + $0x128] sm:$0xf]
    %v5484 = vld [vmem:[#allocation14 + $0x12c] sm:$0xf]
    %v5485 = vld [vmem:[#allocation14 + $0x130] sm:$0xf]
    %v5486 = vld [vmem:[#allocation14 + $0x134] sm:$0xf]
    %v5487 = vld [vmem:[#allocation14 + $0x138] sm:$0xf]
    %v5488 = vld [vmem:[#allocation14 + $0x13c] sm:$0xf]
    %v5489 = vld [vmem:[#allocation14 + $0x140] sm:$0xf]
    %v5490 = vld [vmem:[#allocation14 + $0x144] sm:$0xf]
    %v5491 = vld [vmem:[#allocation14 + $0x148] sm:$0xf]
    %v5492 = vld [vmem:[#allocation14 + $0x14c] sm:$0xf]
    %v5493 = vld [vmem:[#allocation14 + $0x150] sm:$0xf]
    %v5494 = vld [vmem:[#allocation14 + $0x154] sm:$0xf]
    %v5495 = vld [vmem:[#allocation14 + $0x158] sm:$0xf]
    %v5496 = vld [vmem:[#allocation14 + $0x15c] sm:$0xf]
    %v5497 = vld [vmem:[#allocation14 + $0x160] sm:$0xf]
    %v5498 = vld [vmem:[#allocation14 + $0x164] sm:$0xf]
    %v5499 = vld [vmem:[#allocation14 + $0x168] sm:$0xf]
    %v5500 = vld [vmem:[#allocation14 + $0x16c] sm:$0xf]
    %v5501 = vld [vmem:[#allocation14 + $0x170] sm:$0xf]
    %v5502 = vld [vmem:[#allocation14 + $0x174] sm:$0xf]
    %v5503 = vld [vmem:[#allocation14 + $0x178] sm:$0xf]
    %v5504 = vld [vmem:[#allocation14 + $0x17c] sm:$0xf]
    %v5505 = vld [vmem:[#allocation14 + $0x180] sm:$0xf]
    %v5506 = vld [vmem:[#allocation14 + $0x184] sm:$0xf]
    %v5507 = vld [vmem:[#allocation14 + $0x188] sm:$0xf]
    %v5508 = vld [vmem:[#allocation14 + $0x18c] sm:$0xf]
    %v5509 = vld [vmem:[#allocation16] sm:$0x1]
    %v5511 = vlaneseq
    %v5512 = vshrl.u32 %v5511, 7
    %v5513 = vsub.s32 0, %v5512
    %v5514 = vrot.slane %v5509, %v5513
    %v5616 = vunpack.c.l.b16 %v5409
    %v5617 = vunpack.c.l.b16 %v5410
    %v5618 = vunpack.c.l.b16 %v5411
    %v5619 = vunpack.c.l.b16 %v5412
    %v5620 = vunpack.c.l.b16 %v5413
    %v5621 = vunpack.c.l.b16 %v5414
    %v5622 = vunpack.c.l.b16 %v5415
    %v5623 = vunpack.c.l.b16 %v5416
    %v5624 = vunpack.c.l.b16 %v5417
    %v5625 = vunpack.c.l.b16 %v5418
    %v5626 = vunpack.c.l.b16 %v5419
    %v5627 = vunpack.c.l.b16 %v5420
    %v5628 = vunpack.c.l.b16 %v5421
    %v5629 = vunpack.c.l.b16 %v5422
    %v5630 = vunpack.c.l.b16 %v5423
    %v5631 = vunpack.c.l.b16 %v5424
    %v5632 = vunpack.c.l.b16 %v5425
    %v5633 = vunpack.c.l.b16 %v5426
    %v5634 = vunpack.c.l.b16 %v5427
    %v5635 = vunpack.c.l.b16 %v5428
    %v5636 = vunpack.c.l.b16 %v5429
    %v5637 = vunpack.c.l.b16 %v5430
    %v5638 = vunpack.c.l.b16 %v5431
    %v5639 = vunpack.c.l.b16 %v5432
    %v5640 = vunpack.c.l.b16 %v5433
    %v5641 = vunpack.c.l.b16 %v5434
    %v5642 = vunpack.c.l.b16 %v5435
    %v5643 = vunpack.c.l.b16 %v5436
    %v5644 = vunpack.c.l.b16 %v5437
    %v5645 = vunpack.c.l.b16 %v5438
    %v5646 = vunpack.c.l.b16 %v5439
    %v5647 = vunpack.c.l.b16 %v5440
    %v5648 = vunpack.c.l.b16 %v5441
    %v5649 = vunpack.c.l.b16 %v5442
    %v5650 = vunpack.c.l.b16 %v5443
    %v5651 = vunpack.c.l.b16 %v5444
    %v5652 = vunpack.c.l.b16 %v5445
    %v5653 = vunpack.c.l.b16 %v5446
    %v5654 = vunpack.c.l.b16 %v5447
    %v5655 = vunpack.c.l.b16 %v5448
    %v5656 = vunpack.c.l.b16 %v5449
    %v5657 = vunpack.c.l.b16 %v5450
    %v5658 = vunpack.c.l.b16 %v5451
    %v5659 = vunpack.c.l.b16 %v5452
    %v5660 = vunpack.c.l.b16 %v5453
    %v5661 = vunpack.c.l.b16 %v5454
    %v5662 = vunpack.c.l.b16 %v5455
    %v5663 = vunpack.c.l.b16 %v5456
    %v5664 = vunpack.c.l.b16 %v5457
    %v5665 = vunpack.c.l.b16 %v5458
    %v5666 = vunpack.c.l.b16 %v5459
    %v5667 = vunpack.c.l.b16 %v5460
    %v5668 = vunpack.c.l.b16 %v5461
    %v5669 = vunpack.c.l.b16 %v5462
    %v5670 = vunpack.c.l.b16 %v5463
    %v5671 = vunpack.c.l.b16 %v5464
    %v5672 = vunpack.c.l.b16 %v5465
    %v5673 = vunpack.c.l.b16 %v5466
    %v5674 = vunpack.c.l.b16 %v5467
    %v5675 = vunpack.c.l.b16 %v5468
    %v5676 = vunpack.c.l.b16 %v5469
    %v5677 = vunpack.c.l.b16 %v5470
    %v5678 = vunpack.c.l.b16 %v5471
    %v5679 = vunpack.c.l.b16 %v5472
    %v5680 = vunpack.c.l.b16 %v5473
    %v5681 = vunpack.c.l.b16 %v5474
    %v5682 = vunpack.c.l.b16 %v5475
    %v5683 = vunpack.c.l.b16 %v5476
    %v5684 = vunpack.c.l.b16 %v5477
    %v5685 = vunpack.c.l.b16 %v5478
    %v5686 = vunpack.c.l.b16 %v5479
    %v5687 = vunpack.c.l.b16 %v5480
    %v5688 = vunpack.c.l.b16 %v5481
    %v5689 = vunpack.c.l.b16 %v5482
    %v5690 = vunpack.c.l.b16 %v5483
    %v5691 = vunpack.c.l.b16 %v5484
    %v5692 = vunpack.c.l.b16 %v5485
    %v5693 = vunpack.c.l.b16 %v5486
    %v5694 = vunpack.c.l.b16 %v5487
    %v5695 = vunpack.c.l.b16 %v5488
    %v5696 = vunpack.c.l.b16 %v5489
    %v5697 = vunpack.c.l.b16 %v5490
    %v5698 = vunpack.c.l.b16 %v5491
    %v5699 = vunpack.c.l.b16 %v5492
    %v5700 = vunpack.c.l.b16 %v5493
    %v5701 = vunpack.c.l.b16 %v5494
    %v5702 = vunpack.c.l.b16 %v5495
    %v5703 = vunpack.c.l.b16 %v5496
    %v5704 = vunpack.c.l.b16 %v5497
    %v5705 = vunpack.c.l.b16 %v5498
    %v5706 = vunpack.c.l.b16 %v5499
    %v5707 = vunpack.c.l.b16 %v5500
    %v5708 = vunpack.c.l.b16 %v5501
    %v5709 = vunpack.c.l.b16 %v5502
    %v5710 = vunpack.c.l.b16 %v5503
    %v5711 = vunpack.c.l.b16 %v5504
    %v5712 = vunpack.c.l.b16 %v5505
    %v5713 = vunpack.c.l.b16 %v5506
    %v5714 = vunpack.c.l.b16 %v5507
    %v5715 = vunpack.c.l.b16 %v5508
    %v5716 = vpack.c.b16 %v5617, %v5616
    %v5717 = vpack.c.b16 %v5619, %v5618
    %v5718 = vpack.c.b16 %v5621, %v5620
    %v5719 = vpack.c.b16 %v5623, %v5622
    %v5720 = vpack.c.b16 %v5625, %v5624
    %v5721 = vpack.c.b16 %v5627, %v5626
    %v5722 = vpack.c.b16 %v5629, %v5628
    %v5723 = vpack.c.b16 %v5631, %v5630
    %v5724 = vpack.c.b16 %v5633, %v5632
    %v5725 = vpack.c.b16 %v5635, %v5634
    %v5726 = vpack.c.b16 %v5637, %v5636
    %v5727 = vpack.c.b16 %v5639, %v5638
    %v5728 = vpack.c.b16 %v5641, %v5640
    %v5729 = vpack.c.b16 %v5643, %v5642
    %v5730 = vpack.c.b16 %v5645, %v5644
    %v5731 = vpack.c.b16 %v5647, %v5646
    %v5732 = vpack.c.b16 %v5649, %v5648
    %v5733 = vpack.c.b16 %v5651, %v5650
    %v5734 = vpack.c.b16 %v5653, %v5652
    %v5735 = vpack.c.b16 %v5655, %v5654
    %v5736 = vpack.c.b16 %v5657, %v5656
    %v5737 = vpack.c.b16 %v5659, %v5658
    %v5738 = vpack.c.b16 %v5661, %v5660
    %v5739 = vpack.c.b16 %v5663, %v5662
    %v5740 = vpack.c.b16 %v5665, %v5664
    %v5741 = vpack.c.b16 %v5667, %v5666
    %v5742 = vpack.c.b16 %v5669, %v5668
    %v5743 = vpack.c.b16 %v5671, %v5670
    %v5744 = vpack.c.b16 %v5673, %v5672
    %v5745 = vpack.c.b16 %v5675, %v5674
    %v5746 = vpack.c.b16 %v5677, %v5676
    %v5747 = vpack.c.b16 %v5679, %v5678
    %v5748 = vpack.c.b16 %v5681, %v5680
    %v5749 = vpack.c.b16 %v5683, %v5682
    %v5750 = vpack.c.b16 %v5685, %v5684
    %v5751 = vpack.c.b16 %v5687, %v5686
    %v5752 = vpack.c.b16 %v5689, %v5688
    %v5753 = vpack.c.b16 %v5691, %v5690
    %v5754 = vpack.c.b16 %v5693, %v5692
    %v5755 = vpack.c.b16 %v5695, %v5694
    %v5756 = vpack.c.b16 %v5697, %v5696
    %v5757 = vpack.c.b16 %v5699, %v5698
    %v5758 = vpack.c.b16 %v5701, %v5700
    %v5759 = vpack.c.b16 %v5703, %v5702
    %v5760 = vpack.c.b16 %v5705, %v5704
    %v5761 = vpack.c.b16 %v5707, %v5706
    %v5762 = vpack.c.b16 %v5709, %v5708
    %v5763 = vpack.c.b16 %v5711, %v5710
    %v5764 = vpack.c.b16 %v5713, %v5712
    %v5765 = vpack.c.b16 %v5715, %v5714
    %v5817 = vsel %vm4739, %v5408, 0
    %5819 = vmatprep.subr.bf16.mxu0 0
    %5820 = vmatpush1.bf16.msra.mxu0 %v5716
    %5821 = vmatprep.subr.bf16.mxu0 0
    %5822 = vmatpush1.bf16.msra.mxu0 %v5717
    %5823 = vmatprep.subr.bf16.mxu0 0
    %5824 = vmatpush1.bf16.msra.mxu0 %v5718
    %5825 = vmatprep.subr.bf16.mxu0 0
    %5826 = vmatpush1.bf16.msra.mxu0 %v5719
    %5827 = vmatprep.subr.bf16.mxu0 0
    %5828 = vmatpush1.bf16.msra.mxu0 %v5720
    %5829 = vmatprep.subr.bf16.mxu0 0
    %5830 = vmatpush1.bf16.msra.mxu0 %v5721
    %5831 = vmatprep.subr.bf16.mxu0 0
    %5832 = vmatpush1.bf16.msra.mxu0 %v5722
    %5833 = vmatprep.subr.bf16.mxu0 0
    %5834 = vmatpush1.bf16.msra.mxu0 %v5723
    %5835 = vmatprep.subr.bf16.mxu0 0
    %5836 = vmatpush1.bf16.msra.mxu0 %v5724
    %5837 = vmatprep.subr.bf16.mxu0 0
    %5838 = vmatpush1.bf16.msra.mxu0 %v5725
    %5839 = vmatprep.subr.bf16.mxu0 0
    %5840 = vmatpush1.bf16.msra.mxu0 %v5726
    %5841 = vmatprep.subr.bf16.mxu0 0
    %5842 = vmatpush1.bf16.msra.mxu0 %v5727
    %5843 = vmatprep.subr.bf16.mxu0 0
    %5844 = vmatpush1.bf16.msra.mxu0 %v5728
    %5845 = vmatprep.subr.bf16.mxu0 0
    %5846 = vmatpush1.bf16.msra.mxu0 %v5729
    %5847 = vmatprep.subr.bf16.mxu0 0
    %5848 = vmatpush1.bf16.msra.mxu0 %v5730
    %5849 = vmatprep.subr.bf16.mxu0 0
    %5850 = vmatpush1.bf16.msra.mxu0 %v5731
    %5851 = vmatprep.mubr.bf16.mxu0 %v5403
    %5852 = vmatmul.mubr.bf16.gmra.mrb[0].mxu0 %v5402
    %v5853 = vpop.f32.mrb[0].mxu0
    %v5854 = vadd.f32 %v5514, %v5853
    %v5855 = vpop.f32.mrb[0].mxu0
    %v5856 = vpop.f32.mrb[0].mxu0
    %v5857 = vpop.f32.mrb[0].mxu0
    %5858 = vdwg.mxu0
    %5859 = vmatprep.subr.bf16.mxu0 0
    %5860 = vmatpush1.bf16.msra.mxu0 %v5732
    %5861 = vmatprep.subr.bf16.mxu0 0
    %5862 = vmatpush1.bf16.msra.mxu0 %v5733
    %5863 = vmatprep.subr.bf16.mxu0 0
    %5864 = vmatpush1.bf16.msra.mxu0 %v5734
    %5865 = vmatprep.subr.bf16.mxu0 0
    %5866 = vmatpush1.bf16.msra.mxu0 %v5735
    %5867 = vmatprep.subr.bf16.mxu0 0
    %5868 = vmatpush1.bf16.msra.mxu0 %v5736
    %5869 = vmatprep.subr.bf16.mxu0 0
    %5870 = vmatpush1.bf16.msra.mxu0 %v5737
    %5871 = vmatprep.subr.bf16.mxu0 0
    %5872 = vmatpush1.bf16.msra.mxu0 %v5738
    %5873 = vmatprep.subr.bf16.mxu0 0
    %5874 = vmatpush1.bf16.msra.mxu0 %v5739
    %5875 = vmatprep.subr.bf16.mxu0 0
    %5876 = vmatpush1.bf16.msra.mxu0 %v5740
    %5877 = vmatprep.subr.bf16.mxu0 0
    %5878 = vmatpush1.bf16.msra.mxu0 %v5741
    %5879 = vmatprep.subr.bf16.mxu0 0
    %5880 = vmatpush1.bf16.msra.mxu0 %v5742
    %5881 = vmatprep.subr.bf16.mxu0 0
    %5882 = vmatpush1.bf16.msra.mxu0 %v5743
    %5883 = vmatprep.subr.bf16.mxu0 0
    %5884 = vmatpush1.bf16.msra.mxu0 %v5744
    %5885 = vmatprep.subr.bf16.mxu0 0
    %5886 = vmatpush1.bf16.msra.mxu0 %v5745
    %5887 = vmatprep.subr.bf16.mxu0 0
    %5888 = vmatpush1.bf16.msra.mxu0 %v5746
    %5889 = vmatprep.subr.bf16.mxu0 0
    %5890 = vmatpush1.bf16.msra.mxu0 %v5747
    %5891 = vmatprep.mubr.bf16.mxu0 %v5405
    %5892 = vmatmul.mubr.bf16.gmra.mrb[0].mxu0 %v5404
    %v5893 = vpop.f32.mrb[0].mxu0
    %v5894 = vadd.f32 %v5854, %v5893
    %v5895 = vpop.f32.mrb[0].mxu0
    %v5896 = vpop.f32.mrb[0].mxu0
    %v5897 = vpop.f32.mrb[0].mxu0
    %5898 = vdwg.mxu0
    %5899 = vmatprep.subr.bf16.mxu0 0
    %5900 = vmatpush1.bf16.msra.mxu0 %v5748
    %5901 = vmatprep.subr.bf16.mxu0 0
    %5902 = vmatpush1.bf16.msra.mxu0 %v5749
    %5903 = vmatprep.subr.bf16.mxu0 0
    %5904 = vmatpush1.bf16.msra.mxu0 %v5750
    %5905 = vmatprep.subr.bf16.mxu0 0
    %5906 = vmatpush1.bf16.msra.mxu0 %v5751
    %5907 = vmatprep.subr.bf16.mxu0 0
    %5908 = vmatpush1.bf16.msra.mxu0 %v5752
    %5909 = vmatprep.subr.bf16.mxu0 0
    %5910 = vmatpush1.bf16.msra.mxu0 %v5753
    %5911 = vmatprep.subr.bf16.mxu0 0
    %5912 = vmatpush1.bf16.msra.mxu0 %v5754
    %5913 = vmatprep.subr.bf16.mxu0 0
    %5914 = vmatpush1.bf16.msra.mxu0 %v5755
    %5915 = vmatprep.subr.bf16.mxu0 0
    %5916 = vmatpush1.bf16.msra.mxu0 %v5756
    %5917 = vmatprep.subr.bf16.mxu0 0
    %5918 = vmatpush1.bf16.msra.mxu0 %v5757
    %5919 = vmatprep.subr.bf16.mxu0 0
    %5920 = vmatpush1.bf16.msra.mxu0 %v5758
    %5921 = vmatprep.subr.bf16.mxu0 0
    %5922 = vmatpush1.bf16.msra.mxu0 %v5759
    %5923 = vmatprep.subr.bf16.mxu0 0
    %5924 = vmatpush1.bf16.msra.mxu0 %v5760
    %5925 = vmatprep.subr.bf16.mxu0 0
    %5926 = vmatpush1.bf16.msra.mxu0 %v5761
    %5927 = vmatprep.subr.bf16.mxu0 0
    %5928 = vmatpush1.bf16.msra.mxu0 %v5762
    %5929 = vmatprep.subr.bf16.mxu0 0
    %5930 = vmatpush1.bf16.msra.mxu0 %v5763
    %5931 = vmatprep.mubr.bf16.mxu0 %v5407
    %5932 = vmatmul.mubr.bf16.gmra.mrb[0].mxu0 %v5406
    %v5933 = vpop.f32.mrb[0].mxu0
    %v5934 = vadd.f32 %v5894, %v5933
    %v5935 = vpop.f32.mrb[0].mxu0
    %v5936 = vpop.f32.mrb[0].mxu0
    %v5937 = vpop.f32.mrb[0].mxu0
    %5938 = vdwg.mxu0
    %5939 = vmatprep.subr.bf16.mxu0 0
    %5940 = vmatpush1.bf16.msra.mxu0 %v5764
    %5941 = vmatprep.subr.bf16.mxu0 0
    %5942 = vmatpush1.bf16.msra.mxu0 %v5765
    %5943 = vmatprep.subr.bf16.mxu0 0
    %5944 = vmatpush1.bf16.msra.mxu0 0
    %5945 = vmatprep.subr.bf16.mxu0 0
    %5946 = vmatpush1.bf16.msra.mxu0 0
    %5947 = vmatprep.subr.bf16.mxu0 0
    %5948 = vmatpush1.bf16.msra.mxu0 0
    %5949 = vmatprep.subr.bf16.mxu0 0
    %5950 = vmatpush1.bf16.msra.mxu0 0
    %5951 = vmatprep.subr.bf16.mxu0 0
    %5952 = vmatpush1.bf16.msra.mxu0 0
    %5953 = vmatprep.subr.bf16.mxu0 0
    %5954 = vmatpush1.bf16.msra.mxu0 0
    %5955 = vmatprep.subr.bf16.mxu0 0
    %5956 = vmatpush1.bf16.msra.mxu0 0
    %5957 = vmatprep.subr.bf16.mxu0 0
    %5958 = vmatpush1.bf16.msra.mxu0 0
    %5959 = vmatprep.subr.bf16.mxu0 0
    %5960 = vmatpush1.bf16.msra.mxu0 0
    %5961 = vmatprep.subr.bf16.mxu0 0
    %5962 = vmatpush1.bf16.msra.mxu0 0
    %5963 = vmatprep.subr.bf16.mxu0 0
    %5964 = vmatpush1.bf16.msra.mxu0 0
    %5965 = vmatprep.subr.bf16.mxu0 0
    %5966 = vmatpush1.bf16.msra.mxu0 0
    %5967 = vmatprep.subr.bf16.mxu0 0
    %5968 = vmatpush1.bf16.msra.mxu0 0
    %5969 = vmatprep.subr.bf16.mxu0 0
    %5970 = vmatpush1.bf16.msra.mxu0 0
    %5971 = vmatprep.mubr.bf16.mxu0 0
    %5972 = vmatmul.mubr.bf16.gmra.mrb[0].mxu0 %v5817
    %v5973 = vpop.f32.mrb[0].mxu0
    %v5974 = vadd.f32 %v5934, %v5973
    %v5975 = vpop.f32.mrb[0].mxu0
    %v5976 = vpop.f32.mrb[0].mxu0
    %v5977 = vpop.f32.mrb[0].mxu0
    %5978 = vdwg.mxu0
    %5979 = vst [vmem:[#allocation17] sm:$0xff] %v5974
    // Predicated region
    $region78: #{tpu_custom_call.1} parent=1 // pred_check
      _
    $region79: #{tpu_custom_call.1} parent=1 // pred_check_branch
      %5981 = sbr.rel (0) target = $region81
    $region80: #{tpu_custom_call.1} parent=1 // pred_region
      %s5983 = ssub.s32 128, 128
      %5984 = vsyncadd [#allocation4], %s5983
      %s5986 = sshll.u32 [#allocation17], 4
      %s5987 = int_to_ptr.vmem [resolvable:$true] %s5986
      %5989 = dma.vmem_to_hbm [thread:$0]  %s5987, 128, %s10, [#allocation4]
    $region81: #{tpu_custom_call.1} parent=1 // pred_fallthru
      _
    // Predicated region
    $region82: #{tpu_custom_call.1} parent=1 // pred_check
      _
    $region83: #{tpu_custom_call.1} parent=1 // pred_check_branch
      %5991 = sbr.rel (0) target = $region85
    $region84: #{tpu_custom_call.1} parent=1 // pred_region
      %5992 = dma.done [#allocation4], 128
    $region85: #{tpu_custom_call.1} parent=1 // pred_fallthru
      _
    %5993 = vsyncpa [#allocation3], 1
    %5994 = vsyncpa [#allocation6], 1
    %5995 = vsyncpa [#allocation9], 1
    %5996 = vsyncpa [#allocation12], 1
    %5997 = vsyncpa [#allocation15], 1
    %5998 = vsyncpa [#allocation4], 1

</llo_original>
